<compile_context>
chip_gen: v6e
topology: v6e:2x2x1
jax: 0.10.0
libtpu: 0.0.40
codegen_flags: <defaults>
</compile_context>

<pallas_src>
import functools
import math

import jax
import jax.numpy as jnp
from jax.experimental import pallas as pl
from jax.experimental.pallas import tpu as pltpu


# ----------------------------- tiling helpers -------------------------------

def _tile(dim, pref, align):
    """Largest divisor of `dim` that is <= `pref` and a multiple of `align`.

    Returns the full dim when dim <= pref or when no aligned divisor exists
    (full dims are always legal block shapes).
    """
    if dim <= pref:
        return dim
    for cand in range(pref, align - 1, -1):
        if dim % cand == 0 and cand % align == 0:
            return cand
    # TODO(synk): pad ragged dims + mask edge tiles instead of a full-dim
    # fallback (can exceed scoped VMEM for pathological sizes).
    return dim


# --------------- fused LN + pos + matmul (+bias / relu / residual) ----------

def _make_fused_matmul_kernel(*, use_ln, use_pos, use_bias, use_res,
                              activation, single_k, pos_cols, bn, eps=1e-5):
    def kernel(*refs):
        refs = list(refs)
        x_ref = refs.pop(0)
        pos_ref = refs.pop(0) if use_pos else None
        g_ref = refs.pop(0) if use_ln else None
        b_ref = refs.pop(0) if use_ln else None
        w_ref = refs.pop(0)
        bias_ref = refs.pop(0) if use_bias else None
        res_ref = refs.pop(0) if use_res else None
        o_ref = refs.pop(0)
        acc_ref = None if single_k else refs.pop(0)

        x = x_ref[...].astype(jnp.float32)
        if use_ln:
            mean = jnp.mean(x, axis=-1, keepdims=True)
            var = jnp.mean(jnp.square(x - mean), axis=-1, keepdims=True)
            x = (x - mean) * jax.lax.rsqrt(var + eps)
            x = x * g_ref[...] + b_ref[...]
            # TODO(synk): cache the LN'd block in VMEM scratch across the
            # output-N grid axis (needs that axis marked "arbitrary").
        if use_pos:
            p = pos_ref[...].astype(jnp.float32)
            if pos_cols is None:
                x = x + p
            else:
                # pos applies only to output columns [0, pos_cols); output
                # blocks never straddle the boundary (pos_cols % bn == 0),
                # so a per-block scalar flag is exact.
                flag = (pl.program_id(1) * bn < pos_cols).astype(jnp.float32)
                x = x + p * flag

        part = jnp.dot(x.astype(jnp.bfloat16),
                       w_ref[...].astype(jnp.bfloat16),
                       preferred_element_type=jnp.float32)

        def finalize(y):
            if use_bias:
                y = y + bias_ref[...].astype(jnp.float32)
            if activation == "relu":
                y = jnp.maximum(y, 0.0)
            elif activation == "gelu":
                y = jax.nn.gelu(y, approximate=False)
            # TODO(synk): 'glu' activation (halves the feature dim) not mapped.
            if use_res:
                y = y + res_ref[...].astype(jnp.float32)
            o_ref[...] = y.astype(o_ref.dtype)

        if single_k:
            finalize(part)
        else:
            k_id = pl.program_id(2)

            @pl.when(k_id == 0)
            def _():
                acc_ref[...] = jnp.zeros_like(acc_ref)

            acc_ref[...] += part

            @pl.when(k_id == pl.num_programs(2) - 1)
            def _():
                finalize(acc_ref[...])

    return kernel


def fused_matmul(x, w, *, bias=None, ln=None, pos=None, pos_cols=None,
                 residual=None, activation=None, tm=256, tn=512, tk=512):
    """out = act(LN(x) (+pos)) @ w (+bias) (+residual), tiled for the MXU.

    x: (R, K) f32 rows; w: (K, N) pre-transposed bf16 weight.
    pos_cols (optional): pos is added only for output columns [0, pos_cols)
    (used to fuse q/k (+pos) and v (no pos) projections into one matmul).
    """
    R, K = x.shape
    K2, Nout = w.shape
    assert K == K2
    use_ln = ln is not None
    use_pos = pos is not None
    use_bias = bias is not None
    use_res = residual is not None
    if pos_cols is not None and pos_cols >= Nout:
        pos_cols = None                      # pos applies to every column

    bm = _tile(R, tm, 8)
    if use_pos and pos_cols is not None:
        bn = _tile(math.gcd(pos_cols, Nout), tn, 128)
        assert pos_cols % bn == 0 and Nout % bn == 0, (
            "partial-pos projection needs output tiles aligned to the "
            "q/k | v column boundary")
        # TODO(synk): column-masked two-dot fallback for unaligned boundaries.
    else:
        bn = _tile(Nout, tn, 128)
    bk = K if use_ln else _tile(K, tk, 128)   # LN needs the whole row
    k_steps = K // bk
    single_k = k_steps == 1
    grid = (R // bm, Nout // bn, k_steps)

    in_specs = [pl.BlockSpec((bm, bk), lambda i, j, k: (i, k))]
    args = [x]
    if use_pos:
        in_specs.append(pl.BlockSpec((bm, bk), lambda i, j, k: (i, k)))
        args.append(pos)
    if use_ln:
        g, b = ln
        in_specs.append(pl.BlockSpec((1, bk), lambda i, j, k: (0, k)))
        in_specs.append(pl.BlockSpec((1, bk), lambda i, j, k: (0, k)))
        args.append(g.reshape(1, K))
        args.append(b.reshape(1, K))
    in_specs.append(pl.BlockSpec((bk, bn), lambda i, j, k: (k, j)))
    args.append(w)
    if use_bias:
        in_specs.append(pl.BlockSpec((1, bn), lambda i, j, k: (0, j)))
        args.append(bias.reshape(1, Nout))
    if use_res:
        in_specs.append(pl.BlockSpec((bm, bn), lambda i, j, k: (i, j)))
        args.append(residual)

    kernel = _make_fused_matmul_kernel(
        use_ln=use_ln, use_pos=use_pos, use_bias=use_bias, use_res=use_res,
        activation=activation, single_k=single_k, pos_cols=pos_cols, bn=bn)

    bytes_accessed = (4 * R * K * (2 if use_pos else 1) + 2 * K * Nout
                      + 4 * R * Nout * (2 if use_res else 1)
                      + (4 * Nout if use_bias else 0))
    cost = pl.CostEstimate(flops=2 * R * K * Nout,
                           transcendentals=R if use_ln else 0,
                           bytes_accessed=bytes_accessed)

    return pl.pallas_call(
        kernel,
        out_shape=jax.ShapeDtypeStruct((R, Nout), x.dtype),
        grid=grid,
        in_specs=in_specs,
        out_specs=pl.BlockSpec((bm, bn), lambda i, j, k: (i, j)),
        scratch_shapes=([] if single_k else [pltpu.VMEM((bm, bn), jnp.float32)]),
        compiler_params=pltpu.CompilerParams(
            dimension_semantics=("parallel", "parallel", "arbitrary"),
            vmem_limit_bytes=48 * 1024 * 1024),
        cost_estimate=cost,
    )(*args)


# ------------------------- multi-head attention ------------------------------

def _mha_kernel(q_ref, k_ref, v_ref, o_ref, *, nhead):
    # Blocks: q (1, L, E), k/v (1, S, E) — all heads of one batch element per
    # grid step, heads laid out along lanes.  1/sqrt(Dh) is folded into Wq.
    q = q_ref[0].astype(jnp.bfloat16)
    k = k_ref[0].astype(jnp.bfloat16)
    v = v_ref[0].astype(jnp.bfloat16)
    dh = q.shape[-1] // nhead
    outs = []
    for h in range(nhead):                       # static unroll over heads
        sl = slice(h * dh, (h + 1) * dh)
        s = jax.lax.dot_general(q[:, sl], k[:, sl], (((1,), (1,)), ((), ())),
                                preferred_element_type=jnp.float32)   # (L, S)
        s = s - jnp.max(s, axis=-1, keepdims=True)
        p = jnp.exp(s)
        p = p / jnp.sum(p, axis=-1, keepdims=True)
        outs.append(jnp.dot(p.astype(jnp.bfloat16), v[:, sl],
                            preferred_element_type=jnp.float32))      # (L, Dh)
    o_ref[0] = jnp.concatenate(outs, axis=-1).astype(o_ref.dtype)


def mha(q, k, v, *, nhead, d_model, q_blk=0, k_blk=0, v_blk=0):
    """Attention over lane-dense (1, T, E) blocks taken directly from fused
    projection outputs: q (N, L, Cq), k/v (N, S, Ck); the E-wide column block
    at index {q,k,v}_blk of the last axis is used — no XLA slices/transposes.
    """
    N, L, _ = q.shape
    S = k.shape[1]
    E = d_model
    # TODO(synk): flash-style (q-tile, kv-tile) grid with online softmax for
    # long sequences; full-(L, S) per-batch blocks are fine at these sizes.
    cost = pl.CostEstimate(flops=4 * N * L * S * E,
                           transcendentals=N * nhead * L * S,
                           bytes_accessed=4 * (2 * N * L * E + 2 * N * S * E))
    return pl.pallas_call(
        functools.partial(_mha_kernel, nhead=nhead),
        out_shape=jax.ShapeDtypeStruct((N, L, E), v.dtype),
        grid=(N,),
        in_specs=[pl.BlockSpec((1, L, E), lambda n, b=q_blk: (n, 0, b)),
                  pl.BlockSpec((1, S, E), lambda n, b=k_blk: (n, 0, b)),
                  pl.BlockSpec((1, S, E), lambda n, b=v_blk: (n, 0, b))],
        out_specs=pl.BlockSpec((1, L, E), lambda n: (n, 0, 0)),
        compiler_params=pltpu.CompilerParams(
            dimension_semantics=("parallel",),
            vmem_limit_bytes=48 * 1024 * 1024),
        cost_estimate=cost,
    )(q, k, v)


# ----------------------- TransformerDecoderLayer forward --------------------

def transformer_decoder_layer(tgt, memory, params, *, nhead, pos=None,
                              query_pos=None):
    L, N, E = tgt.shape
    S = memory.shape[0]

    # One batch-major re-layout at the layer boundary; afterwards everything
    # is lane-dense (N*T, E) rows / (N, T, C) blocks, no further transposes.
    tgt_r = tgt.transpose(1, 0, 2).reshape(N * L, E)
    mem_r = memory.transpose(1, 0, 2).reshape(N * S, E)
    qp_r = None if query_pos is None else query_pos.transpose(1, 0, 2).reshape(N * L, E)
    pos_r = None if pos is None else pos.transpose(1, 0, 2).reshape(N * S, E)

    # ---- self attention: q = k = norm1(tgt)+query_pos, v = norm1(tgt) -------
    qkv = fused_matmul(tgt_r, params["sa_wqkv_t"],
                       ln=(params["ln1_g"], params["ln1_b"]),
                       pos=qp_r, pos_cols=2 * E)            # (N*L, 3E)
    qkv = qkv.reshape(N, L, 3 * E)                          # free reshape
    attn = mha(qkv, qkv, qkv, nhead=nhead, d_model=E, q_blk=0, k_blk=1, v_blk=2)
    tgt_r = fused_matmul(attn.reshape(N * L, E), params["sa_wo_t"],
                         residual=tgt_r)                    # + dropout1 (eval = id)

    # ---- cross attention: q = norm2(tgt)+query_pos, k = memory+pos, v = memory
    q = fused_matmul(tgt_r, params["ca_wq_t"],
                     ln=(params["ln2_g"], params["ln2_b"]), pos=qp_r)
    kv = fused_matmul(mem_r, params["ca_wkv_t"], pos=pos_r, pos_cols=E)
    kv = kv.reshape(N, S, 2 * E)
    attn = mha(q.reshape(N, L, E), kv, kv,
               nhead=nhead, d_model=E, q_blk=0, k_blk=0, v_blk=1)
    tgt_r = fused_matmul(attn.reshape(N * L, E), params["ca_wo_t"],
                         residual=tgt_r)                    # + dropout2 (eval = id)

    # ---- feed forward: linear2(relu(linear1(norm3(tgt)))) + residual --------
    h = fused_matmul(tgt_r, params["lin1_wt"], bias=params["lin1_b"],
                     ln=(params["ln3_g"], params["ln3_b"]), activation="relu")
    tgt_r = fused_matmul(h, params["lin2_wt"], bias=params["lin2_b"],
                         residual=tgt_r)                    # + dropout3 (eval = id)

    return tgt_r.reshape(N, L, E).transpose(1, 0, 2)


# ------------------------------ parameters -----------------------------------

def init_params(key, d_model, nhead, dim_ff):
    """Raw parameters in PyTorch layout ((D_out, D_in) weights, bias=False attn)."""
    ks = jax.random.split(key, 8)

    def u(k, shape, fan_in):
        lim = 1.0 / math.sqrt(fan_in)
        return jax.random.uniform(k, shape, jnp.float32, -lim, lim)

    return {
        "sa_in_w":  u(ks[0], (3 * d_model, d_model), d_model),
        "sa_out_w": u(ks[1], (d_model, d_model), d_model),
        "ca_in_w":  u(ks[2], (3 * d_model, d_model), d_model),
        "ca_out_w": u(ks[3], (d_model, d_model), d_model),
        "lin1_w":   u(ks[4], (dim_ff, d_model), d_model),
        "lin1_b":   u(ks[5], (dim_ff,), d_model),
        "lin2_w":   u(ks[6], (d_model, dim_ff), dim_ff),
        "lin2_b":   u(ks[7], (d_model,), dim_ff),
        "ln1_g": jnp.ones((d_model,), jnp.float32),
        "ln1_b": jnp.zeros((d_model,), jnp.float32),
        "ln2_g": jnp.ones((d_model,), jnp.float32),
        "ln2_b": jnp.zeros((d_model,), jnp.float32),
        "ln3_g": jnp.ones((d_model,), jnp.float32),
        "ln3_b": jnp.zeros((d_model,), jnp.float32),
    }


def prepare_params(raw, d_model, nhead):
    """One-time prep: transpose to (Din, Dout), fuse self-attn QKV and
    cross-attn KV weight blocks, fold 1/sqrt(Dh) into the Q projections, and
    cast all matmul weights to bf16 (MXU-native)."""
    E = d_model
    scale = 1.0 / math.sqrt(E // nhead)

    def split_qkv(w):   # PyTorch (3E, E) in_proj layout -> three (E, E).T
        return w[:E].T, w[E:2 * E].T, w[2 * E:].T

    sa_q, sa_k, sa_v = split_qkv(raw["sa_in_w"])
    ca_q, ca_k, ca_v = split_qkv(raw["ca_in_w"])
    bf = lambda a: a.astype(jnp.bfloat16)
    return {
        "sa_wqkv_t": bf(jnp.concatenate([sa_q * scale, sa_k, sa_v], axis=1)),  # (E, 3E)
        "sa_wo_t":   bf(raw["sa_out_w"].T),
        "ca_wq_t":   bf(ca_q * scale),
        "ca_wkv_t":  bf(jnp.concatenate([ca_k, ca_v], axis=1)),                # (E, 2E)
        "ca_wo_t":   bf(raw["ca_out_w"].T),
        "lin1_wt":   bf(raw["lin1_w"].T), "lin1_b": raw["lin1_b"],
        "lin2_wt":   bf(raw["lin2_w"].T), "lin2_b": raw["lin2_b"],
        "ln1_g": raw["ln1_g"], "ln1_b": raw["ln1_b"],
        "ln2_g": raw["ln2_g"], "ln2_b": raw["ln2_b"],
        "ln3_g": raw["ln3_g"], "ln3_b": raw["ln3_b"],
    }


# --------------------------------- main ---------------------------------------

if __name__ == "__main__":
    # Small demo shapes, chosen lane-aligned: d_model a multiple of 128 keeps
    # every BlockSpec (8,128)-aligned; dim_ff=1024 exercises both the multi-N
    # and the multi-K (accumulator) tiling paths.
    L, N, d_model, nhead, dim_ff = 8, 2, 128, 4, 1024

    key = jax.random.PRNGKey(0)
    k_tgt, k_mem, k_qp, k_pos, k_par = jax.random.split(key, 5)
    tgt = jax.random.normal(k_tgt, (L, N, d_model), jnp.float32)
    memory = jax.random.normal(k_mem, (L, N, d_model), jnp.float32)
    query_pos = jax.random.normal(k_qp, (L, N, d_model), jnp.float32)
    pos = jax.random.normal(k_pos, (L, N, d_model), jnp.float32)

    raw = init_params(k_par, d_model, nhead, dim_ff)
    params = prepare_params(raw, d_model, nhead)

    fwd = jax.jit(functools.partial(transformer_decoder_layer, nhead=nhead))
    out = fwd(tgt, memory, params, pos=pos, query_pos=query_pos)
    jax.block_until_ready(out)
    assert out.shape == (L, N, d_model) and out.dtype == jnp.float32
    print("KERNEL_OK")
</pallas_src>

<mosaic_0001>
module attributes {stable_mosaic.version = 11 : i64} {
  func.func @kernel(%arg0: i32, %arg1: i32, %arg2: i32, %arg3: memref<16x128xf32, #tpu.memory_space<vmem>>, %arg4: memref<16x128xf32, #tpu.memory_space<vmem>>, %arg5: memref<128x128xbf16, #tpu.memory_space<vmem>>, %arg6: memref<16x128xf32, #tpu.memory_space<vmem>>) attributes {dimension_semantics = [#tpu.dimension_semantics<parallel>, #tpu.dimension_semantics<parallel>, #tpu.dimension_semantics<arbitrary>], iteration_bounds = array<i64: 1, 2, 1>, scalar_prefetch = 0 : i64, scratch_operands = 0 : i64, tpu.core_type = #tpu.core_type<tc>, window_params = [{transform_indices = @transform_0, window_bounds = array<i64: 16, 128>}, {transform_indices = @transform_1, window_bounds = array<i64: 16, 128>}, {transform_indices = @transform_2, window_bounds = array<i64: 128, 128>}, {transform_indices = @transform_3, window_bounds = array<i64: 16, 128>}]} {
    %c0 = arith.constant 0 : index
    %c0_0 = arith.constant 0 : index
    %0 = vector.load %arg3[%c0, %c0_0] : memref<16x128xf32, #tpu.memory_space<vmem>>, vector<16x128xf32>
    %c0_1 = arith.constant 0 : index
    %c0_2 = arith.constant 0 : index
    %1 = vector.load %arg4[%c0_1, %c0_2] : memref<16x128xf32, #tpu.memory_space<vmem>>, vector<16x128xf32>
    %c128_i32 = arith.constant 128 : i32
    %2 = arith.muli %arg1, %c128_i32 : i32
    %c128_i32_3 = arith.constant 128 : i32
    %3 = arith.cmpi slt, %2, %c128_i32_3 : i32
    %4 = arith.extui %3 : i1 to i32
    %5 = arith.sitofp %4 : i32 to f32
    %6 = vector.broadcast %5 : f32 to vector<16x128xf32>
    %7 = arith.mulf %1, %6 : vector<16x128xf32>
    %8 = arith.addf %0, %7 : vector<16x128xf32>
    %9 = arith.truncf %8 : vector<16x128xf32> to vector<16x128xbf16>
    %c0_4 = arith.constant 0 : index
    %c0_5 = arith.constant 0 : index
    %10 = vector.load %arg5[%c0_4, %c0_5] : memref<128x128xbf16, #tpu.memory_space<vmem>>, vector<128x128xbf16>
    %cst = arith.constant dense<0.000000e+00> : vector<16x128xf32>
    %11 = tpu.matmul %9, %10, %cst {dimension_numbers = #tpu.dot_dimension_numbers<[1], [0], [0], [1], [0, 0, 1, 1], [], []>} : vector<16x128xbf16>, vector<128x128xbf16>, vector<16x128xf32> -> vector<16x128xf32>
    %c0_6 = arith.constant 0 : index
    %c0_7 = arith.constant 0 : index
    %12 = vector.load %arg6[%c0_6, %c0_7] : memref<16x128xf32, #tpu.memory_space<vmem>>, vector<16x128xf32>
    tpu.vector_store %arg6[%c0_6, %c0_7], %11 {strides = array<i32>} : memref<16x128xf32, #tpu.memory_space<vmem>>, vector<16x128xf32>,
    return
  }
  func.func @transform_0(%arg0: i32, %arg1: i32, %arg2: i32) -> (i32, i32) {
    %c0_i32 = arith.constant 0 : i32
    return %arg0, %arg2 : i32, i32
  }
  func.func @transform_1(%arg0: i32, %arg1: i32, %arg2: i32) -> (i32, i32) {
    %c0_i32 = arith.constant 0 : i32
    return %arg0, %arg2 : i32, i32
  }
  func.func @transform_2(%arg0: i32, %arg1: i32, %arg2: i32) -> (i32, i32) {
    %c0_i32 = arith.constant 0 : i32
    return %arg2, %arg1 : i32, i32
  }
  func.func @transform_3(%arg0: i32, %arg1: i32, %arg2: i32) -> (i32, i32) {
    %c0_i32 = arith.constant 0 : i32
    return %arg0, %arg1 : i32, i32
  }
}

module attributes {stable_mosaic.version = 11 : i64} {
  func.func @_mha_kernel(%arg0: i32, %arg1: memref<1x8x128xf32, #tpu.memory_space<vmem>>, %arg2: memref<1x8x128xf32, #tpu.memory_space<vmem>>, %arg3: memref<1x8x128xf32, #tpu.memory_space<vmem>>, %arg4: memref<1x8x128xf32, #tpu.memory_space<vmem>>) attributes {dimension_semantics = [#tpu.dimension_semantics<parallel>], iteration_bounds = array<i64: 2>, scalar_prefetch = 0 : i64, scratch_operands = 0 : i64, tpu.core_type = #tpu.core_type<tc>, window_params = [{transform_indices = @transform_0, window_bounds = array<i64: 1, 8, 128>}, {transform_indices = @transform_1, window_bounds = array<i64: 1, 8, 128>}, {transform_indices = @transform_2, window_bounds = array<i64: 1, 8, 128>}, {transform_indices = @transform_3, window_bounds = array<i64: 1, 8, 128>}]} {
    %c0 = arith.constant 0 : index
    %c0_0 = arith.constant 0 : index
    %c0_1 = arith.constant 0 : index
    %0 = vector.load %arg1[%c0, %c0_0, %c0_1] : memref<1x8x128xf32, #tpu.memory_space<vmem>>, vector<1x8x128xf32>
    %1 = vector.shape_cast %0 : vector<1x8x128xf32> to vector<8x128xf32>
    %2 = arith.truncf %1 : vector<8x128xf32> to vector<8x128xbf16>
    %c0_2 = arith.constant 0 : index
    %c0_3 = arith.constant 0 : index
    %c0_4 = arith.constant 0 : index
    %3 = vector.load %arg2[%c0_2, %c0_3, %c0_4] : memref<1x8x128xf32, #tpu.memory_space<vmem>>, vector<1x8x128xf32>
    %4 = vector.shape_cast %3 : vector<1x8x128xf32> to vector<8x128xf32>
    %5 = arith.truncf %4 : vector<8x128xf32> to vector<8x128xbf16>
    %c0_5 = arith.constant 0 : index
    %c0_6 = arith.constant 0 : index
    %c0_7 = arith.constant 0 : index
    %6 = vector.load %arg3[%c0_5, %c0_6, %c0_7] : memref<1x8x128xf32, #tpu.memory_space<vmem>>, vector<1x8x128xf32>
    %7 = vector.shape_cast %6 : vector<1x8x128xf32> to vector<8x128xf32>
    %8 = arith.truncf %7 : vector<8x128xf32> to vector<8x128xbf16>
    %9 = vector.extract_strided_slice %2 {offsets = [0, 0], sizes = [8, 32], strides = [1, 1]} : vector<8x128xbf16> to vector<8x32xbf16>
    %10 = vector.extract_strided_slice %5 {offsets = [0, 0], sizes = [8, 32], strides = [1, 1]} : vector<8x128xbf16> to vector<8x32xbf16>
    %cst = arith.constant dense<0.000000e+00> : vector<8x8xf32>
    %11 = tpu.matmul %9, %10, %cst {dimension_numbers = #tpu.dot_dimension_numbers<[1], [1], [0], [0], [0, 0, 1, 0], [], []>} : vector<8x32xbf16>, vector<8x32xbf16>, vector<8x8xf32> -> vector<8x8xf32>
    %cst_8 = arith.constant dense<0xFF800000> : vector<8xf32>
    %12 = vector.multi_reduction <maximumf>, %11, %cst_8 [1] : vector<8x8xf32> to vector<8xf32>
    %13 = vector.shape_cast %12 : vector<8xf32> to vector<8x1xf32>
    %14 = vector.broadcast %13 : vector<8x1xf32> to vector<8x8xf32>
    %15 = arith.subf %11, %14 : vector<8x8xf32>
    %16 = math.exp %15 : vector<8x8xf32>
    %cst_9 = arith.constant dense<0.000000e+00> : vector<8xf32>
    %17 = vector.multi_reduction <add>, %16, %cst_9 [1] : vector<8x8xf32> to vector<8xf32>
    %18 = vector.shape_cast %17 : vector<8xf32> to vector<8x1xf32>
    %19 = vector.broadcast %18 : vector<8x1xf32> to vector<8x8xf32>
    %20 = arith.divf %16, %19 : vector<8x8xf32>
    %21 = arith.truncf %20 : vector<8x8xf32> to vector<8x8xbf16>
    %22 = vector.extract_strided_slice %8 {offsets = [0, 0], sizes = [8, 32], strides = [1, 1]} : vector<8x128xbf16> to vector<8x32xbf16>
    %cst_10 = arith.constant dense<0.000000e+00> : vector<8x32xf32>
    %23 = tpu.matmul %21, %22, %cst_10 {dimension_numbers = #tpu.dot_dimension_numbers<[1], [0], [0], [1], [0, 0, 1, 1], [], []>} : vector<8x8xbf16>, vector<8x32xbf16>, vector<8x32xf32> -> vector<8x32xf32>
    %24 = vector.extract_strided_slice %2 {offsets = [0, 32], sizes = [8, 32], strides = [1, 1]} : vector<8x128xbf16> to vector<8x32xbf16>
    %25 = vector.extract_strided_slice %5 {offsets = [0, 32], sizes = [8, 32], strides = [1, 1]} : vector<8x128xbf16> to vector<8x32xbf16>
    %cst_11 = arith.constant dense<0.000000e+00> : vector<8x8xf32>
    %26 = tpu.matmul %24, %25, %cst_11 {dimension_numbers = #tpu.dot_dimension_numbers<[1], [1], [0], [0], [0, 0, 1, 0], [], []>} : vector<8x32xbf16>, vector<8x32xbf16>, vector<8x8xf32> -> vector<8x8xf32>
    %cst_12 = arith.constant dense<0xFF800000> : vector<8xf32>
    %27 = vector.multi_reduction <maximumf>, %26, %cst_12 [1] : vector<8x8xf32> to vector<8xf32>
    %28 = vector.shape_cast %27 : vector<8xf32> to vector<8x1xf32>
    %29 = vector.broadcast %28 : vector<8x1xf32> to vector<8x8xf32>
    %30 = arith.subf %26, %29 : vector<8x8xf32>
    %31 = math.exp %30 : vector<8x8xf32>
    %cst_13 = arith.constant dense<0.000000e+00> : vector<8xf32>
    %32 = vector.multi_reduction <add>, %31, %cst_13 [1] : vector<8x8xf32> to vector<8xf32>
    %33 = vector.shape_cast %32 : vector<8xf32> to vector<8x1xf32>
    %34 = vector.broadcast %33 : vector<8x1xf32> to vector<8x8xf32>
    %35 = arith.divf %31, %34 : vector<8x8xf32>
    %36 = arith.truncf %35 : vector<8x8xf32> to vector<8x8xbf16>
    %37 = vector.extract_strided_slice %8 {offsets = [0, 32], sizes = [8, 32], strides = [1, 1]} : vector<8x128xbf16> to vector<8x32xbf16>
    %cst_14 = arith.constant dense<0.000000e+00> : vector<8x32xf32>
    %38 = tpu.matmul %36, %37, %cst_14 {dimension_numbers = #tpu.dot_dimension_numbers<[1], [0], [0], [1], [0, 0, 1, 1], [], []>} : vector<8x8xbf16>, vector<8x32xbf16>, vector<8x32xf32> -> vector<8x32xf32>
    %39 = vector.extract_strided_slice %2 {offsets = [0, 64], sizes = [8, 32], strides = [1, 1]} : vector<8x128xbf16> to vector<8x32xbf16>
    %40 = vector.extract_strided_slice %5 {offsets = [0, 64], sizes = [8, 32], strides = [1, 1]} : vector<8x128xbf16> to vector<8x32xbf16>
    %cst_15 = arith.constant dense<0.000000e+00> : vector<8x8xf32>
    %41 = tpu.matmul %39, %40, %cst_15 {dimension_numbers = #tpu.dot_dimension_numbers<[1], [1], [0], [0], [0, 0, 1, 0], [], []>} : vector<8x32xbf16>, vector<8x32xbf16>, vector<8x8xf32> -> vector<8x8xf32>
    %cst_16 = arith.constant dense<0xFF800000> : vector<8xf32>
    %42 = vector.multi_reduction <maximumf>, %41, %cst_16 [1] : vector<8x8xf32> to vector<8xf32>
    %43 = vector.shape_cast %42 : vector<8xf32> to vector<8x1xf32>
    %44 = vector.broadcast %43 : vector<8x1xf32> to vector<8x8xf32>
    %45 = arith.subf %41, %44 : vector<8x8xf32>
    %46 = math.exp %45 : vector<8x8xf32>
    %cst_17 = arith.constant dense<0.000000e+00> : vector<8xf32>
    %47 = vector.multi_reduction <add>, %46, %cst_17 [1] : vector<8x8xf32> to vector<8xf32>
    %48 = vector.shape_cast %47 : vector<8xf32> to vector<8x1xf32>
    %49 = vector.broadcast %48 : vector<8x1xf32> to vector<8x8xf32>
    %50 = arith.divf %46, %49 : vector<8x8xf32>
    %51 = arith.truncf %50 : vector<8x8xf32> to vector<8x8xbf16>
    %52 = vector.extract_strided_slice %8 {offsets = [0, 64], sizes = [8, 32], strides = [1, 1]} : vector<8x128xbf16> to vector<8x32xbf16>
    %cst_18 = arith.constant dense<0.000000e+00> : vector<8x32xf32>
    %53 = tpu.matmul %51, %52, %cst_18 {dimension_numbers = #tpu.dot_dimension_numbers<[1], [0], [0], [1], [0, 0, 1, 1], [], []>} : vector<8x8xbf16>, vector<8x32xbf16>, vector<8x32xf32> -> vector<8x32xf32>
    %54 = vector.extract_strided_slice %2 {offsets = [0, 96], sizes = [8, 32], strides = [1, 1]} : vector<8x128xbf16> to vector<8x32xbf16>
    %55 = vector.extract_strided_slice %5 {offsets = [0, 96], sizes = [8, 32], strides = [1, 1]} : vector<8x128xbf16> to vector<8x32xbf16>
    %cst_19 = arith.constant dense<0.000000e+00> : vector<8x8xf32>
    %56 = tpu.matmul %54, %55, %cst_19 {dimension_numbers = #tpu.dot_dimension_numbers<[1], [1], [0], [0], [0, 0, 1, 0], [], []>} : vector<8x32xbf16>, vector<8x32xbf16>, vector<8x8xf32> -> vector<8x8xf32>
    %cst_20 = arith.constant dense<0xFF800000> : vector<8xf32>
    %57 = vector.multi_reduction <maximumf>, %56, %cst_20 [1] : vector<8x8xf32> to vector<8xf32>
    %58 = vector.shape_cast %57 : vector<8xf32> to vector<8x1xf32>
    %59 = vector.broadcast %58 : vector<8x1xf32> to vector<8x8xf32>
    %60 = arith.subf %56, %59 : vector<8x8xf32>
    %61 = math.exp %60 : vector<8x8xf32>
    %cst_21 = arith.constant dense<0.000000e+00> : vector<8xf32>
    %62 = vector.multi_reduction <add>, %61, %cst_21 [1] : vector<8x8xf32> to vector<8xf32>
    %63 = vector.shape_cast %62 : vector<8xf32> to vector<8x1xf32>
    %64 = vector.broadcast %63 : vector<8x1xf32> to vector<8x8xf32>
    %65 = arith.divf %61, %64 : vector<8x8xf32>
    %66 = arith.truncf %65 : vector<8x8xf32> to vector<8x8xbf16>
    %67 = vector.extract_strided_slice %8 {offsets = [0, 96], sizes = [8, 32], strides = [1, 1]} : vector<8x128xbf16> to vector<8x32xbf16>
    %cst_22 = arith.constant dense<0.000000e+00> : vector<8x32xf32>
    %68 = tpu.matmul %66, %67, %cst_22 {dimension_numbers = #tpu.dot_dimension_numbers<[1], [0], [0], [1], [0, 0, 1, 1], [], []>} : vector<8x8xbf16>, vector<8x32xbf16>, vector<8x32xf32> -> vector<8x32xf32>
    %69 = tpu.concatenate %23, %38, %53, %68 in 1 : vector<8x32xf32>, vector<8x32xf32>, vector<8x32xf32>, vector<8x32xf32> -> vector<8x128xf32>
    %c0_23 = arith.constant 0 : index
    %c0_24 = arith.constant 0 : index
    %c0_25 = arith.constant 0 : index
    %70 = vector.load %arg4[%c0_23, %c0_24, %c0_25] : memref<1x8x128xf32, #tpu.memory_space<vmem>>, vector<1x8x128xf32>
    %71 = vector.shape_cast %70 : vector<1x8x128xf32> to vector<8x128xf32>
    %72 = vector.shape_cast %69 : vector<8x128xf32> to vector<1x8x128xf32>
    tpu.vector_store %arg4[%c0_23, %c0_24, %c0_25], %72 {strides = array<i32>} : memref<1x8x128xf32, #tpu.memory_space<vmem>>, vector<1x8x128xf32>,
    return
  }
  func.func @transform_0(%arg0: i32) -> (i32, i32, i32) {
    %c0_i32 = arith.constant 0 : i32
    %c0_i32_0 = arith.constant 0 : i32
    %c0_i32_1 = arith.constant 0 : i32
    return %arg0, %c0_i32, %c0_i32_0 : i32, i32, i32
  }
  func.func @transform_1(%arg0: i32) -> (i32, i32, i32) {
    %c0_i32 = arith.constant 0 : i32
    %c1_i32 = arith.constant 1 : i32
    %c0_i32_0 = arith.constant 0 : i32
    return %arg0, %c0_i32, %c1_i32 : i32, i32, i32
  }
  func.func @transform_2(%arg0: i32) -> (i32, i32, i32) {
    %c0_i32 = arith.constant 0 : i32
    %c2_i32 = arith.constant 2 : i32
    %c0_i32_0 = arith.constant 0 : i32
    return %arg0, %c0_i32, %c2_i32 : i32, i32, i32
  }
  func.func @transform_3(%arg0: i32) -> (i32, i32, i32) {
    %c0_i32 = arith.constant 0 : i32
    %c0_i32_0 = arith.constant 0 : i32
    %c0_i32_1 = arith.constant 0 : i32
    return %arg0, %c0_i32, %c0_i32_0 : i32, i32, i32
  }
}

module attributes {stable_mosaic.version = 11 : i64} {
  func.func @kernel(%arg0: i32, %arg1: i32, %arg2: i32, %arg3: memref<16x128xf32, #tpu.memory_space<vmem>>, %arg4: memref<16x128xf32, #tpu.memory_space<vmem>>, %arg5: memref<1x128xf32, #tpu.memory_space<vmem>>, %arg6: memref<1x128xf32, #tpu.memory_space<vmem>>, %arg7: memref<128x128xbf16, #tpu.memory_space<vmem>>, %arg8: memref<16x128xf32, #tpu.memory_space<vmem>>) attributes {dimension_semantics = [#tpu.dimension_semantics<parallel>, #tpu.dimension_semantics<parallel>, #tpu.dimension_semantics<arbitrary>], iteration_bounds = array<i64: 1, 3, 1>, scalar_prefetch = 0 : i64, scratch_operands = 0 : i64, tpu.core_type = #tpu.core_type<tc>, window_params = [{transform_indices = @transform_0, window_bounds = array<i64: 16, 128>}, {transform_indices = @transform_1, window_bounds = array<i64: 16, 128>}, {transform_indices = @transform_2, window_bounds = array<i64: 1, 128>}, {transform_indices = @transform_3, window_bounds = array<i64: 1, 128>}, {transform_indices = @transform_4, window_bounds = array<i64: 128, 128>}, {transform_indices = @transform_5, window_bounds = array<i64: 16, 128>}]} {
    %c0 = arith.constant 0 : index
    %c0_0 = arith.constant 0 : index
    %0 = vector.load %arg3[%c0, %c0_0] : memref<16x128xf32, #tpu.memory_space<vmem>>, vector<16x128xf32>
    %cst = arith.constant dense<0.000000e+00> : vector<16xf32>
    %1 = vector.multi_reduction <add>, %0, %cst [1] : vector<16x128xf32> to vector<16xf32>
    %2 = vector.shape_cast %1 : vector<16xf32> to vector<16x1xf32>
    %cst_1 = arith.constant 1.280000e+02 : f32
    %3 = vector.broadcast %cst_1 : f32 to vector<16x1xf32>
    %4 = arith.divf %2, %3 : vector<16x1xf32>
    %5 = vector.broadcast %4 : vector<16x1xf32> to vector<16x128xf32>
    %6 = arith.subf %0, %5 : vector<16x128xf32>
    %7 = arith.mulf %6, %6 : vector<16x128xf32>
    %cst_2 = arith.constant dense<0.000000e+00> : vector<16xf32>
    %8 = vector.multi_reduction <add>, %7, %cst_2 [1] : vector<16x128xf32> to vector<16xf32>
    %9 = vector.shape_cast %8 : vector<16xf32> to vector<16x1xf32>
    %cst_3 = arith.constant 1.280000e+02 : f32
    %10 = vector.broadcast %cst_3 : f32 to vector<16x1xf32>
    %11 = arith.divf %9, %10 : vector<16x1xf32>
    %12 = vector.broadcast %4 : vector<16x1xf32> to vector<16x128xf32>
    %13 = arith.subf %0, %12 : vector<16x128xf32>
    %cst_4 = arith.constant 9.99999974E-6 : f32
    %14 = vector.broadcast %cst_4 : f32 to vector<16x1xf32>
    %15 = arith.addf %11, %14 : vector<16x1xf32>
    %16 = math.rsqrt %15 : vector<16x1xf32>
    %17 = vector.broadcast %16 : vector<16x1xf32> to vector<16x128xf32>
    %18 = arith.mulf %13, %17 : vector<16x128xf32>
    %c0_5 = arith.constant 0 : index
    %c0_6 = arith.constant 0 : index
    %19 = vector.load %arg5[%c0_5, %c0_6] : memref<1x128xf32, #tpu.memory_space<vmem>>, vector<1x128xf32>
    %20 = vector.broadcast %19 : vector<1x128xf32> to vector<16x128xf32>
    %21 = arith.mulf %18, %20 : vector<16x128xf32>
    %c0_7 = arith.constant 0 : index
    %c0_8 = arith.constant 0 : index
    %22 = vector.load %arg6[%c0_7, %c0_8] : memref<1x128xf32, #tpu.memory_space<vmem>>, vector<1x128xf32>
    %23 = vector.broadcast %22 : vector<1x128xf32> to vector<16x128xf32>
    %24 = arith.addf %21, %23 : vector<16x128xf32>
    %c0_9 = arith.constant 0 : index
    %c0_10 = arith.constant 0 : index
    %25 = vector.load %arg4[%c0_9, %c0_10] : memref<16x128xf32, #tpu.memory_space<vmem>>, vector<16x128xf32>
    %c128_i32 = arith.constant 128 : i32
    %26 = arith.muli %arg1, %c128_i32 : i32
    %c256_i32 = arith.constant 256 : i32
    %27 = arith.cmpi slt, %26, %c256_i32 : i32
    %28 = arith.extui %27 : i1 to i32
    %29 = arith.sitofp %28 : i32 to f32
    %30 = vector.broadcast %29 : f32 to vector<16x128xf32>
    %31 = arith.mulf %25, %30 : vector<16x128xf32>
    %32 = arith.addf %24, %31 : vector<16x128xf32>
    %33 = arith.truncf %32 : vector<16x128xf32> to vector<16x128xbf16>
    %c0_11 = arith.constant 0 : index
    %c0_12 = arith.constant 0 : index
    %34 = vector.load %arg7[%c0_11, %c0_12] : memref<128x128xbf16, #tpu.memory_space<vmem>>, vector<128x128xbf16>
    %cst_13 = arith.constant dense<0.000000e+00> : vector<16x128xf32>
    %35 = tpu.matmul %33, %34, %cst_13 {dimension_numbers = #tpu.dot_dimension_numbers<[1], [0], [0], [1], [0, 0, 1, 1], [], []>} : vector<16x128xbf16>, vector<128x128xbf16>, vector<16x128xf32> -> vector<16x128xf32>
    %c0_14 = arith.constant 0 : index
    %c0_15 = arith.constant 0 : index
    %36 = vector.load %arg8[%c0_14, %c0_15] : memref<16x128xf32, #tpu.memory_space<vmem>>, vector<16x128xf32>
    tpu.vector_store %arg8[%c0_14, %c0_15], %35 {strides = array<i32>} : memref<16x128xf32, #tpu.memory_space<vmem>>, vector<16x128xf32>,
    return
  }
  func.func @transform_0(%arg0: i32, %arg1: i32, %arg2: i32) -> (i32, i32) {
    %c0_i32 = arith.constant 0 : i32
    return %arg0, %arg2 : i32, i32
  }
  func.func @transform_1(%arg0: i32, %arg1: i32, %arg2: i32) -> (i32, i32) {
    %c0_i32 = arith.constant 0 : i32
    return %arg0, %arg2 : i32, i32
  }
  func.func @transform_2(%arg0: i32, %arg1: i32, %arg2: i32) -> (i32, i32) {
    %c0_i32 = arith.constant 0 : i32
    %c0_i32_0 = arith.constant 0 : i32
    return %c0_i32, %arg2 : i32, i32
  }
  func.func @transform_3(%arg0: i32, %arg1: i32, %arg2: i32) -> (i32, i32) {
    %c0_i32 = arith.constant 0 : i32
    %c0_i32_0 = arith.constant 0 : i32
    return %c0_i32, %arg2 : i32, i32
  }
  func.func @transform_4(%arg0: i32, %arg1: i32, %arg2: i32) -> (i32, i32) {
    %c0_i32 = arith.constant 0 : i32
    return %arg2, %arg1 : i32, i32
  }
  func.func @transform_5(%arg0: i32, %arg1: i32, %arg2: i32) -> (i32, i32) {
    %c0_i32 = arith.constant 0 : i32
    return %arg0, %arg1 : i32, i32
  }
}

module attributes {stable_mosaic.version = 11 : i64} {
  func.func @kernel(%arg0: i32, %arg1: i32, %arg2: i32, %arg3: memref<16x128xf32, #tpu.memory_space<vmem>>, %arg4: memref<128x128xbf16, #tpu.memory_space<vmem>>, %arg5: memref<16x128xf32, #tpu.memory_space<vmem>>, %arg6: memref<16x128xf32, #tpu.memory_space<vmem>>) attributes {dimension_semantics = [#tpu.dimension_semantics<parallel>, #tpu.dimension_semantics<parallel>, #tpu.dimension_semantics<arbitrary>], iteration_bounds = array<i64: 1, 1, 1>, scalar_prefetch = 0 : i64, scratch_operands = 0 : i64, tpu.core_type = #tpu.core_type<tc>, window_params = [{transform_indices = @transform_0, window_bounds = array<i64: 16, 128>}, {transform_indices = @transform_1, window_bounds = array<i64: 128, 128>}, {transform_indices = @transform_2, window_bounds = array<i64: 16, 128>}, {transform_indices = @transform_3, window_bounds = array<i64: 16, 128>}]} {
    %c0 = arith.constant 0 : index
    %c0_0 = arith.constant 0 : index
    %0 = vector.load %arg3[%c0, %c0_0] : memref<16x128xf32, #tpu.memory_space<vmem>>, vector<16x128xf32>
    %1 = arith.truncf %0 : vector<16x128xf32> to vector<16x128xbf16>
    %c0_1 = arith.constant 0 : index
    %c0_2 = arith.constant 0 : index
    %2 = vector.load %arg4[%c0_1, %c0_2] : memref<128x128xbf16, #tpu.memory_space<vmem>>, vector<128x128xbf16>
    %cst = arith.constant dense<0.000000e+00> : vector<16x128xf32>
    %3 = tpu.matmul %1, %2, %cst {dimension_numbers = #tpu.dot_dimension_numbers<[1], [0], [0], [1], [0, 0, 1, 1], [], []>} : vector<16x128xbf16>, vector<128x128xbf16>, vector<16x128xf32> -> vector<16x128xf32>
    %c0_3 = arith.constant 0 : index
    %c0_4 = arith.constant 0 : index
    %4 = vector.load %arg5[%c0_3, %c0_4] : memref<16x128xf32, #tpu.memory_space<vmem>>, vector<16x128xf32>
    %5 = arith.addf %3, %4 : vector<16x128xf32>
    %c0_5 = arith.constant 0 : index
    %c0_6 = arith.constant 0 : index
    %6 = vector.load %arg6[%c0_5, %c0_6] : memref<16x128xf32, #tpu.memory_space<vmem>>, vector<16x128xf32>
    tpu.vector_store %arg6[%c0_5, %c0_6], %5 {strides = array<i32>} : memref<16x128xf32, #tpu.memory_space<vmem>>, vector<16x128xf32>,
    return
  }
  func.func @transform_0(%arg0: i32, %arg1: i32, %arg2: i32) -> (i32, i32) {
    %c0_i32 = arith.constant 0 : i32
    return %arg0, %arg2 : i32, i32
  }
  func.func @transform_1(%arg0: i32, %arg1: i32, %arg2: i32) -> (i32, i32) {
    %c0_i32 = arith.constant 0 : i32
    return %arg2, %arg1 : i32, i32
  }
  func.func @transform_2(%arg0: i32, %arg1: i32, %arg2: i32) -> (i32, i32) {
    %c0_i32 = arith.constant 0 : i32
    return %arg0, %arg1 : i32, i32
  }
  func.func @transform_3(%arg0: i32, %arg1: i32, %arg2: i32) -> (i32, i32) {
    %c0_i32 = arith.constant 0 : i32
    return %arg0, %arg1 : i32, i32
  }
}

module attributes {stable_mosaic.version = 11 : i64} {
  func.func @kernel(%arg0: i32, %arg1: i32, %arg2: i32, %arg3: memref<16x128xf32, #tpu.memory_space<vmem>>, %arg4: memref<1x128xf32, #tpu.memory_space<vmem>>, %arg5: memref<1x128xf32, #tpu.memory_space<vmem>>, %arg6: memref<128x512xbf16, #tpu.memory_space<vmem>>, %arg7: memref<1x512xf32, #tpu.memory_space<vmem>>, %arg8: memref<16x512xf32, #tpu.memory_space<vmem>>) attributes {dimension_semantics = [#tpu.dimension_semantics<parallel>, #tpu.dimension_semantics<parallel>, #tpu.dimension_semantics<arbitrary>], iteration_bounds = array<i64: 1, 2, 1>, scalar_prefetch = 0 : i64, scratch_operands = 0 : i64, tpu.core_type = #tpu.core_type<tc>, window_params = [{transform_indices = @transform_0, window_bounds = array<i64: 16, 128>}, {transform_indices = @transform_1, window_bounds = array<i64: 1, 128>}, {transform_indices = @transform_2, window_bounds = array<i64: 1, 128>}, {transform_indices = @transform_3, window_bounds = array<i64: 128, 512>}, {transform_indices = @transform_4, window_bounds = array<i64: 1, 512>}, {transform_indices = @transform_5, window_bounds = array<i64: 16, 512>}]} {
    %c0 = arith.constant 0 : index
    %c0_0 = arith.constant 0 : index
    %0 = vector.load %arg3[%c0, %c0_0] : memref<16x128xf32, #tpu.memory_space<vmem>>, vector<16x128xf32>
    %cst = arith.constant dense<0.000000e+00> : vector<16xf32>
    %1 = vector.multi_reduction <add>, %0, %cst [1] : vector<16x128xf32> to vector<16xf32>
    %2 = vector.shape_cast %1 : vector<16xf32> to vector<16x1xf32>
    %cst_1 = arith.constant 1.280000e+02 : f32
    %3 = vector.broadcast %cst_1 : f32 to vector<16x1xf32>
    %4 = arith.divf %2, %3 : vector<16x1xf32>
    %5 = vector.broadcast %4 : vector<16x1xf32> to vector<16x128xf32>
    %6 = arith.subf %0, %5 : vector<16x128xf32>
    %7 = arith.mulf %6, %6 : vector<16x128xf32>
    %cst_2 = arith.constant dense<0.000000e+00> : vector<16xf32>
    %8 = vector.multi_reduction <add>, %7, %cst_2 [1] : vector<16x128xf32> to vector<16xf32>
    %9 = vector.shape_cast %8 : vector<16xf32> to vector<16x1xf32>
    %cst_3 = arith.constant 1.280000e+02 : f32
    %10 = vector.broadcast %cst_3 : f32 to vector<16x1xf32>
    %11 = arith.divf %9, %10 : vector<16x1xf32>
    %12 = vector.broadcast %4 : vector<16x1xf32> to vector<16x128xf32>
    %13 = arith.subf %0, %12 : vector<16x128xf32>
    %cst_4 = arith.constant 9.99999974E-6 : f32
    %14 = vector.broadcast %cst_4 : f32 to vector<16x1xf32>
    %15 = arith.addf %11, %14 : vector<16x1xf32>
    %16 = math.rsqrt %15 : vector<16x1xf32>
    %17 = vector.broadcast %16 : vector<16x1xf32> to vector<16x128xf32>
    %18 = arith.mulf %13, %17 : vector<16x128xf32>
    %c0_5 = arith.constant 0 : index
    %c0_6 = arith.constant 0 : index
    %19 = vector.load %arg4[%c0_5, %c0_6] : memref<1x128xf32, #tpu.memory_space<vmem>>, vector<1x128xf32>
    %20 = vector.broadcast %19 : vector<1x128xf32> to vector<16x128xf32>
    %21 = arith.mulf %18, %20 : vector<16x128xf32>
    %c0_7 = arith.constant 0 : index
    %c0_8 = arith.constant 0 : index
    %22 = vector.load %arg5[%c0_7, %c0_8] : memref<1x128xf32, #tpu.memory_space<vmem>>, vector<1x128xf32>
    %23 = vector.broadcast %22 : vector<1x128xf32> to vector<16x128xf32>
    %24 = arith.addf %21, %23 : vector<16x128xf32>
    %25 = arith.truncf %24 : vector<16x128xf32> to vector<16x128xbf16>
    %c0_9 = arith.constant 0 : index
    %c0_10 = arith.constant 0 : index
    %26 = vector.load %arg6[%c0_9, %c0_10] : memref<128x512xbf16, #tpu.memory_space<vmem>>, vector<128x512xbf16>
    %cst_11 = arith.constant dense<0.000000e+00> : vector<16x512xf32>
    %27 = tpu.matmul %25, %26, %cst_11 {dimension_numbers = #tpu.dot_dimension_numbers<[1], [0], [0], [1], [0, 0, 1, 1], [], []>} : vector<16x128xbf16>, vector<128x512xbf16>, vector<16x512xf32> -> vector<16x512xf32>
    %c0_12 = arith.constant 0 : index
    %c0_13 = arith.constant 0 : index
    %28 = vector.load %arg7[%c0_12, %c0_13] : memref<1x512xf32, #tpu.memory_space<vmem>>, vector<1x512xf32>
    %29 = vector.broadcast %28 : vector<1x512xf32> to vector<16x512xf32>
    %30 = arith.addf %27, %29 : vector<16x512xf32>
    %cst_14 = arith.constant 0.000000e+00 : f32
    %31 = vector.broadcast %cst_14 : f32 to vector<16x512xf32>
    %32 = arith.maximumf %30, %31 : vector<16x512xf32>
    %c0_15 = arith.constant 0 : index
    %c0_16 = arith.constant 0 : index
    %33 = vector.load %arg8[%c0_15, %c0_16] : memref<16x512xf32, #tpu.memory_space<vmem>>, vector<16x512xf32>
    tpu.vector_store %arg8[%c0_15, %c0_16], %32 {strides = array<i32>} : memref<16x512xf32, #tpu.memory_space<vmem>>, vector<16x512xf32>,
    return
  }
  func.func @transform_0(%arg0: i32, %arg1: i32, %arg2: i32) -> (i32, i32) {
    %c0_i32 = arith.constant 0 : i32
    return %arg0, %arg2 : i32, i32
  }
  func.func @transform_1(%arg0: i32, %arg1: i32, %arg2: i32) -> (i32, i32) {
    %c0_i32 = arith.constant 0 : i32
    %c0_i32_0 = arith.constant 0 : i32
    return %c0_i32, %arg2 : i32, i32
  }
  func.func @transform_2(%arg0: i32, %arg1: i32, %arg2: i32) -> (i32, i32) {
    %c0_i32 = arith.constant 0 : i32
    %c0_i32_0 = arith.constant 0 : i32
    return %c0_i32, %arg2 : i32, i32
  }
  func.func @transform_3(%arg0: i32, %arg1: i32, %arg2: i32) -> (i32, i32) {
    %c0_i32 = arith.constant 0 : i32
    return %arg2, %arg1 : i32, i32
  }
  func.func @transform_4(%arg0: i32, %arg1: i32, %arg2: i32) -> (i32, i32) {
    %c0_i32 = arith.constant 0 : i32
    %c0_i32_0 = arith.constant 0 : i32
    return %c0_i32, %arg1 : i32, i32
  }
  func.func @transform_5(%arg0: i32, %arg1: i32, %arg2: i32) -> (i32, i32) {
    %c0_i32 = arith.constant 0 : i32
    return %arg0, %arg1 : i32, i32
  }
}

module attributes {stable_mosaic.version = 11 : i64} {
  func.func @_mha_kernel(%arg0: i32, %arg1: memref<1x8x128xf32, #tpu.memory_space<vmem>>, %arg2: memref<1x8x128xf32, #tpu.memory_space<vmem>>, %arg3: memref<1x8x128xf32, #tpu.memory_space<vmem>>, %arg4: memref<1x8x128xf32, #tpu.memory_space<vmem>>) attributes {dimension_semantics = [#tpu.dimension_semantics<parallel>], iteration_bounds = array<i64: 2>, scalar_prefetch = 0 : i64, scratch_operands = 0 : i64, tpu.core_type = #tpu.core_type<tc>, window_params = [{transform_indices = @transform_0, window_bounds = array<i64: 1, 8, 128>}, {transform_indices = @transform_1, window_bounds = array<i64: 1, 8, 128>}, {transform_indices = @transform_2, window_bounds = array<i64: 1, 8, 128>}, {transform_indices = @transform_3, window_bounds = array<i64: 1, 8, 128>}]} {
    %c0 = arith.constant 0 : index
    %c0_0 = arith.constant 0 : index
    %c0_1 = arith.constant 0 : index
    %0 = vector.load %arg1[%c0, %c0_0, %c0_1] : memref<1x8x128xf32, #tpu.memory_space<vmem>>, vector<1x8x128xf32>
    %1 = vector.shape_cast %0 : vector<1x8x128xf32> to vector<8x128xf32>
    %2 = arith.truncf %1 : vector<8x128xf32> to vector<8x128xbf16>
    %c0_2 = arith.constant 0 : index
    %c0_3 = arith.constant 0 : index
    %c0_4 = arith.constant 0 : index
    %3 = vector.load %arg2[%c0_2, %c0_3, %c0_4] : memref<1x8x128xf32, #tpu.memory_space<vmem>>, vector<1x8x128xf32>
    %4 = vector.shape_cast %3 : vector<1x8x128xf32> to vector<8x128xf32>
    %5 = arith.truncf %4 : vector<8x128xf32> to vector<8x128xbf16>
    %c0_5 = arith.constant 0 : index
    %c0_6 = arith.constant 0 : index
    %c0_7 = arith.constant 0 : index
    %6 = vector.load %arg3[%c0_5, %c0_6, %c0_7] : memref<1x8x128xf32, #tpu.memory_space<vmem>>, vector<1x8x128xf32>
    %7 = vector.shape_cast %6 : vector<1x8x128xf32> to vector<8x128xf32>
    %8 = arith.truncf %7 : vector<8x128xf32> to vector<8x128xbf16>
    %9 = vector.extract_strided_slice %2 {offsets = [0, 0], sizes = [8, 32], strides = [1, 1]} : vector<8x128xbf16> to vector<8x32xbf16>
    %10 = vector.extract_strided_slice %5 {offsets = [0, 0], sizes = [8, 32], strides = [1, 1]} : vector<8x128xbf16> to vector<8x32xbf16>
    %cst = arith.constant dense<0.000000e+00> : vector<8x8xf32>
    %11 = tpu.matmul %9, %10, %cst {dimension_numbers = #tpu.dot_dimension_numbers<[1], [1], [0], [0], [0, 0, 1, 0], [], []>} : vector<8x32xbf16>, vector<8x32xbf16>, vector<8x8xf32> -> vector<8x8xf32>
    %cst_8 = arith.constant dense<0xFF800000> : vector<8xf32>
    %12 = vector.multi_reduction <maximumf>, %11, %cst_8 [1] : vector<8x8xf32> to vector<8xf32>
    %13 = vector.shape_cast %12 : vector<8xf32> to vector<8x1xf32>
    %14 = vector.broadcast %13 : vector<8x1xf32> to vector<8x8xf32>
    %15 = arith.subf %11, %14 : vector<8x8xf32>
    %16 = math.exp %15 : vector<8x8xf32>
    %cst_9 = arith.constant dense<0.000000e+00> : vector<8xf32>
    %17 = vector.multi_reduction <add>, %16, %cst_9 [1] : vector<8x8xf32> to vector<8xf32>
    %18 = vector.shape_cast %17 : vector<8xf32> to vector<8x1xf32>
    %19 = vector.broadcast %18 : vector<8x1xf32> to vector<8x8xf32>
    %20 = arith.divf %16, %19 : vector<8x8xf32>
    %21 = arith.truncf %20 : vector<8x8xf32> to vector<8x8xbf16>
    %22 = vector.extract_strided_slice %8 {offsets = [0, 0], sizes = [8, 32], strides = [1, 1]} : vector<8x128xbf16> to vector<8x32xbf16>
    %cst_10 = arith.constant dense<0.000000e+00> : vector<8x32xf32>
    %23 = tpu.matmul %21, %22, %cst_10 {dimension_numbers = #tpu.dot_dimension_numbers<[1], [0], [0], [1], [0, 0, 1, 1], [], []>} : vector<8x8xbf16>, vector<8x32xbf16>, vector<8x32xf32> -> vector<8x32xf32>
    %24 = vector.extract_strided_slice %2 {offsets = [0, 32], sizes = [8, 32], strides = [1, 1]} : vector<8x128xbf16> to vector<8x32xbf16>
    %25 = vector.extract_strided_slice %5 {offsets = [0, 32], sizes = [8, 32], strides = [1, 1]} : vector<8x128xbf16> to vector<8x32xbf16>
    %cst_11 = arith.constant dense<0.000000e+00> : vector<8x8xf32>
    %26 = tpu.matmul %24, %25, %cst_11 {dimension_numbers = #tpu.dot_dimension_numbers<[1], [1], [0], [0], [0, 0, 1, 0], [], []>} : vector<8x32xbf16>, vector<8x32xbf16>, vector<8x8xf32> -> vector<8x8xf32>
    %cst_12 = arith.constant dense<0xFF800000> : vector<8xf32>
    %27 = vector.multi_reduction <maximumf>, %26, %cst_12 [1] : vector<8x8xf32> to vector<8xf32>
    %28 = vector.shape_cast %27 : vector<8xf32> to vector<8x1xf32>
    %29 = vector.broadcast %28 : vector<8x1xf32> to vector<8x8xf32>
    %30 = arith.subf %26, %29 : vector<8x8xf32>
    %31 = math.exp %30 : vector<8x8xf32>
    %cst_13 = arith.constant dense<0.000000e+00> : vector<8xf32>
    %32 = vector.multi_reduction <add>, %31, %cst_13 [1] : vector<8x8xf32> to vector<8xf32>
    %33 = vector.shape_cast %32 : vector<8xf32> to vector<8x1xf32>
    %34 = vector.broadcast %33 : vector<8x1xf32> to vector<8x8xf32>
    %35 = arith.divf %31, %34 : vector<8x8xf32>
    %36 = arith.truncf %35 : vector<8x8xf32> to vector<8x8xbf16>
    %37 = vector.extract_strided_slice %8 {offsets = [0, 32], sizes = [8, 32], strides = [1, 1]} : vector<8x128xbf16> to vector<8x32xbf16>
    %cst_14 = arith.constant dense<0.000000e+00> : vector<8x32xf32>
    %38 = tpu.matmul %36, %37, %cst_14 {dimension_numbers = #tpu.dot_dimension_numbers<[1], [0], [0], [1], [0, 0, 1, 1], [], []>} : vector<8x8xbf16>, vector<8x32xbf16>, vector<8x32xf32> -> vector<8x32xf32>
    %39 = vector.extract_strided_slice %2 {offsets = [0, 64], sizes = [8, 32], strides = [1, 1]} : vector<8x128xbf16> to vector<8x32xbf16>
    %40 = vector.extract_strided_slice %5 {offsets = [0, 64], sizes = [8, 32], strides = [1, 1]} : vector<8x128xbf16> to vector<8x32xbf16>
    %cst_15 = arith.constant dense<0.000000e+00> : vector<8x8xf32>
    %41 = tpu.matmul %39, %40, %cst_15 {dimension_numbers = #tpu.dot_dimension_numbers<[1], [1], [0], [0], [0, 0, 1, 0], [], []>} : vector<8x32xbf16>, vector<8x32xbf16>, vector<8x8xf32> -> vector<8x8xf32>
    %cst_16 = arith.constant dense<0xFF800000> : vector<8xf32>
    %42 = vector.multi_reduction <maximumf>, %41, %cst_16 [1] : vector<8x8xf32> to vector<8xf32>
    %43 = vector.shape_cast %42 : vector<8xf32> to vector<8x1xf32>
    %44 = vector.broadcast %43 : vector<8x1xf32> to vector<8x8xf32>
    %45 = arith.subf %41, %44 : vector<8x8xf32>
    %46 = math.exp %45 : vector<8x8xf32>
    %cst_17 = arith.constant dense<0.000000e+00> : vector<8xf32>
    %47 = vector.multi_reduction <add>, %46, %cst_17 [1] : vector<8x8xf32> to vector<8xf32>
    %48 = vector.shape_cast %47 : vector<8xf32> to vector<8x1xf32>
    %49 = vector.broadcast %48 : vector<8x1xf32> to vector<8x8xf32>
    %50 = arith.divf %46, %49 : vector<8x8xf32>
    %51 = arith.truncf %50 : vector<8x8xf32> to vector<8x8xbf16>
    %52 = vector.extract_strided_slice %8 {offsets = [0, 64], sizes = [8, 32], strides = [1, 1]} : vector<8x128xbf16> to vector<8x32xbf16>
    %cst_18 = arith.constant dense<0.000000e+00> : vector<8x32xf32>
    %53 = tpu.matmul %51, %52, %cst_18 {dimension_numbers = #tpu.dot_dimension_numbers<[1], [0], [0], [1], [0, 0, 1, 1], [], []>} : vector<8x8xbf16>, vector<8x32xbf16>, vector<8x32xf32> -> vector<8x32xf32>
    %54 = vector.extract_strided_slice %2 {offsets = [0, 96], sizes = [8, 32], strides = [1, 1]} : vector<8x128xbf16> to vector<8x32xbf16>
    %55 = vector.extract_strided_slice %5 {offsets = [0, 96], sizes = [8, 32], strides = [1, 1]} : vector<8x128xbf16> to vector<8x32xbf16>
    %cst_19 = arith.constant dense<0.000000e+00> : vector<8x8xf32>
    %56 = tpu.matmul %54, %55, %cst_19 {dimension_numbers = #tpu.dot_dimension_numbers<[1], [1], [0], [0], [0, 0, 1, 0], [], []>} : vector<8x32xbf16>, vector<8x32xbf16>, vector<8x8xf32> -> vector<8x8xf32>
    %cst_20 = arith.constant dense<0xFF800000> : vector<8xf32>
    %57 = vector.multi_reduction <maximumf>, %56, %cst_20 [1] : vector<8x8xf32> to vector<8xf32>
    %58 = vector.shape_cast %57 : vector<8xf32> to vector<8x1xf32>
    %59 = vector.broadcast %58 : vector<8x1xf32> to vector<8x8xf32>
    %60 = arith.subf %56, %59 : vector<8x8xf32>
    %61 = math.exp %60 : vector<8x8xf32>
    %cst_21 = arith.constant dense<0.000000e+00> : vector<8xf32>
    %62 = vector.multi_reduction <add>, %61, %cst_21 [1] : vector<8x8xf32> to vector<8xf32>
    %63 = vector.shape_cast %62 : vector<8xf32> to vector<8x1xf32>
    %64 = vector.broadcast %63 : vector<8x1xf32> to vector<8x8xf32>
    %65 = arith.divf %61, %64 : vector<8x8xf32>
    %66 = arith.truncf %65 : vector<8x8xf32> to vector<8x8xbf16>
    %67 = vector.extract_strided_slice %8 {offsets = [0, 96], sizes = [8, 32], strides = [1, 1]} : vector<8x128xbf16> to vector<8x32xbf16>
    %cst_22 = arith.constant dense<0.000000e+00> : vector<8x32xf32>
    %68 = tpu.matmul %66, %67, %cst_22 {dimension_numbers = #tpu.dot_dimension_numbers<[1], [0], [0], [1], [0, 0, 1, 1], [], []>} : vector<8x8xbf16>, vector<8x32xbf16>, vector<8x32xf32> -> vector<8x32xf32>
    %69 = tpu.concatenate %23, %38, %53, %68 in 1 : vector<8x32xf32>, vector<8x32xf32>, vector<8x32xf32>, vector<8x32xf32> -> vector<8x128xf32>
    %c0_23 = arith.constant 0 : index
    %c0_24 = arith.constant 0 : index
    %c0_25 = arith.constant 0 : index
    %70 = vector.load %arg4[%c0_23, %c0_24, %c0_25] : memref<1x8x128xf32, #tpu.memory_space<vmem>>, vector<1x8x128xf32>
    %71 = vector.shape_cast %70 : vector<1x8x128xf32> to vector<8x128xf32>
    %72 = vector.shape_cast %69 : vector<8x128xf32> to vector<1x8x128xf32>
    tpu.vector_store %arg4[%c0_23, %c0_24, %c0_25], %72 {strides = array<i32>} : memref<1x8x128xf32, #tpu.memory_space<vmem>>, vector<1x8x128xf32>,
    return
  }
  func.func @transform_0(%arg0: i32) -> (i32, i32, i32) {
    %c0_i32 = arith.constant 0 : i32
    %c0_i32_0 = arith.constant 0 : i32
    %c0_i32_1 = arith.constant 0 : i32
    return %arg0, %c0_i32, %c0_i32_0 : i32, i32, i32
  }
  func.func @transform_1(%arg0: i32) -> (i32, i32, i32) {
    %c0_i32 = arith.constant 0 : i32
    %c0_i32_0 = arith.constant 0 : i32
    %c0_i32_1 = arith.constant 0 : i32
    return %arg0, %c0_i32, %c0_i32_0 : i32, i32, i32
  }
  func.func @transform_2(%arg0: i32) -> (i32, i32, i32) {
    %c0_i32 = arith.constant 0 : i32
    %c1_i32 = arith.constant 1 : i32
    %c0_i32_0 = arith.constant 0 : i32
    return %arg0, %c0_i32, %c1_i32 : i32, i32, i32
  }
  func.func @transform_3(%arg0: i32) -> (i32, i32, i32) {
    %c0_i32 = arith.constant 0 : i32
    %c0_i32_0 = arith.constant 0 : i32
    %c0_i32_1 = arith.constant 0 : i32
    return %arg0, %c0_i32, %c0_i32_0 : i32, i32, i32
  }
}

module attributes {stable_mosaic.version = 11 : i64} {
  func.func @kernel(%arg0: i32, %arg1: i32, %arg2: i32, %arg3: memref<16x128xf32, #tpu.memory_space<vmem>>, %arg4: memref<16x128xf32, #tpu.memory_space<vmem>>, %arg5: memref<1x128xf32, #tpu.memory_space<vmem>>, %arg6: memref<1x128xf32, #tpu.memory_space<vmem>>, %arg7: memref<128x128xbf16, #tpu.memory_space<vmem>>, %arg8: memref<16x128xf32, #tpu.memory_space<vmem>>) attributes {dimension_semantics = [#tpu.dimension_semantics<parallel>, #tpu.dimension_semantics<parallel>, #tpu.dimension_semantics<arbitrary>], iteration_bounds = array<i64: 1, 1, 1>, scalar_prefetch = 0 : i64, scratch_operands = 0 : i64, tpu.core_type = #tpu.core_type<tc>, window_params = [{transform_indices = @transform_0, window_bounds = array<i64: 16, 128>}, {transform_indices = @transform_1, window_bounds = array<i64: 16, 128>}, {transform_indices = @transform_2, window_bounds = array<i64: 1, 128>}, {transform_indices = @transform_3, window_bounds = array<i64: 1, 128>}, {transform_indices = @transform_4, window_bounds = array<i64: 128, 128>}, {transform_indices = @transform_5, window_bounds = array<i64: 16, 128>}]} {
    %c0 = arith.constant 0 : index
    %c0_0 = arith.constant 0 : index
    %0 = vector.load %arg3[%c0, %c0_0] : memref<16x128xf32, #tpu.memory_space<vmem>>, vector<16x128xf32>
    %cst = arith.constant dense<0.000000e+00> : vector<16xf32>
    %1 = vector.multi_reduction <add>, %0, %cst [1] : vector<16x128xf32> to vector<16xf32>
    %2 = vector.shape_cast %1 : vector<16xf32> to vector<16x1xf32>
    %cst_1 = arith.constant 1.280000e+02 : f32
    %3 = vector.broadcast %cst_1 : f32 to vector<16x1xf32>
    %4 = arith.divf %2, %3 : vector<16x1xf32>
    %5 = vector.broadcast %4 : vector<16x1xf32> to vector<16x128xf32>
    %6 = arith.subf %0, %5 : vector<16x128xf32>
    %7 = arith.mulf %6, %6 : vector<16x128xf32>
    %cst_2 = arith.constant dense<0.000000e+00> : vector<16xf32>
    %8 = vector.multi_reduction <add>, %7, %cst_2 [1] : vector<16x128xf32> to vector<16xf32>
    %9 = vector.shape_cast %8 : vector<16xf32> to vector<16x1xf32>
    %cst_3 = arith.constant 1.280000e+02 : f32
    %10 = vector.broadcast %cst_3 : f32 to vector<16x1xf32>
    %11 = arith.divf %9, %10 : vector<16x1xf32>
    %12 = vector.broadcast %4 : vector<16x1xf32> to vector<16x128xf32>
    %13 = arith.subf %0, %12 : vector<16x128xf32>
    %cst_4 = arith.constant 9.99999974E-6 : f32
    %14 = vector.broadcast %cst_4 : f32 to vector<16x1xf32>
    %15 = arith.addf %11, %14 : vector<16x1xf32>
    %16 = math.rsqrt %15 : vector<16x1xf32>
    %17 = vector.broadcast %16 : vector<16x1xf32> to vector<16x128xf32>
    %18 = arith.mulf %13, %17 : vector<16x128xf32>
    %c0_5 = arith.constant 0 : index
    %c0_6 = arith.constant 0 : index
    %19 = vector.load %arg5[%c0_5, %c0_6] : memref<1x128xf32, #tpu.memory_space<vmem>>, vector<1x128xf32>
    %20 = vector.broadcast %19 : vector<1x128xf32> to vector<16x128xf32>
    %21 = arith.mulf %18, %20 : vector<16x128xf32>
    %c0_7 = arith.constant 0 : index
    %c0_8 = arith.constant 0 : index
    %22 = vector.load %arg6[%c0_7, %c0_8] : memref<1x128xf32, #tpu.memory_space<vmem>>, vector<1x128xf32>
    %23 = vector.broadcast %22 : vector<1x128xf32> to vector<16x128xf32>
    %24 = arith.addf %21, %23 : vector<16x128xf32>
    %c0_9 = arith.constant 0 : index
    %c0_10 = arith.constant 0 : index
    %25 = vector.load %arg4[%c0_9, %c0_10] : memref<16x128xf32, #tpu.memory_space<vmem>>, vector<16x128xf32>
    %26 = arith.addf %24, %25 : vector<16x128xf32>
    %27 = arith.truncf %26 : vector<16x128xf32> to vector<16x128xbf16>
    %c0_11 = arith.constant 0 : index
    %c0_12 = arith.constant 0 : index
    %28 = vector.load %arg7[%c0_11, %c0_12] : memref<128x128xbf16, #tpu.memory_space<vmem>>, vector<128x128xbf16>
    %cst_13 = arith.constant dense<0.000000e+00> : vector<16x128xf32>
    %29 = tpu.matmul %27, %28, %cst_13 {dimension_numbers = #tpu.dot_dimension_numbers<[1], [0], [0], [1], [0, 0, 1, 1], [], []>} : vector<16x128xbf16>, vector<128x128xbf16>, vector<16x128xf32> -> vector<16x128xf32>
    %c0_14 = arith.constant 0 : index
    %c0_15 = arith.constant 0 : index
    %30 = vector.load %arg8[%c0_14, %c0_15] : memref<16x128xf32, #tpu.memory_space<vmem>>, vector<16x128xf32>
    tpu.vector_store %arg8[%c0_14, %c0_15], %29 {strides = array<i32>} : memref<16x128xf32, #tpu.memory_space<vmem>>, vector<16x128xf32>,
    return
  }
  func.func @transform_0(%arg0: i32, %arg1: i32, %arg2: i32) -> (i32, i32) {
    %c0_i32 = arith.constant 0 : i32
    return %arg0, %arg2 : i32, i32
  }
  func.func @transform_1(%arg0: i32, %arg1: i32, %arg2: i32) -> (i32, i32) {
    %c0_i32 = arith.constant 0 : i32
    return %arg0, %arg2 : i32, i32
  }
  func.func @transform_2(%arg0: i32, %arg1: i32, %arg2: i32) -> (i32, i32) {
    %c0_i32 = arith.constant 0 : i32
    %c0_i32_0 = arith.constant 0 : i32
    return %c0_i32, %arg2 : i32, i32
  }
  func.func @transform_3(%arg0: i32, %arg1: i32, %arg2: i32) -> (i32, i32) {
    %c0_i32 = arith.constant 0 : i32
    %c0_i32_0 = arith.constant 0 : i32
    return %c0_i32, %arg2 : i32, i32
  }
  func.func @transform_4(%arg0: i32, %arg1: i32, %arg2: i32) -> (i32, i32) {
    %c0_i32 = arith.constant 0 : i32
    return %arg2, %arg1 : i32, i32
  }
  func.func @transform_5(%arg0: i32, %arg1: i32, %arg2: i32) -> (i32, i32) {
    %c0_i32 = arith.constant 0 : i32
    return %arg0, %arg1 : i32, i32
  }
}

module attributes {stable_mosaic.version = 11 : i64} {
  func.func @kernel(%arg0: i32, %arg1: i32, %arg2: i32, %arg3: memref<16x512xf32, #tpu.memory_space<vmem>>, %arg4: memref<512x128xbf16, #tpu.memory_space<vmem>>, %arg5: memref<1x128xf32, #tpu.memory_space<vmem>>, %arg6: memref<16x128xf32, #tpu.memory_space<vmem>>, %arg7: memref<16x128xf32, #tpu.memory_space<vmem>>, %arg8: memref<16x128xf32, #tpu.memory_space<vmem>>) attributes {dimension_semantics = [#tpu.dimension_semantics<parallel>, #tpu.dimension_semantics<parallel>, #tpu.dimension_semantics<arbitrary>], iteration_bounds = array<i64: 1, 1, 2>, scalar_prefetch = 0 : i64, scratch_operands = 1 : i64, tpu.core_type = #tpu.core_type<tc>, window_params = [{transform_indices = @transform_0, window_bounds = array<i64: 16, 512>}, {transform_indices = @transform_1, window_bounds = array<i64: 512, 128>}, {transform_indices = @transform_2, window_bounds = array<i64: 1, 128>}, {transform_indices = @transform_3, window_bounds = array<i64: 16, 128>}, {transform_indices = @transform_4, window_bounds = array<i64: 16, 128>}]} {
    %c0 = arith.constant 0 : index
    %c0_0 = arith.constant 0 : index
    %0 = vector.load %arg3[%c0, %c0_0] : memref<16x512xf32, #tpu.memory_space<vmem>>, vector<16x512xf32>
    %1 = arith.truncf %0 : vector<16x512xf32> to vector<16x512xbf16>
    %c0_1 = arith.constant 0 : index
    %c0_2 = arith.constant 0 : index
    %2 = vector.load %arg4[%c0_1, %c0_2] : memref<512x128xbf16, #tpu.memory_space<vmem>>, vector<512x128xbf16>
    %cst = arith.constant dense<0.000000e+00> : vector<16x128xf32>
    %3 = tpu.matmul %1, %2, %cst {dimension_numbers = #tpu.dot_dimension_numbers<[1], [0], [0], [1], [0, 0, 1, 1], [], []>} : vector<16x512xbf16>, vector<512x128xbf16>, vector<16x128xf32> -> vector<16x128xf32>
    %c0_i32 = arith.constant 0 : i32
    %4 = arith.cmpi eq, %arg2, %c0_i32 : i32
    %5 = arith.extui %4 : i1 to i32
    %c0_i32_3 = arith.constant 0 : i32
    %6 = arith.cmpi ne, %5, %c0_i32_3 : i32
    scf.if %6 {
      %cst_9 = arith.constant 0.000000e+00 : f32
      %13 = vector.broadcast %cst_9 : f32 to vector<16x128xf32>
      %c0_10 = arith.constant 0 : index
      %c0_11 = arith.constant 0 : index
      %14 = vector.load %arg8[%c0_10, %c0_11] : memref<16x128xf32, #tpu.memory_space<vmem>>, vector<16x128xf32>
      tpu.vector_store %arg8[%c0_10, %c0_11], %13 {strides = array<i32>} : memref<16x128xf32, #tpu.memory_space<vmem>>, vector<16x128xf32>,
    } else {
    }
    %c0_4 = arith.constant 0 : index
    %c0_5 = arith.constant 0 : index
    %7 = vector.load %arg8[%c0_4, %c0_5] : memref<16x128xf32, #tpu.memory_space<vmem>>, vector<16x128xf32>
    %8 = arith.addf %7, %3 : vector<16x128xf32>
    %c0_6 = arith.constant 0 : index
    %c0_7 = arith.constant 0 : index
    %9 = vector.load %arg8[%c0_6, %c0_7] : memref<16x128xf32, #tpu.memory_space<vmem>>, vector<16x128xf32>
    tpu.vector_store %arg8[%c0_6, %c0_7], %8 {strides = array<i32>} : memref<16x128xf32, #tpu.memory_space<vmem>>, vector<16x128xf32>,
    %c1_i32 = arith.constant 1 : i32
    %10 = arith.cmpi eq, %arg2, %c1_i32 : i32
    %11 = arith.extui %10 : i1 to i32
    %c0_i32_8 = arith.constant 0 : i32
    %12 = arith.cmpi ne, %11, %c0_i32_8 : i32
    scf.if %12 {
      %c0_9 = arith.constant 0 : index
      %c0_10 = arith.constant 0 : index
      %13 = vector.load %arg8[%c0_9, %c0_10] : memref<16x128xf32, #tpu.memory_space<vmem>>, vector<16x128xf32>
      %c0_11 = arith.constant 0 : index
      %c0_12 = arith.constant 0 : index
      %14 = vector.load %arg5[%c0_11, %c0_12] : memref<1x128xf32, #tpu.memory_space<vmem>>, vector<1x128xf32>
      %15 = vector.broadcast %14 : vector<1x128xf32> to vector<16x128xf32>
      %16 = arith.addf %13, %15 : vector<16x128xf32>
      %c0_13 = arith.constant 0 : index
      %c0_14 = arith.constant 0 : index
      %17 = vector.load %arg6[%c0_13, %c0_14] : memref<16x128xf32, #tpu.memory_space<vmem>>, vector<16x128xf32>
      %18 = arith.addf %16, %17 : vector<16x128xf32>
      %c0_15 = arith.constant 0 : index
      %c0_16 = arith.constant 0 : index
      %19 = vector.load %arg7[%c0_15, %c0_16] : memref<16x128xf32, #tpu.memory_space<vmem>>, vector<16x128xf32>
      tpu.vector_store %arg7[%c0_15, %c0_16], %18 {strides = array<i32>} : memref<16x128xf32, #tpu.memory_space<vmem>>, vector<16x128xf32>,
    } else {
    }
    return
  }
  func.func @transform_0(%arg0: i32, %arg1: i32, %arg2: i32) -> (i32, i32) {
    %c0_i32 = arith.constant 0 : i32
    return %arg0, %arg2 : i32, i32
  }
  func.func @transform_1(%arg0: i32, %arg1: i32, %arg2: i32) -> (i32, i32) {
    %c0_i32 = arith.constant 0 : i32
    return %arg2, %arg1 : i32, i32
  }
  func.func @transform_2(%arg0: i32, %arg1: i32, %arg2: i32) -> (i32, i32) {
    %c0_i32 = arith.constant 0 : i32
    %c0_i32_0 = arith.constant 0 : i32
    return %c0_i32, %arg1 : i32, i32
  }
  func.func @transform_3(%arg0: i32, %arg1: i32, %arg2: i32) -> (i32, i32) {
    %c0_i32 = arith.constant 0 : i32
    return %arg0, %arg1 : i32, i32
  }
  func.func @transform_4(%arg0: i32, %arg1: i32, %arg2: i32) -> (i32, i32) {
    %c0_i32 = arith.constant 0 : i32
    return %arg0, %arg1 : i32, i32
  }
}

</mosaic_0001>

<llo_original>
// kernel: transformer_decoder_layer.13
$region0: #{transformer_decoder_layer.13}
  #allocation0 [shape = 'u32[]', space=smem, size = 0x4, offset = 0x4, fixed_abs, tag = 'smem constant byte address 0x4 - core index']
  #allocation1 [shape = 'u32[144,128]{1,0:T(1,128)}', space=vmem, size = 0x12000, scoped, tag = 'internal scratch']
  %s0 = inlined_call_operand.vmem [shape: f32[16,128], index: 0, kind: input, shape index: {}]
  %s1 = inlined_call_operand.vmem [shape: f32[16,128], index: 1, kind: input, shape index: {}]
  %s2 = inlined_call_operand.hbm [shape: bf16[128,256], index: 2, kind: input, shape index: {}]
  %s3 = inlined_call_operand.vmem [shape: f32[16,256], index: 3, kind: output, shape index: {}]
  %s4 = sld [smem:[#allocation0]]
  $region83: #{transformer_decoder_layer.13} parent=0
    _
  %s6 = ssub.s32 1, %s4
  %s7 = scalar_select 0, %s6, %s4
  $region1: #{transformer_decoder_layer.13} parent=0
    #allocation2 [shape = 'u8[65536]{0}', space=vmem, size = 0x10000, scoped, tag = 'input window, operand 2']
    #allocation3 [shape = 's32[2]{0}', space=sflag, size = 0x8, scoped, tag = 'scoped memory for transformer_decoder_layer.13']
    #allocation4 [shape = 'u8[16384]{0}', space=vmem, size = 0x4000, scoped, tag = 'output window, operand 0']
    %8 = vsyncpa [#allocation3], 0
    %s9 = scalar_lea.sflag [#allocation3], 1
    %10 = vsyncpa %s9, 0
    loop: start=0, step=1, limit=4
    $region2: #{transformer_decoder_layer.13} parent=1 // loop_pre_header
      _
    $region3: #{transformer_decoder_layer.13} parent=1 // loop_header
      %s12 = sphi 0, %s16
      %p13 = scmp.ge.s32.totalorder %s12, 4
      %s19 = sphi 0, %s38
      %s20 = sphi 0, %s34
      %s21 = sphi 0, %s30
      %s22 = sphi 0, %s19
      %s23 = sphi 0, %s20
      %s24 = sphi 0, %s21
      %s25 = sphi 0, %s22
      %s26 = sphi 0, %s23
      %s27 = sphi 0, %s24
      %s43 = sphi 0, %s45
      %s46 = sphi 0, %s43
      %s47 = sphi 0, %s46
      %s63 = sphi 0, %s47
      %s71 = sphi 0, %s73
      %s74 = sphi 0, %s71
      %s75 = sphi 0, %s74
      %s91 = sphi 0, %s75
      %s99 = sphi 0, %s101
      %s102 = sphi 0, %s99
      %s103 = sphi 0, %s102
      %s119 = sphi 0, %s103
      %s127 = sphi 0, %s129
      %s130 = sphi 0, %s127
      %s131 = sphi 0, %s130
      %s147 = sphi 0, %s131
    $region4: #{transformer_decoder_layer.13} parent=1 // loop_header_branch
      %15 = sbr.rel (%p13) target = $region8
    $region5: #{transformer_decoder_layer.13} parent=1 // loop_body
      %s17 = ssub.s32 %s12, 1
      %s18 = ssub.s32 %s12, 2
      %s28 = sadd.s32 1, %s21
      %p29 = scmp.ge.s32.totalorder %s28, 1
      %s30 = scalar_select %p29, 0, %s28
      %s31 = sadd.s32 1, %s20
      %s32 = scalar_select %p29, %s31, %s20
      %p33 = scmp.ge.s32.totalorder %s32, 2
      %s34 = scalar_select %p33, 0, %s32
      %s35 = sadd.s32 1, %s19
      %s36 = scalar_select %p33, %s35, %s19
      %p37 = scmp.ge.s32.totalorder %s36, 1
      %s38 = scalar_select %p37, 0, %s36
      %s39 = ssub.s32 %s19, %s38
      %s40 = ssub.s32 %s21, %s30
      %s41 = sor.u32 %s39, %s40
      %p42 = scmp.eq.s32.totalorder %s41, 0
      %s44 = sadd.s32 %s43, 1
      %s45 = scalar_select %p42, %s43, %s44
      %p48 = pneg %p42
      %p49 = scmp.eq.s32.totalorder %s12, 1
      %p50 = por %p48, %p49
      %p51 = scmp.ne.s32.totalorder %s43, %s46
      %p52 = scmp.eq.s32.totalorder %s12, 0
      %p53 = por %p51, %p52
      %p54 = scmp.ne.s32.totalorder %s43, %s46
      %p55 = scmp.eq.s32.totalorder %s17, 1
      %p56 = por %p54, %p55
      %p57 = scmp.ne.s32.totalorder %s46, %s47
      %p58 = scmp.eq.s32.totalorder %s17, 0
      %p59 = por %p57, %p58
      %p60 = scmp.ne.s32.totalorder %s46, %s47
      %p61 = scmp.eq.s32.totalorder %s18, 1
      %p62 = por %p60, %p61
      %p64 = scmp.ne.s32.totalorder %s47, %s63
      %p65 = scmp.eq.s32.totalorder %s18, 0
      %p66 = por %p64, %p65
      %s67 = ssub.s32 %s19, %s38
      %s68 = ssub.s32 %s21, %s30
      %s69 = sor.u32 %s67, %s68
      %p70 = scmp.eq.s32.totalorder %s69, 0
      %s72 = sadd.s32 %s71, 1
      %s73 = scalar_select %p70, %s71, %s72
      %p76 = pneg %p70
      %p77 = scmp.eq.s32.totalorder %s12, 1
      %p78 = por %p76, %p77
      %p79 = scmp.ne.s32.totalorder %s71, %s74
      %p80 = scmp.eq.s32.totalorder %s12, 0
      %p81 = por %p79, %p80
      %p82 = scmp.ne.s32.totalorder %s71, %s74
      %p83 = scmp.eq.s32.totalorder %s17, 1
      %p84 = por %p82, %p83
      %p85 = scmp.ne.s32.totalorder %s74, %s75
      %p86 = scmp.eq.s32.totalorder %s17, 0
      %p87 = por %p85, %p86
      %p88 = scmp.ne.s32.totalorder %s74, %s75
      %p89 = scmp.eq.s32.totalorder %s18, 1
      %p90 = por %p88, %p89
      %p92 = scmp.ne.s32.totalorder %s75, %s91
      %p93 = scmp.eq.s32.totalorder %s18, 0
      %p94 = por %p92, %p93
      %s95 = ssub.s32 %s21, %s30
      %s96 = ssub.s32 %s20, %s34
      %s97 = sor.u32 %s95, %s96
      %p98 = scmp.eq.s32.totalorder %s97, 0
      %s100 = sadd.s32 %s99, 1
      %s101 = scalar_select %p98, %s99, %s100
      %p104 = pneg %p98
      %p105 = scmp.eq.s32.totalorder %s12, 1
      %p106 = por %p104, %p105
      %p107 = scmp.ne.s32.totalorder %s99, %s102
      %p108 = scmp.eq.s32.totalorder %s12, 0
      %p109 = por %p107, %p108
      %p110 = scmp.ne.s32.totalorder %s99, %s102
      %p111 = scmp.eq.s32.totalorder %s17, 1
      %p112 = por %p110, %p111
      %p113 = scmp.ne.s32.totalorder %s102, %s103
      %p114 = scmp.eq.s32.totalorder %s17, 0
      %p115 = por %p113, %p114
      %p116 = scmp.ne.s32.totalorder %s102, %s103
      %p117 = scmp.eq.s32.totalorder %s18, 1
      %p118 = por %p116, %p117
      %p120 = scmp.ne.s32.totalorder %s103, %s119
      %p121 = scmp.eq.s32.totalorder %s18, 0
      %p122 = por %p120, %p121
      %s123 = ssub.s32 %s19, %s38
      %s124 = ssub.s32 %s20, %s34
      %s125 = sor.u32 %s123, %s124
      %p126 = scmp.eq.s32.totalorder %s125, 0
      %s128 = sadd.s32 %s127, 1
      %s129 = scalar_select %p126, %s127, %s128
      %p132 = pneg %p126
      %p133 = scmp.eq.s32.totalorder %s12, 1
      %p134 = por %p132, %p133
      %p135 = scmp.ne.s32.totalorder %s127, %s130
      %p136 = scmp.eq.s32.totalorder %s12, 0
      %p137 = por %p135, %p136
      %p138 = scmp.ne.s32.totalorder %s127, %s130
      %p139 = scmp.eq.s32.totalorder %s17, 1
      %p140 = por %p138, %p139
      %p141 = scmp.ne.s32.totalorder %s130, %s131
      %p142 = scmp.eq.s32.totalorder %s17, 0
      %p143 = por %p141, %p142
      %p144 = scmp.ne.s32.totalorder %s130, %s131
      %p145 = scmp.eq.s32.totalorder %s18, 1
      %p146 = por %p144, %p145
      %p148 = scmp.ne.s32.totalorder %s131, %s147
      %p149 = scmp.eq.s32.totalorder %s18, 0
      %p150 = por %p148, %p149
      %p151 = scmp.le.s32.totalorder 1, %s12
      %p152 = scmp.lt.s32.totalorder %s12, 3
      %p153 = pnand %p151, %p152
      %p154 = pneg %p153
      // Predicated region
      $region9: #{transformer_decoder_layer.13} parent=5 // pred_check
        _
      $region10: #{transformer_decoder_layer.13} parent=5 // pred_check_branch
        %156 = sbr.rel (%p153) target = $region12
      $region11: #{transformer_decoder_layer.13} parent=5 // pred_region
        %s157 = ssub.s32 %s12, 1
        // Predicated region
        $region13: #{transformer_decoder_layer.13} parent=11 // pred_check
          %p158 = pneg %p59
        $region14: #{transformer_decoder_layer.13} parent=11 // pred_check_branch
          %160 = sbr.rel (%p158) target = $region16
        $region15: #{transformer_decoder_layer.13} parent=11 // pred_region
          %s161 = smul.u32 2, %s22
          %p162 = scmp.lt.s32.totalorder %s161, 1
          %s163 = scalar_select %p162, %s161, 1
          %p164 = scmp.lt.s32.totalorder %s24, 0
          %s165 = scalar_select %p164, %s24, 0
          %s166 = sadd.s32 %s165, %s163
          %s167 = smul.addr %s166, 8
          %s168 = scalar_lea.vmem %s0, %s167
          %s169 = smul.u32 2, %s22
        $region16: #{transformer_decoder_layer.13} parent=11 // pred_fallthru
          _
        // Predicated region
        $region17: #{transformer_decoder_layer.13} parent=11 // pred_check
          %p170 = pneg %p87
        $region18: #{transformer_decoder_layer.13} parent=11 // pred_check_branch
          %172 = sbr.rel (%p170) target = $region20
        $region19: #{transformer_decoder_layer.13} parent=11 // pred_region
          %s173 = smul.u32 2, %s22
          %p174 = scmp.lt.s32.totalorder %s173, 1
          %s175 = scalar_select %p174, %s173, 1
          %p176 = scmp.lt.s32.totalorder %s24, 0
          %s177 = scalar_select %p176, %s24, 0
          %s178 = sadd.s32 %s177, %s175
          %s179 = smul.addr %s178, 8
          %s180 = scalar_lea.vmem %s1, %s179
          %s181 = smul.u32 2, %s22
        $region20: #{transformer_decoder_layer.13} parent=11 // pred_fallthru
          _
      $region12: #{transformer_decoder_layer.13} parent=5 // pred_fallthru
        _
      %p182 = scmp.lt.s32.totalorder %s12, 2
      // Predicated region
      $region21: #{transformer_decoder_layer.13} parent=5 // pred_check
        %p183 = pneg %p182
      $region22: #{transformer_decoder_layer.13} parent=5 // pred_check_branch
        %185 = sbr.rel (%p183) target = $region24
      $region23: #{transformer_decoder_layer.13} parent=5 // pred_region
        // Predicated region
        $region25: #{transformer_decoder_layer.13} parent=23 // pred_check
          %p186 = pneg %p109
        $region26: #{transformer_decoder_layer.13} parent=23 // pred_check_branch
          %188 = sbr.rel (%p186) target = $region28
        $region27: #{transformer_decoder_layer.13} parent=23 // pred_region
          %s189 = sand.u32 %s99, 1
          %s190 = scalar_lea.sflag [#allocation3], %s189
          %s191 = sand.u32 %s99, 1
          %s192 = smul.addr %s191, 64
          %s193 = scalar_lea.vmem [#allocation2], %s192
          %s194 = smul.u32 16, %s21
          %s196 = ssub.s32 1024, 1024
          %197 = vsyncadd %s190, %s196
          %s198 = smul.addr %s194, 2
          %s199 = sadd.s32 %s20, %s198
          %s200 = smul.addr %s199, 64
          %s201 = scalar_lea.hbm %s2, %s200
          %s202 = sshll.u32 %s193, 4
          %s203 = int_to_ptr.vmem [resolvable:$true] %s202
          %208 = dma.hbm_to_vmem [thread:$0]  %s201, 1024, %s203, %s190, 128, 64, 4
        $region28: #{transformer_decoder_layer.13} parent=23 // pred_fallthru
          _
      $region24: #{transformer_decoder_layer.13} parent=5 // pred_fallthru
        _
      %p209 = scmp.le.s32.totalorder 1, %s12
      %p210 = scmp.lt.s32.totalorder %s12, 3
      %p211 = pnand %p209, %p210
      %p212 = pneg %p211
      // Predicated region
      $region29: #{transformer_decoder_layer.13} parent=5 // pred_check
        _
      $region30: #{transformer_decoder_layer.13} parent=5 // pred_check_branch
        %214 = sbr.rel (%p211) target = $region32
      $region31: #{transformer_decoder_layer.13} parent=5 // pred_region
        %s215 = ssub.s32 %s12, 1
        %s216 = sand.u32 %s102, 1
        %s217 = scalar_lea.sflag [#allocation3], %s216
        %s218 = sand.u32 %s102, 1
        %s219 = smul.addr %s218, 64
        %s220 = scalar_lea.vmem [#allocation2], %s219
        // Predicated region
        $region33: #{transformer_decoder_layer.13} parent=31 // pred_check
          %p221 = pneg %p115
        $region34: #{transformer_decoder_layer.13} parent=31 // pred_check_branch
          %223 = sbr.rel (%p221) target = $region36
        $region35: #{transformer_decoder_layer.13} parent=31 // pred_region
          %224 = dma.done %s217, 1024
        $region36: #{transformer_decoder_layer.13} parent=31 // pred_fallthru
          _
        %s225 = smul.u32 2, %s22
        %p226 = scmp.lt.s32.totalorder %s225, 1
        %s227 = scalar_select %p226, %s225, 1
        %p228 = scmp.lt.s32.totalorder %s24, 0
        %s229 = scalar_select %p228, %s24, 0
        %s230 = sadd.s32 %s229, %s227
        %s231 = smul.addr %s230, 8
        %s232 = scalar_lea.vmem %s0, %s231
        %p233 = pneg %p59
        %p234 = pneg %p56
        %s235 = smul.u32 2, %s22
        %p236 = scmp.lt.s32.totalorder %s235, 1
        %s237 = scalar_select %p236, %s235, 1
        %p238 = scmp.lt.s32.totalorder %s24, 0
        %s239 = scalar_select %p238, %s24, 0
        %s240 = sadd.s32 %s239, %s237
        %s241 = smul.addr %s240, 8
        %s242 = scalar_lea.vmem %s1, %s241
        %p243 = pneg %p87
        %p244 = pneg %p84
        %s245 = sand.u32 %s102, 1
        %s246 = scalar_lea.sflag [#allocation3], %s245
        %s247 = sand.u32 %s102, 1
        %s248 = smul.addr %s247, 64
        %s249 = scalar_lea.vmem [#allocation2], %s248
        %p250 = pneg %p115
        %p251 = pneg %p112
        %p252 = pneg %p143
        %p253 = pneg %p140
        %s254 = sand.u32 %s130, 1
        %s255 = sand.u32 %s130, 1
        %s256 = smul.addr %s255, 16
        %s257 = scalar_lea.vmem [#allocation4], %s256
        %s258 = smul.u32 2, %s22
        %p259 = scmp.lt.s32.totalorder %s258, 1
        %s260 = scalar_select %p259, %s258, 1
        %p261 = scmp.lt.s32.totalorder %s24, 0
        %s262 = scalar_select %p261, %s24, 0
        %s263 = sadd.s32 %s262, %s260
        %s264 = smul.addr %s263, 8
        %s265 = scalar_lea.vmem %s0, %s264
        %s266 = smul.u32 2, %s22
        %s267 = smul.u32 2, %s22
        %p268 = scmp.lt.s32.totalorder %s267, 1
        %s269 = scalar_select %p268, %s267, 1
        %p270 = scmp.lt.s32.totalorder %s24, 0
        %s271 = scalar_select %p270, %s24, 0
        %s272 = sadd.s32 %s271, %s269
        %s273 = smul.addr %s272, 8
        %s274 = scalar_lea.vmem %s1, %s273
        %s275 = smul.u32 2, %s22
        %s276 = smul.u32 16, %s24
        %s277 = smul.u32 2, %s22
        %v279 = vld [vmem:[%s265] sm:$0xff]
        %v280 = vld [vmem:[%s265 + $0x8] sm:$0xff]
        %v281 = vld [vmem:[%s274] sm:$0xff]
        %v282 = vld [vmem:[%s274 + $0x8] sm:$0xff]
        %s283 = smul.u32 %s23, 128
        %p284 = scmp.lt.s32.totalorder %s283, 128
        %s285 = scalar_select %p284, 1, 0
        %s286 = scvt.s32.f32 %s285
        %v287 = vstv %s286
        %v288 = vmul.f32 %v281, %v287
        %v289 = vmul.f32 %v282, %v287
        %v290 = vadd.f32 %v279, %v288
        %v291 = vadd.f32 %v280, %v289
        %v292 = vpack.c.bf16 %v291, %v290
        %v293 = vld [vmem:[%s220] sm:$0xf]
        %v294 = vld [vmem:[%s220 + $0x4] sm:$0xf]
        %v295 = vld [vmem:[%s220 + $0x8] sm:$0xf]
        %v296 = vld [vmem:[%s220 + $0xc] sm:$0xf]
        %v297 = vld [vmem:[%s220 + $0x10] sm:$0xf]
        %v298 = vld [vmem:[%s220 + $0x14] sm:$0xf]
        %v299 = vld [vmem:[%s220 + $0x18] sm:$0xf]
        %v300 = vld [vmem:[%s220 + $0x1c] sm:$0xf]
        %v301 = vld [vmem:[%s220 + $0x20] sm:$0xf]
        %v302 = vld [vmem:[%s220 + $0x24] sm:$0xf]
        %v303 = vld [vmem:[%s220 + $0x28] sm:$0xf]
        %v304 = vld [vmem:[%s220 + $0x2c] sm:$0xf]
        %v305 = vld [vmem:[%s220 + $0x30] sm:$0xf]
        %v306 = vld [vmem:[%s220 + $0x34] sm:$0xf]
        %v307 = vld [vmem:[%s220 + $0x38] sm:$0xf]
        %v308 = vld [vmem:[%s220 + $0x3c] sm:$0xf]
        %v325 = vunpack.c.l.b16 %v293
        %v326 = vunpack.c.l.b16 %v294
        %v327 = vunpack.c.l.b16 %v295
        %v328 = vunpack.c.l.b16 %v296
        %v329 = vunpack.c.l.b16 %v297
        %v330 = vunpack.c.l.b16 %v298
        %v331 = vunpack.c.l.b16 %v299
        %v332 = vunpack.c.l.b16 %v300
        %v333 = vunpack.c.l.b16 %v301
        %v334 = vunpack.c.l.b16 %v302
        %v335 = vunpack.c.l.b16 %v303
        %v336 = vunpack.c.l.b16 %v304
        %v337 = vunpack.c.l.b16 %v305
        %v338 = vunpack.c.l.b16 %v306
        %v339 = vunpack.c.l.b16 %v307
        %v340 = vunpack.c.l.b16 %v308
        %v341 = vpack.c.b16 %v326, %v325
        %v342 = vpack.c.b16 %v328, %v327
        %v343 = vpack.c.b16 %v330, %v329
        %v344 = vpack.c.b16 %v332, %v331
        %v345 = vpack.c.b16 %v334, %v333
        %v346 = vpack.c.b16 %v336, %v335
        %v347 = vpack.c.b16 %v338, %v337
        %v348 = vpack.c.b16 %v340, %v339
        %357 = vmatprep.subr.bf16.mxu0 0
        %358 = vmatpush1.bf16.msra.mxu0 %v348
        %359 = vmatprep.subr.bf16.mxu0 0
        %360 = vmatpush1.bf16.msra.mxu0 %v347
        %361 = vmatprep.subr.bf16.mxu0 0
        %362 = vmatpush1.bf16.msra.mxu0 %v346
        %363 = vmatprep.subr.bf16.mxu0 0
        %364 = vmatpush1.bf16.msra.mxu0 %v345
        %365 = vmatprep.subr.bf16.mxu0 0
        %366 = vmatpush1.bf16.msra.mxu0 %v344
        %367 = vmatprep.subr.bf16.mxu0 0
        %368 = vmatpush1.bf16.msra.mxu0 %v343
        %369 = vmatprep.subr.bf16.mxu0 0
        %370 = vmatpush1.bf16.msra.mxu0 %v342
        %371 = vmatprep.subr.bf16.mxu0 0
        %372 = vmatpush1.bf16.msra.mxu0 %v341
        %373 = vmatprep.subr.bf16.mxu0 0
        %374 = vmatpush2.bf16.msra.mxu0 0
        %375 = vmatprep.subr.bf16.mxu0 0
        %376 = vmatpush2.bf16.msra.mxu0 0
        %377 = vmatprep.subr.bf16.mxu0 0
        %378 = vmatpush2.bf16.msra.mxu0 0
        %379 = vmatprep.subr.bf16.mxu0 0
        %380 = vmatpush2.bf16.msra.mxu0 0
        %381 = vmatprep.subr.bf16.mxu0 0
        %382 = vmatpush2.bf16.msra.mxu0 0
        %383 = vmatprep.subr.bf16.mxu0 0
        %384 = vmatpush2.bf16.msra.mxu0 0
        %385 = vmatprep.subr.bf16.mxu0 0
        %386 = vmatpush2.bf16.msra.mxu0 0
        %387 = vmatprep.subr.bf16.mxu0 0
        %388 = vmatpush2.bf16.msra.mxu0 0
        %389 = vmatprep.mubr.bf16.mxu0 0
        %390 = vmatmul.mubr.bf16.gmra.mxu0 %v292
        %v391 = vpop.f32.mrf.mxu0
        %v392 = vadd.f32 0.0, %v391
        %v393 = vpop.f32.mrf.mxu0
        %v394 = vpop.f32.mrf.mxu0
        %v395 = vadd.f32 0.0, %v394
        %v396 = vpop.f32.mrf.mxu0
        %397 = vdwg.mxu0
        %398 = vst [vmem:[%s257] sm:$0xff] %v392
        %399 = vst [vmem:[%s257 + $0x8] sm:$0xff] %v395
        %s400 = sand.u32 %s130, 1
        %s401 = sand.u32 %s130, 1
        %s402 = smul.addr %s401, 16
        %s403 = scalar_lea.vmem [#allocation4], %s402
        // Predicated region
        $region37: #{transformer_decoder_layer.13} parent=31 // pred_check
          %p404 = pneg %p140
        $region38: #{transformer_decoder_layer.13} parent=31 // pred_check_branch
          %406 = sbr.rel (%p404) target = $region40
        $region39: #{transformer_decoder_layer.13} parent=31 // pred_region
          %s407 = smul.u32 2, %s22
          %s408 = smul.addr %s407, 2
          %s409 = sadd.s32 %s23, %s408
          %s410 = smul.addr %s409, 8
          %s411 = scalar_lea.vmem %s3, %s410
          // Predicated region
          $region41: #{transformer_decoder_layer.13} parent=39 // pred_check
            _
          $region42: #{transformer_decoder_layer.13} parent=39 // pred_check_branch
            %413 = sbr.rel (0) target = $region44
          $region43: #{transformer_decoder_layer.13} parent=39 // pred_region
            // Predicated region
            $region45: #{transformer_decoder_layer.13} parent=43 // pred_check
              _
            $region46: #{transformer_decoder_layer.13} parent=43 // pred_check_branch
              %415 = sbr.rel (0) target = $region48
            $region47: #{transformer_decoder_layer.13} parent=43 // pred_region
              // Predicated region
              $region60: #{transformer_decoder_layer.13} parent=47 // pred_check
                _
              $region61: #{transformer_decoder_layer.13} parent=47 // pred_check_branch
                %433 = sbr.rel (0) target = $region63
              $region62: #{transformer_decoder_layer.13} parent=47 // pred_region
                loop: start=0, step=1, limit=1
                $region64: #{transformer_decoder_layer.13} parent=62 // loop_pre_header
                  _
                $region65: #{transformer_decoder_layer.13} parent=62 // loop_header
                  %s435 = sphi 0, %s439
                  %p436 = scmp.ge.s32.totalorder %s435, 1
                  %s440 = sphi %s403, %s403
                  %s441 = sphi %s411, %s411
                $region66: #{transformer_decoder_layer.13} parent=62 // loop_header_branch
                  %438 = sbr.rel (%p436) target = $region70
                $region67: #{transformer_decoder_layer.13} parent=62 // loop_body
                  %v442 = vld [vmem:[%s440] sm:$0xff]
                  %443 = vst [vmem:[%s441] sm:$0xff] %v442
                  %v444 = vld [vmem:[%s440 + $0x8] sm:$0xff]
                  %445 = vst [vmem:[%s441 + $0x10] sm:$0xff] %v444
                $region68: #{transformer_decoder_layer.13} parent=62 // loop_footer
                  %s439 = sadd.s32 1, %s435
                $region69: #{transformer_decoder_layer.13} parent=62 // loop_footer_branch
                  %434 = sbr.rel target = $region65
                $region70: #{transformer_decoder_layer.13} parent=62 // loop_exit
                  _
              $region63: #{transformer_decoder_layer.13} parent=47 // pred_fallthru
                _
              // Predicated region
              $region71: #{transformer_decoder_layer.13} parent=47 // pred_check
                _
              $region72: #{transformer_decoder_layer.13} parent=47 // pred_check_branch
                %447 = sbr.rel target = $region74
              $region73: #{transformer_decoder_layer.13} parent=47 // pred_region
                _
              $region74: #{transformer_decoder_layer.13} parent=47 // pred_fallthru
                _
            $region48: #{transformer_decoder_layer.13} parent=43 // pred_fallthru
              _
            // Predicated region
            $region49: #{transformer_decoder_layer.13} parent=43 // pred_check
              _
            $region50: #{transformer_decoder_layer.13} parent=43 // pred_check_branch
              %417 = sbr.rel target = $region52
            $region51: #{transformer_decoder_layer.13} parent=43 // pred_region
              %s419 = ssub.s32 256, 1
              loop: start=0, step=1, limit=1
              $region53: #{transformer_decoder_layer.13} parent=51 // loop_pre_header
                _
              $region54: #{transformer_decoder_layer.13} parent=51 // loop_header
                %s421 = sphi 0, %s425
                %p422 = scmp.ge.s32.totalorder %s421, 1
                %s426 = sphi %s403, %s403
                %s427 = sphi %s411, %s411
              $region55: #{transformer_decoder_layer.13} parent=51 // loop_header_branch
                %424 = sbr.rel (%p422) target = $region59
              $region56: #{transformer_decoder_layer.13} parent=51 // loop_body
                %v428 = vld [vmem:[%s426] sm:%s419]
                %429 = vst [vmem:[%s427] sm:%s419] %v428
                %v430 = vld [vmem:[%s426 + $0x8] sm:%s419]
                %431 = vst [vmem:[%s427 + $0x10] sm:%s419] %v430
              $region57: #{transformer_decoder_layer.13} parent=51 // loop_footer
                %s425 = sadd.s32 1, %s421
              $region58: #{transformer_decoder_layer.13} parent=51 // loop_footer_branch
                %420 = sbr.rel target = $region54
              $region59: #{transformer_decoder_layer.13} parent=51 // loop_exit
                _
            $region52: #{transformer_decoder_layer.13} parent=43 // pred_fallthru
              _
          $region44: #{transformer_decoder_layer.13} parent=39 // pred_fallthru
            _
          %448 = vnop
        $region40: #{transformer_decoder_layer.13} parent=31 // pred_fallthru
          _
      $region32: #{transformer_decoder_layer.13} parent=5 // pred_fallthru
        _
      %p449 = scmp.le.s32.totalorder 2, %s12
      // Predicated region
      $region75: #{transformer_decoder_layer.13} parent=5 // pred_check
        %p450 = pneg %p449
      $region76: #{transformer_decoder_layer.13} parent=5 // pred_check_branch
        %452 = sbr.rel (%p450) target = $region78
      $region77: #{transformer_decoder_layer.13} parent=5 // pred_region
        %s453 = ssub.s32 %s12, 2
        // Predicated region
        $region79: #{transformer_decoder_layer.13} parent=77 // pred_check
          %p454 = pneg %p146
        $region80: #{transformer_decoder_layer.13} parent=77 // pred_check_branch
          %456 = sbr.rel (%p454) target = $region82
        $region81: #{transformer_decoder_layer.13} parent=77 // pred_region
          %s457 = sand.u32 %s131, 1
          %s458 = sand.u32 %s131, 1
          %s459 = smul.addr %s458, 16
          %s460 = scalar_lea.vmem [#allocation4], %s459
        $region82: #{transformer_decoder_layer.13} parent=77 // pred_fallthru
          _
      $region78: #{transformer_decoder_layer.13} parent=5 // pred_fallthru
        _
    $region6: #{transformer_decoder_layer.13} parent=1 // loop_footer
      %s16 = sadd.s32 1, %s12
    $region7: #{transformer_decoder_layer.13} parent=1 // loop_footer_branch
      %11 = sbr.rel target = $region3
    $region8: #{transformer_decoder_layer.13} parent=1 // loop_exit
      _
    %461 = vsyncpa [#allocation3], 1
    %s462 = scalar_lea.sflag [#allocation3], 1
    %463 = vsyncpa %s462, 1

// kernel: transformer_decoder_layer.9
$region0: #{transformer_decoder_layer.9}
  #allocation0 [shape = 'u32[]', space=smem, size = 0x4, offset = 0x4, fixed_abs, tag = 'smem constant byte address 0x4 - core index']
  #allocation1 [shape = 'u32[144,128]{1,0:T(1,128)}', space=vmem, size = 0x12000, scoped, tag = 'internal scratch']
  %s0 = inlined_call_operand.vmem [shape: f32[16,128], index: 0, kind: input, shape index: {}]
  %s1 = inlined_call_operand.vmem [shape: f32[16,128], index: 1, kind: input, shape index: {}]
  %s2 = inlined_call_operand.vmem [shape: f32[1,128], index: 2, kind: input, shape index: {}]
  %s3 = inlined_call_operand.vmem [shape: f32[1,128], index: 3, kind: input, shape index: {}]
  %s4 = inlined_call_operand.vmem [shape: bf16[128,384], index: 4, kind: input, shape index: {}]
  %s5 = inlined_call_operand.vmem [shape: f32[16,384], index: 5, kind: output, shape index: {}]
  %s6 = sld [smem:[#allocation0]]
  $region128: #{transformer_decoder_layer.9} parent=0
    _
  %s8 = ssub.s32 1, %s6
  %s9 = scalar_select 0, %s8, %s6
  $region1: #{transformer_decoder_layer.9} parent=0
    #allocation2 [shape = 'u8[65536]{0}', space=vmem, size = 0x10000, scoped, tag = 'input window, operand 4']
    #allocation3 [shape = 'u8[16384]{0}', space=vmem, size = 0x4000, scoped, tag = 'output window, operand 0']
    loop: start=0, step=1, limit=5
    $region2: #{transformer_decoder_layer.9} parent=1 // loop_pre_header
      _
    $region3: #{transformer_decoder_layer.9} parent=1 // loop_header
      %s11 = sphi 0, %s15
      %p12 = scmp.ge.s32.totalorder %s11, 5
      %s18 = sphi 0, %s37
      %s19 = sphi 0, %s33
      %s20 = sphi 0, %s29
      %s21 = sphi 0, %s18
      %s22 = sphi 0, %s19
      %s23 = sphi 0, %s20
      %s24 = sphi 0, %s21
      %s25 = sphi 0, %s22
      %s26 = sphi 0, %s23
      %s42 = sphi 0, %s44
      %s45 = sphi 0, %s42
      %s46 = sphi 0, %s45
      %s62 = sphi 0, %s46
      %s70 = sphi 0, %s72
      %s73 = sphi 0, %s70
      %s74 = sphi 0, %s73
      %s90 = sphi 0, %s74
      %s96 = sphi 0, %s98
      %s99 = sphi 0, %s96
      %s100 = sphi 0, %s99
      %s116 = sphi 0, %s100
      %s122 = sphi 0, %s124
      %s125 = sphi 0, %s122
      %s126 = sphi 0, %s125
      %s142 = sphi 0, %s126
      %s150 = sphi 0, %s152
      %s153 = sphi 0, %s150
      %s154 = sphi 0, %s153
      %s170 = sphi 0, %s154
      %s178 = sphi 0, %s180
      %s181 = sphi 0, %s178
      %s182 = sphi 0, %s181
      %s198 = sphi 0, %s182
    $region4: #{transformer_decoder_layer.9} parent=1 // loop_header_branch
      %14 = sbr.rel (%p12) target = $region8
    $region5: #{transformer_decoder_layer.9} parent=1 // loop_body
      %s16 = ssub.s32 %s11, 1
      %s17 = ssub.s32 %s11, 2
      %s27 = sadd.s32 1, %s20
      %p28 = scmp.ge.s32.totalorder %s27, 1
      %s29 = scalar_select %p28, 0, %s27
      %s30 = sadd.s32 1, %s19
      %s31 = scalar_select %p28, %s30, %s19
      %p32 = scmp.ge.s32.totalorder %s31, 3
      %s33 = scalar_select %p32, 0, %s31
      %s34 = sadd.s32 1, %s18
      %s35 = scalar_select %p32, %s34, %s18
      %p36 = scmp.ge.s32.totalorder %s35, 1
      %s37 = scalar_select %p36, 0, %s35
      %s38 = ssub.s32 %s18, %s37
      %s39 = ssub.s32 %s20, %s29
      %s40 = sor.u32 %s38, %s39
      %p41 = scmp.eq.s32.totalorder %s40, 0
      %s43 = sadd.s32 %s42, 1
      %s44 = scalar_select %p41, %s42, %s43
      %p47 = pneg %p41
      %p48 = scmp.eq.s32.totalorder %s11, 2
      %p49 = por %p47, %p48
      %p50 = scmp.ne.s32.totalorder %s42, %s45
      %p51 = scmp.eq.s32.totalorder %s11, 0
      %p52 = por %p50, %p51
      %p53 = scmp.ne.s32.totalorder %s42, %s45
      %p54 = scmp.eq.s32.totalorder %s16, 2
      %p55 = por %p53, %p54
      %p56 = scmp.ne.s32.totalorder %s45, %s46
      %p57 = scmp.eq.s32.totalorder %s16, 0
      %p58 = por %p56, %p57
      %p59 = scmp.ne.s32.totalorder %s45, %s46
      %p60 = scmp.eq.s32.totalorder %s17, 2
      %p61 = por %p59, %p60
      %p63 = scmp.ne.s32.totalorder %s46, %s62
      %p64 = scmp.eq.s32.totalorder %s17, 0
      %p65 = por %p63, %p64
      %s66 = ssub.s32 %s18, %s37
      %s67 = ssub.s32 %s20, %s29
      %s68 = sor.u32 %s66, %s67
      %p69 = scmp.eq.s32.totalorder %s68, 0
      %s71 = sadd.s32 %s70, 1
      %s72 = scalar_select %p69, %s70, %s71
      %p75 = pneg %p69
      %p76 = scmp.eq.s32.totalorder %s11, 2
      %p77 = por %p75, %p76
      %p78 = scmp.ne.s32.totalorder %s70, %s73
      %p79 = scmp.eq.s32.totalorder %s11, 0
      %p80 = por %p78, %p79
      %p81 = scmp.ne.s32.totalorder %s70, %s73
      %p82 = scmp.eq.s32.totalorder %s16, 2
      %p83 = por %p81, %p82
      %p84 = scmp.ne.s32.totalorder %s73, %s74
      %p85 = scmp.eq.s32.totalorder %s16, 0
      %p86 = por %p84, %p85
      %p87 = scmp.ne.s32.totalorder %s73, %s74
      %p88 = scmp.eq.s32.totalorder %s17, 2
      %p89 = por %p87, %p88
      %p91 = scmp.ne.s32.totalorder %s74, %s90
      %p92 = scmp.eq.s32.totalorder %s17, 0
      %p93 = por %p91, %p92
      %s94 = ssub.s32 %s20, %s29
      %p95 = scmp.eq.s32.totalorder %s94, 0
      %s97 = sadd.s32 %s96, 1
      %s98 = scalar_select %p95, %s96, %s97
      %p101 = pneg %p95
      %p102 = scmp.eq.s32.totalorder %s11, 2
      %p103 = por %p101, %p102
      %p104 = scmp.ne.s32.totalorder %s96, %s99
      %p105 = scmp.eq.s32.totalorder %s11, 0
      %p106 = por %p104, %p105
      %p107 = scmp.ne.s32.totalorder %s96, %s99
      %p108 = scmp.eq.s32.totalorder %s16, 2
      %p109 = por %p107, %p108
      %p110 = scmp.ne.s32.totalorder %s99, %s100
      %p111 = scmp.eq.s32.totalorder %s16, 0
      %p112 = por %p110, %p111
      %p113 = scmp.ne.s32.totalorder %s99, %s100
      %p114 = scmp.eq.s32.totalorder %s17, 2
      %p115 = por %p113, %p114
      %p117 = scmp.ne.s32.totalorder %s100, %s116
      %p118 = scmp.eq.s32.totalorder %s17, 0
      %p119 = por %p117, %p118
      %s120 = ssub.s32 %s20, %s29
      %p121 = scmp.eq.s32.totalorder %s120, 0
      %s123 = sadd.s32 %s122, 1
      %s124 = scalar_select %p121, %s122, %s123
      %p127 = pneg %p121
      %p128 = scmp.eq.s32.totalorder %s11, 2
      %p129 = por %p127, %p128
      %p130 = scmp.ne.s32.totalorder %s122, %s125
      %p131 = scmp.eq.s32.totalorder %s11, 0
      %p132 = por %p130, %p131
      %p133 = scmp.ne.s32.totalorder %s122, %s125
      %p134 = scmp.eq.s32.totalorder %s16, 2
      %p135 = por %p133, %p134
      %p136 = scmp.ne.s32.totalorder %s125, %s126
      %p137 = scmp.eq.s32.totalorder %s16, 0
      %p138 = por %p136, %p137
      %p139 = scmp.ne.s32.totalorder %s125, %s126
      %p140 = scmp.eq.s32.totalorder %s17, 2
      %p141 = por %p139, %p140
      %p143 = scmp.ne.s32.totalorder %s126, %s142
      %p144 = scmp.eq.s32.totalorder %s17, 0
      %p145 = por %p143, %p144
      %s146 = ssub.s32 %s20, %s29
      %s147 = ssub.s32 %s19, %s33
      %s148 = sor.u32 %s146, %s147
      %p149 = scmp.eq.s32.totalorder %s148, 0
      %s151 = sadd.s32 %s150, 1
      %s152 = scalar_select %p149, %s150, %s151
      %p155 = pneg %p149
      %p156 = scmp.eq.s32.totalorder %s11, 2
      %p157 = por %p155, %p156
      %p158 = scmp.ne.s32.totalorder %s150, %s153
      %p159 = scmp.eq.s32.totalorder %s11, 0
      %p160 = por %p158, %p159
      %p161 = scmp.ne.s32.totalorder %s150, %s153
      %p162 = scmp.eq.s32.totalorder %s16, 2
      %p163 = por %p161, %p162
      %p164 = scmp.ne.s32.totalorder %s153, %s154
      %p165 = scmp.eq.s32.totalorder %s16, 0
      %p166 = por %p164, %p165
      %p167 = scmp.ne.s32.totalorder %s153, %s154
      %p168 = scmp.eq.s32.totalorder %s17, 2
      %p169 = por %p167, %p168
      %p171 = scmp.ne.s32.totalorder %s154, %s170
      %p172 = scmp.eq.s32.totalorder %s17, 0
      %p173 = por %p171, %p172
      %s174 = ssub.s32 %s18, %s37
      %s175 = ssub.s32 %s19, %s33
      %s176 = sor.u32 %s174, %s175
      %p177 = scmp.eq.s32.totalorder %s176, 0
      %s179 = sadd.s32 %s178, 1
      %s180 = scalar_select %p177, %s178, %s179
      %p183 = pneg %p177
      %p184 = scmp.eq.s32.totalorder %s11, 2
      %p185 = por %p183, %p184
      %p186 = scmp.ne.s32.totalorder %s178, %s181
      %p187 = scmp.eq.s32.totalorder %s11, 0
      %p188 = por %p186, %p187
      %p189 = scmp.ne.s32.totalorder %s178, %s181
      %p190 = scmp.eq.s32.totalorder %s16, 2
      %p191 = por %p189, %p190
      %p192 = scmp.ne.s32.totalorder %s181, %s182
      %p193 = scmp.eq.s32.totalorder %s16, 0
      %p194 = por %p192, %p193
      %p195 = scmp.ne.s32.totalorder %s181, %s182
      %p196 = scmp.eq.s32.totalorder %s17, 2
      %p197 = por %p195, %p196
      %p199 = scmp.ne.s32.totalorder %s182, %s198
      %p200 = scmp.eq.s32.totalorder %s17, 0
      %p201 = por %p199, %p200
      %p202 = scmp.le.s32.totalorder 1, %s11
      %p203 = scmp.lt.s32.totalorder %s11, 4
      %p204 = pnand %p202, %p203
      %p205 = pneg %p204
      // Predicated region
      $region9: #{transformer_decoder_layer.9} parent=5 // pred_check
        _
      $region10: #{transformer_decoder_layer.9} parent=5 // pred_check_branch
        %207 = sbr.rel (%p204) target = $region12
      $region11: #{transformer_decoder_layer.9} parent=5 // pred_region
        %s208 = ssub.s32 %s11, 1
        // Predicated region
        $region13: #{transformer_decoder_layer.9} parent=11 // pred_check
          %p209 = pneg %p58
        $region14: #{transformer_decoder_layer.9} parent=11 // pred_check_branch
          %211 = sbr.rel (%p209) target = $region16
        $region15: #{transformer_decoder_layer.9} parent=11 // pred_region
          %s212 = smul.u32 2, %s21
          %p213 = scmp.lt.s32.totalorder %s212, 1
          %s214 = scalar_select %p213, %s212, 1
          %p215 = scmp.lt.s32.totalorder %s23, 0
          %s216 = scalar_select %p215, %s23, 0
          %s217 = sadd.s32 %s216, %s214
          %s218 = smul.addr %s217, 8
          %s219 = scalar_lea.vmem %s0, %s218
          %s220 = smul.u32 2, %s21
        $region16: #{transformer_decoder_layer.9} parent=11 // pred_fallthru
          _
        // Predicated region
        $region17: #{transformer_decoder_layer.9} parent=11 // pred_check
          %p221 = pneg %p86
        $region18: #{transformer_decoder_layer.9} parent=11 // pred_check_branch
          %223 = sbr.rel (%p221) target = $region20
        $region19: #{transformer_decoder_layer.9} parent=11 // pred_region
          %s224 = smul.u32 2, %s21
          %p225 = scmp.lt.s32.totalorder %s224, 1
          %s226 = scalar_select %p225, %s224, 1
          %p227 = scmp.lt.s32.totalorder %s23, 0
          %s228 = scalar_select %p227, %s23, 0
          %s229 = sadd.s32 %s228, %s226
          %s230 = smul.addr %s229, 8
          %s231 = scalar_lea.vmem %s1, %s230
          %s232 = smul.u32 2, %s21
        $region20: #{transformer_decoder_layer.9} parent=11 // pred_fallthru
          _
        // Predicated region
        $region21: #{transformer_decoder_layer.9} parent=11 // pred_check
          %p233 = pneg %p112
        $region22: #{transformer_decoder_layer.9} parent=11 // pred_check_branch
          %235 = sbr.rel (%p233) target = $region24
        $region23: #{transformer_decoder_layer.9} parent=11 // pred_region
          %p236 = scmp.lt.s32.totalorder %s23, 0
          %s237 = scalar_select %p236, %s23, 0
          %s238 = scalar_lea.vmem %s2, %s237
        $region24: #{transformer_decoder_layer.9} parent=11 // pred_fallthru
          _
        // Predicated region
        $region25: #{transformer_decoder_layer.9} parent=11 // pred_check
          %p239 = pneg %p138
        $region26: #{transformer_decoder_layer.9} parent=11 // pred_check_branch
          %241 = sbr.rel (%p239) target = $region28
        $region27: #{transformer_decoder_layer.9} parent=11 // pred_region
          %p242 = scmp.lt.s32.totalorder %s23, 0
          %s243 = scalar_select %p242, %s23, 0
          %s244 = scalar_lea.vmem %s3, %s243
        $region28: #{transformer_decoder_layer.9} parent=11 // pred_fallthru
          _
      $region12: #{transformer_decoder_layer.9} parent=5 // pred_fallthru
        _
      %p245 = scmp.lt.s32.totalorder %s11, 3
      // Predicated region
      $region29: #{transformer_decoder_layer.9} parent=5 // pred_check
        %p246 = pneg %p245
      $region30: #{transformer_decoder_layer.9} parent=5 // pred_check_branch
        %248 = sbr.rel (%p246) target = $region32
      $region31: #{transformer_decoder_layer.9} parent=5 // pred_region
        // Predicated region
        $region33: #{transformer_decoder_layer.9} parent=31 // pred_check
          %p249 = pneg %p160
        $region34: #{transformer_decoder_layer.9} parent=31 // pred_check_branch
          %251 = sbr.rel (%p249) target = $region36
        $region35: #{transformer_decoder_layer.9} parent=31 // pred_region
          %s252 = sand.u32 %s150, 1
          %s253 = sand.u32 %s150, 1
          %s254 = smul.addr %s253, 64
          %s255 = scalar_lea.vmem [#allocation2], %s254
          %s256 = smul.u32 16, %s20
          %s257 = smul.addr %s256, 3
          %s258 = sadd.s32 %s19, %s257
          %s259 = smul.addr %s258, 4
          %s260 = scalar_lea.vmem %s4, %s259
          // Predicated region
          $region37: #{transformer_decoder_layer.9} parent=35 // pred_check
            _
          $region38: #{transformer_decoder_layer.9} parent=35 // pred_check_branch
            %262 = sbr.rel (0) target = $region40
          $region39: #{transformer_decoder_layer.9} parent=35 // pred_region
            // Predicated region
            $region41: #{transformer_decoder_layer.9} parent=39 // pred_check
              _
            $region42: #{transformer_decoder_layer.9} parent=39 // pred_check_branch
              %264 = sbr.rel target = $region44
            $region43: #{transformer_decoder_layer.9} parent=39 // pred_region
              // Predicated region
              $region56: #{transformer_decoder_layer.9} parent=43 // pred_check
                _
              $region57: #{transformer_decoder_layer.9} parent=43 // pred_check_branch
                %310 = sbr.rel (0) target = $region59
              $region58: #{transformer_decoder_layer.9} parent=43 // pred_region
                loop: start=0, step=1, limit=1
                $region60: #{transformer_decoder_layer.9} parent=58 // loop_pre_header
                  _
                $region61: #{transformer_decoder_layer.9} parent=58 // loop_header
                  %s312 = sphi 0, %s316
                  %p313 = scmp.ge.s32.totalorder %s312, 1
                  %s317 = sphi %s260, %s260
                  %s318 = sphi %s255, %s255
                $region62: #{transformer_decoder_layer.9} parent=58 // loop_header_branch
                  %315 = sbr.rel (%p313) target = $region66
                $region63: #{transformer_decoder_layer.9} parent=58 // loop_body
                  _
                $region64: #{transformer_decoder_layer.9} parent=58 // loop_footer
                  %s316 = sadd.s32 1, %s312
                $region65: #{transformer_decoder_layer.9} parent=58 // loop_footer_branch
                  %311 = sbr.rel target = $region61
                $region66: #{transformer_decoder_layer.9} parent=58 // loop_exit
                  _
                %s320 = ssub.s32 16, 1
                loop: start=0, step=1, limit=1
                $region67: #{transformer_decoder_layer.9} parent=58 // loop_pre_header
                  _
                $region68: #{transformer_decoder_layer.9} parent=58 // loop_header
                  %s322 = sphi 0, %s326
                  %p323 = scmp.ge.s32.totalorder %s322, 1
                  %s327 = sphi %s260, %s260
                  %s328 = sphi %s255, %s255
                $region69: #{transformer_decoder_layer.9} parent=58 // loop_header_branch
                  %325 = sbr.rel (%p323) target = $region73
                $region70: #{transformer_decoder_layer.9} parent=58 // loop_body
                  %v329 = vld [vmem:[%s327] sm:%s320]
                  %330 = vst [vmem:[%s328] sm:%s320] %v329
                  %v331 = vld [vmem:[%s327 + $0xc] sm:%s320]
                  %332 = vst [vmem:[%s328 + $0x4] sm:%s320] %v331
                  %v333 = vld [vmem:[%s327 + $0x18] sm:%s320]
                  %334 = vst [vmem:[%s328 + $0x8] sm:%s320] %v333
                  %v335 = vld [vmem:[%s327 + $0x24] sm:%s320]
                  %336 = vst [vmem:[%s328 + $0xc] sm:%s320] %v335
                  %v337 = vld [vmem:[%s327 + $0x30] sm:%s320]
                  %338 = vst [vmem:[%s328 + $0x10] sm:%s320] %v337
                  %v339 = vld [vmem:[%s327 + $0x3c] sm:%s320]
                  %340 = vst [vmem:[%s328 + $0x14] sm:%s320] %v339
                  %v341 = vld [vmem:[%s327 + $0x48] sm:%s320]
                  %342 = vst [vmem:[%s328 + $0x18] sm:%s320] %v341
                  %v343 = vld [vmem:[%s327 + $0x54] sm:%s320]
                  %344 = vst [vmem:[%s328 + $0x1c] sm:%s320] %v343
                  %v345 = vld [vmem:[%s327 + $0x60] sm:%s320]
                  %346 = vst [vmem:[%s328 + $0x20] sm:%s320] %v345
                  %v347 = vld [vmem:[%s327 + $0x6c] sm:%s320]
                  %348 = vst [vmem:[%s328 + $0x24] sm:%s320] %v347
                  %v349 = vld [vmem:[%s327 + $0x78] sm:%s320]
                  %350 = vst [vmem:[%s328 + $0x28] sm:%s320] %v349
                  %v351 = vld [vmem:[%s327 + $0x84] sm:%s320]
                  %352 = vst [vmem:[%s328 + $0x2c] sm:%s320] %v351
                  %v353 = vld [vmem:[%s327 + $0x90] sm:%s320]
                  %354 = vst [vmem:[%s328 + $0x30] sm:%s320] %v353
                  %v355 = vld [vmem:[%s327 + $0x9c] sm:%s320]
                  %356 = vst [vmem:[%s328 + $0x34] sm:%s320] %v355
                  %v357 = vld [vmem:[%s327 + $0xa8] sm:%s320]
                  %358 = vst [vmem:[%s328 + $0x38] sm:%s320] %v357
                  %v359 = vld [vmem:[%s327 + $0xb4] sm:%s320]
                  %360 = vst [vmem:[%s328 + $0x3c] sm:%s320] %v359
                $region71: #{transformer_decoder_layer.9} parent=58 // loop_footer
                  %s326 = sadd.s32 1, %s322
                $region72: #{transformer_decoder_layer.9} parent=58 // loop_footer_branch
                  %321 = sbr.rel target = $region68
                $region73: #{transformer_decoder_layer.9} parent=58 // loop_exit
                  _
              $region59: #{transformer_decoder_layer.9} parent=43 // pred_fallthru
                _
            $region44: #{transformer_decoder_layer.9} parent=39 // pred_fallthru
              _
            // Predicated region
            $region45: #{transformer_decoder_layer.9} parent=39 // pred_check
              _
            $region46: #{transformer_decoder_layer.9} parent=39 // pred_check_branch
              %266 = sbr.rel (0) target = $region48
            $region47: #{transformer_decoder_layer.9} parent=39 // pred_region
              %s268 = ssub.s32 16, 1
              loop: start=0, step=1, limit=1
              $region49: #{transformer_decoder_layer.9} parent=47 // loop_pre_header
                _
              $region50: #{transformer_decoder_layer.9} parent=47 // loop_header
                %s270 = sphi 0, %s274
                %p271 = scmp.ge.s32.totalorder %s270, 1
                %s275 = sphi %s260, %s260
                %s276 = sphi %s255, %s255
              $region51: #{transformer_decoder_layer.9} parent=47 // loop_header_branch
                %273 = sbr.rel (%p271) target = $region55
              $region52: #{transformer_decoder_layer.9} parent=47 // loop_body
                %v277 = vld [vmem:[%s275] sm:%s268]
                %278 = vst [vmem:[%s276] sm:%s268] %v277
                %v279 = vld [vmem:[%s275 + $0xc] sm:%s268]
                %280 = vst [vmem:[%s276 + $0x4] sm:%s268] %v279
                %v281 = vld [vmem:[%s275 + $0x18] sm:%s268]
                %282 = vst [vmem:[%s276 + $0x8] sm:%s268] %v281
                %v283 = vld [vmem:[%s275 + $0x24] sm:%s268]
                %284 = vst [vmem:[%s276 + $0xc] sm:%s268] %v283
                %v285 = vld [vmem:[%s275 + $0x30] sm:%s268]
                %286 = vst [vmem:[%s276 + $0x10] sm:%s268] %v285
                %v287 = vld [vmem:[%s275 + $0x3c] sm:%s268]
                %288 = vst [vmem:[%s276 + $0x14] sm:%s268] %v287
                %v289 = vld [vmem:[%s275 + $0x48] sm:%s268]
                %290 = vst [vmem:[%s276 + $0x18] sm:%s268] %v289
                %v291 = vld [vmem:[%s275 + $0x54] sm:%s268]
                %292 = vst [vmem:[%s276 + $0x1c] sm:%s268] %v291
                %v293 = vld [vmem:[%s275 + $0x60] sm:%s268]
                %294 = vst [vmem:[%s276 + $0x20] sm:%s268] %v293
                %v295 = vld [vmem:[%s275 + $0x6c] sm:%s268]
                %296 = vst [vmem:[%s276 + $0x24] sm:%s268] %v295
                %v297 = vld [vmem:[%s275 + $0x78] sm:%s268]
                %298 = vst [vmem:[%s276 + $0x28] sm:%s268] %v297
                %v299 = vld [vmem:[%s275 + $0x84] sm:%s268]
                %300 = vst [vmem:[%s276 + $0x2c] sm:%s268] %v299
                %v301 = vld [vmem:[%s275 + $0x90] sm:%s268]
                %302 = vst [vmem:[%s276 + $0x30] sm:%s268] %v301
                %v303 = vld [vmem:[%s275 + $0x9c] sm:%s268]
                %304 = vst [vmem:[%s276 + $0x34] sm:%s268] %v303
                %v305 = vld [vmem:[%s275 + $0xa8] sm:%s268]
                %306 = vst [vmem:[%s276 + $0x38] sm:%s268] %v305
                %v307 = vld [vmem:[%s275 + $0xb4] sm:%s268]
                %308 = vst [vmem:[%s276 + $0x3c] sm:%s268] %v307
              $region53: #{transformer_decoder_layer.9} parent=47 // loop_footer
                %s274 = sadd.s32 1, %s270
              $region54: #{transformer_decoder_layer.9} parent=47 // loop_footer_branch
                %269 = sbr.rel target = $region50
              $region55: #{transformer_decoder_layer.9} parent=47 // loop_exit
                _
            $region48: #{transformer_decoder_layer.9} parent=39 // pred_fallthru
              _
          $region40: #{transformer_decoder_layer.9} parent=35 // pred_fallthru
            _
          %361 = vnop
        $region36: #{transformer_decoder_layer.9} parent=31 // pred_fallthru
          _
      $region32: #{transformer_decoder_layer.9} parent=5 // pred_fallthru
        _
      %p362 = scmp.le.s32.totalorder 1, %s11
      %p363 = scmp.lt.s32.totalorder %s11, 4
      %p364 = pnand %p362, %p363
      %p365 = pneg %p364
      // Predicated region
      $region74: #{transformer_decoder_layer.9} parent=5 // pred_check
        _
      $region75: #{transformer_decoder_layer.9} parent=5 // pred_check_branch
        %367 = sbr.rel (%p364) target = $region77
      $region76: #{transformer_decoder_layer.9} parent=5 // pred_region
        %s368 = ssub.s32 %s11, 1
        %s369 = sand.u32 %s153, 1
        %s370 = sand.u32 %s153, 1
        %s371 = smul.addr %s370, 64
        %s372 = scalar_lea.vmem [#allocation2], %s371
        // Predicated region
        $region78: #{transformer_decoder_layer.9} parent=76 // pred_check
          %p373 = pneg %p166
        $region79: #{transformer_decoder_layer.9} parent=76 // pred_check_branch
          %375 = sbr.rel (%p373) target = $region81
        $region80: #{transformer_decoder_layer.9} parent=76 // pred_region
          _
        $region81: #{transformer_decoder_layer.9} parent=76 // pred_fallthru
          _
        %s376 = smul.u32 2, %s21
        %p377 = scmp.lt.s32.totalorder %s376, 1
        %s378 = scalar_select %p377, %s376, 1
        %p379 = scmp.lt.s32.totalorder %s23, 0
        %s380 = scalar_select %p379, %s23, 0
        %s381 = sadd.s32 %s380, %s378
        %s382 = smul.addr %s381, 8
        %s383 = scalar_lea.vmem %s0, %s382
        %p384 = pneg %p58
        %p385 = pneg %p55
        %s386 = smul.u32 2, %s21
        %p387 = scmp.lt.s32.totalorder %s386, 1
        %s388 = scalar_select %p387, %s386, 1
        %p389 = scmp.lt.s32.totalorder %s23, 0
        %s390 = scalar_select %p389, %s23, 0
        %s391 = sadd.s32 %s390, %s388
        %s392 = smul.addr %s391, 8
        %s393 = scalar_lea.vmem %s1, %s392
        %p394 = pneg %p86
        %p395 = pneg %p83
        %p396 = scmp.lt.s32.totalorder %s23, 0
        %s397 = scalar_select %p396, %s23, 0
        %s398 = scalar_lea.vmem %s2, %s397
        %p399 = pneg %p112
        %p400 = pneg %p109
        %p401 = scmp.lt.s32.totalorder %s23, 0
        %s402 = scalar_select %p401, %s23, 0
        %s403 = scalar_lea.vmem %s3, %s402
        %p404 = pneg %p138
        %p405 = pneg %p135
        %s406 = sand.u32 %s153, 1
        %s407 = sand.u32 %s153, 1
        %s408 = smul.addr %s407, 64
        %s409 = scalar_lea.vmem [#allocation2], %s408
        %p410 = pneg %p166
        %p411 = pneg %p163
        %p412 = pneg %p194
        %p413 = pneg %p191
        %s414 = sand.u32 %s181, 1
        %s415 = sand.u32 %s181, 1
        %s416 = smul.addr %s415, 16
        %s417 = scalar_lea.vmem [#allocation3], %s416
        %s418 = smul.u32 2, %s21
        %p419 = scmp.lt.s32.totalorder %s418, 1
        %s420 = scalar_select %p419, %s418, 1
        %p421 = scmp.lt.s32.totalorder %s23, 0
        %s422 = scalar_select %p421, %s23, 0
        %s423 = sadd.s32 %s422, %s420
        %s424 = smul.addr %s423, 8
        %s425 = scalar_lea.vmem %s0, %s424
        %s426 = smul.u32 2, %s21
        %s427 = smul.u32 2, %s21
        %p428 = scmp.lt.s32.totalorder %s427, 1
        %s429 = scalar_select %p428, %s427, 1
        %p430 = scmp.lt.s32.totalorder %s23, 0
        %s431 = scalar_select %p430, %s23, 0
        %s432 = sadd.s32 %s431, %s429
        %s433 = smul.addr %s432, 8
        %s434 = scalar_lea.vmem %s1, %s433
        %s435 = smul.u32 2, %s21
        %p436 = scmp.lt.s32.totalorder %s23, 0
        %s437 = scalar_select %p436, %s23, 0
        %s438 = scalar_lea.vmem %s2, %s437
        %p439 = scmp.lt.s32.totalorder %s23, 0
        %s440 = scalar_select %p439, %s23, 0
        %s441 = scalar_lea.vmem %s3, %s440
        %s442 = smul.u32 16, %s23
        %s443 = smul.u32 2, %s21
        %v445 = vld [vmem:[%s425] sm:$0xff]
        %v446 = vld [vmem:[%s425 + $0x8] sm:$0xff]
        %447 = vadd.xlane.f32.xlu0 %v445
        %v448 = vpop.xlane.xlu0 %447
        %449 = vadd.xlane.f32.xlu0 %v446
        %v450 = vpop.xlane.xlu0 %449
        %v451 = vrcp.pop 128.0
        %v452 = vmul.f32 %v448, %v451
        %v453 = vmul.f32 %v450, %v451
        %v454 = vsub.f32 %v445, %v452
        %v455 = vsub.f32 %v446, %v453
        %v456 = vmul.f32 %v454, %v454
        %v457 = vmul.f32 %v455, %v455
        %458 = vadd.xlane.f32.xlu0 %v456
        %v459 = vpop.xlane.xlu0 %458
        %460 = vadd.xlane.f32.xlu0 %v457
        %v461 = vpop.xlane.xlu0 %460
        %v462 = vmul.f32 %v459, %v451
        %v463 = vmul.f32 %v461, %v451
        %v464 = vadd.f32 %v462, 1e-05
        %v465 = vadd.f32 %v463, 1e-05
        %v466 = vrsqrt.pop %v464
        %v467 = vrsqrt.pop %v465
        %v468 = vmul.f32 %v454, %v466
        %v469 = vmul.f32 %v455, %v467
        %v470 = vld [vmem:[%s438] sm:$0x1]
        %v472 = vlaneseq
        %v473 = vshrl.u32 %v472, 7
        %v474 = vsub.s32 0, %v473
        %v475 = vrot.slane %v470, %v474
        %v477 = vmul.f32 %v468, %v475
        %v478 = vmul.f32 %v469, %v475
        %v479 = vld [vmem:[%s441] sm:$0x1]
        %v481 = vlaneseq
        %v482 = vshrl.u32 %v481, 7
        %v483 = vsub.s32 0, %v482
        %v484 = vrot.slane %v479, %v483
        %v486 = vadd.f32 %v477, %v484
        %v487 = vadd.f32 %v478, %v484
        %v488 = vld [vmem:[%s434] sm:$0xff]
        %v489 = vld [vmem:[%s434 + $0x8] sm:$0xff]
        %s490 = smul.u32 %s22, 128
        %p491 = scmp.lt.s32.totalorder %s490, 256
        %s492 = scalar_select %p491, 1, 0
        %s493 = scvt.s32.f32 %s492
        %v494 = vstv %s493
        %v495 = vmul.f32 %v488, %v494
        %v496 = vmul.f32 %v489, %v494
        %v497 = vadd.f32 %v486, %v495
        %v498 = vadd.f32 %v487, %v496
        %v499 = vpack.c.bf16 %v498, %v497
        %v500 = vld [vmem:[%s372] sm:$0xf]
        %v501 = vld [vmem:[%s372 + $0x4] sm:$0xf]
        %v502 = vld [vmem:[%s372 + $0x8] sm:$0xf]
        %v503 = vld [vmem:[%s372 + $0xc] sm:$0xf]
        %v504 = vld [vmem:[%s372 + $0x10] sm:$0xf]
        %v505 = vld [vmem:[%s372 + $0x14] sm:$0xf]
        %v506 = vld [vmem:[%s372 + $0x18] sm:$0xf]
        %v507 = vld [vmem:[%s372 + $0x1c] sm:$0xf]
        %v508 = vld [vmem:[%s372 + $0x20] sm:$0xf]
        %v509 = vld [vmem:[%s372 + $0x24] sm:$0xf]
        %v510 = vld [vmem:[%s372 + $0x28] sm:$0xf]
        %v511 = vld [vmem:[%s372 + $0x2c] sm:$0xf]
        %v512 = vld [vmem:[%s372 + $0x30] sm:$0xf]
        %v513 = vld [vmem:[%s372 + $0x34] sm:$0xf]
        %v514 = vld [vmem:[%s372 + $0x38] sm:$0xf]
        %v515 = vld [vmem:[%s372 + $0x3c] sm:$0xf]
        %v532 = vunpack.c.l.b16 %v500
        %v533 = vunpack.c.l.b16 %v501
        %v534 = vunpack.c.l.b16 %v502
        %v535 = vunpack.c.l.b16 %v503
        %v536 = vunpack.c.l.b16 %v504
        %v537 = vunpack.c.l.b16 %v505
        %v538 = vunpack.c.l.b16 %v506
        %v539 = vunpack.c.l.b16 %v507
        %v540 = vunpack.c.l.b16 %v508
        %v541 = vunpack.c.l.b16 %v509
        %v542 = vunpack.c.l.b16 %v510
        %v543 = vunpack.c.l.b16 %v511
        %v544 = vunpack.c.l.b16 %v512
        %v545 = vunpack.c.l.b16 %v513
        %v546 = vunpack.c.l.b16 %v514
        %v547 = vunpack.c.l.b16 %v515
        %v548 = vpack.c.b16 %v533, %v532
        %v549 = vpack.c.b16 %v535, %v534
        %v550 = vpack.c.b16 %v537, %v536
        %v551 = vpack.c.b16 %v539, %v538
        %v552 = vpack.c.b16 %v541, %v540
        %v553 = vpack.c.b16 %v543, %v542
        %v554 = vpack.c.b16 %v545, %v544
        %v555 = vpack.c.b16 %v547, %v546
        %564 = vmatprep.subr.bf16.mxu0 0
        %565 = vmatpush1.bf16.msra.mxu0 %v555
        %566 = vmatprep.subr.bf16.mxu0 0
        %567 = vmatpush1.bf16.msra.mxu0 %v554
        %568 = vmatprep.subr.bf16.mxu0 0
        %569 = vmatpush1.bf16.msra.mxu0 %v553
        %570 = vmatprep.subr.bf16.mxu0 0
        %571 = vmatpush1.bf16.msra.mxu0 %v552
        %572 = vmatprep.subr.bf16.mxu0 0
        %573 = vmatpush1.bf16.msra.mxu0 %v551
        %574 = vmatprep.subr.bf16.mxu0 0
        %575 = vmatpush1.bf16.msra.mxu0 %v550
        %576 = vmatprep.subr.bf16.mxu0 0
        %577 = vmatpush1.bf16.msra.mxu0 %v549
        %578 = vmatprep.subr.bf16.mxu0 0
        %579 = vmatpush1.bf16.msra.mxu0 %v548
        %580 = vmatprep.subr.bf16.mxu0 0
        %581 = vmatpush2.bf16.msra.mxu0 0
        %582 = vmatprep.subr.bf16.mxu0 0
        %583 = vmatpush2.bf16.msra.mxu0 0
        %584 = vmatprep.subr.bf16.mxu0 0
        %585 = vmatpush2.bf16.msra.mxu0 0
        %586 = vmatprep.subr.bf16.mxu0 0
        %587 = vmatpush2.bf16.msra.mxu0 0
        %588 = vmatprep.subr.bf16.mxu0 0
        %589 = vmatpush2.bf16.msra.mxu0 0
        %590 = vmatprep.subr.bf16.mxu0 0
        %591 = vmatpush2.bf16.msra.mxu0 0
        %592 = vmatprep.subr.bf16.mxu0 0
        %593 = vmatpush2.bf16.msra.mxu0 0
        %594 = vmatprep.subr.bf16.mxu0 0
        %595 = vmatpush2.bf16.msra.mxu0 0
        %596 = vmatprep.mubr.bf16.mxu0 0
        %597 = vmatmul.mubr.bf16.gmra.mxu0 %v499
        %v598 = vpop.f32.mrf.mxu0
        %v599 = vadd.f32 0.0, %v598
        %v600 = vpop.f32.mrf.mxu0
        %v601 = vpop.f32.mrf.mxu0
        %v602 = vadd.f32 0.0, %v601
        %v603 = vpop.f32.mrf.mxu0
        %604 = vdwg.mxu0
        %605 = vst [vmem:[%s417] sm:$0xff] %v599
        %606 = vst [vmem:[%s417 + $0x8] sm:$0xff] %v602
        %s607 = sand.u32 %s181, 1
        %s608 = sand.u32 %s181, 1
        %s609 = smul.addr %s608, 16
        %s610 = scalar_lea.vmem [#allocation3], %s609
        // Predicated region
        $region82: #{transformer_decoder_layer.9} parent=76 // pred_check
          %p611 = pneg %p191
        $region83: #{transformer_decoder_layer.9} parent=76 // pred_check_branch
          %613 = sbr.rel (%p611) target = $region85
        $region84: #{transformer_decoder_layer.9} parent=76 // pred_region
          %s614 = smul.u32 2, %s21
          %s615 = smul.addr %s614, 3
          %s616 = sadd.s32 %s22, %s615
          %s617 = smul.addr %s616, 8
          %s618 = scalar_lea.vmem %s5, %s617
          // Predicated region
          $region86: #{transformer_decoder_layer.9} parent=84 // pred_check
            _
          $region87: #{transformer_decoder_layer.9} parent=84 // pred_check_branch
            %620 = sbr.rel (0) target = $region89
          $region88: #{transformer_decoder_layer.9} parent=84 // pred_region
            // Predicated region
            $region90: #{transformer_decoder_layer.9} parent=88 // pred_check
              _
            $region91: #{transformer_decoder_layer.9} parent=88 // pred_check_branch
              %622 = sbr.rel (0) target = $region93
            $region92: #{transformer_decoder_layer.9} parent=88 // pred_region
              // Predicated region
              $region105: #{transformer_decoder_layer.9} parent=92 // pred_check
                _
              $region106: #{transformer_decoder_layer.9} parent=92 // pred_check_branch
                %640 = sbr.rel (0) target = $region108
              $region107: #{transformer_decoder_layer.9} parent=92 // pred_region
                loop: start=0, step=1, limit=1
                $region109: #{transformer_decoder_layer.9} parent=107 // loop_pre_header
                  _
                $region110: #{transformer_decoder_layer.9} parent=107 // loop_header
                  %s642 = sphi 0, %s646
                  %p643 = scmp.ge.s32.totalorder %s642, 1
                  %s647 = sphi %s610, %s610
                  %s648 = sphi %s618, %s618
                $region111: #{transformer_decoder_layer.9} parent=107 // loop_header_branch
                  %645 = sbr.rel (%p643) target = $region115
                $region112: #{transformer_decoder_layer.9} parent=107 // loop_body
                  %v649 = vld [vmem:[%s647] sm:$0xff]
                  %650 = vst [vmem:[%s648] sm:$0xff] %v649
                  %v651 = vld [vmem:[%s647 + $0x8] sm:$0xff]
                  %652 = vst [vmem:[%s648 + $0x18] sm:$0xff] %v651
                $region113: #{transformer_decoder_layer.9} parent=107 // loop_footer
                  %s646 = sadd.s32 1, %s642
                $region114: #{transformer_decoder_layer.9} parent=107 // loop_footer_branch
                  %641 = sbr.rel target = $region110
                $region115: #{transformer_decoder_layer.9} parent=107 // loop_exit
                  _
              $region108: #{transformer_decoder_layer.9} parent=92 // pred_fallthru
                _
              // Predicated region
              $region116: #{transformer_decoder_layer.9} parent=92 // pred_check
                _
              $region117: #{transformer_decoder_layer.9} parent=92 // pred_check_branch
                %654 = sbr.rel target = $region119
              $region118: #{transformer_decoder_layer.9} parent=92 // pred_region
                _
              $region119: #{transformer_decoder_layer.9} parent=92 // pred_fallthru
                _
            $region93: #{transformer_decoder_layer.9} parent=88 // pred_fallthru
              _
            // Predicated region
            $region94: #{transformer_decoder_layer.9} parent=88 // pred_check
              _
            $region95: #{transformer_decoder_layer.9} parent=88 // pred_check_branch
              %624 = sbr.rel target = $region97
            $region96: #{transformer_decoder_layer.9} parent=88 // pred_region
              %s626 = ssub.s32 256, 1
              loop: start=0, step=1, limit=1
              $region98: #{transformer_decoder_layer.9} parent=96 // loop_pre_header
                _
              $region99: #{transformer_decoder_layer.9} parent=96 // loop_header
                %s628 = sphi 0, %s632
                %p629 = scmp.ge.s32.totalorder %s628, 1
                %s633 = sphi %s610, %s610
                %s634 = sphi %s618, %s618
              $region100: #{transformer_decoder_layer.9} parent=96 // loop_header_branch
                %631 = sbr.rel (%p629) target = $region104
              $region101: #{transformer_decoder_layer.9} parent=96 // loop_body
                %v635 = vld [vmem:[%s633] sm:%s626]
                %636 = vst [vmem:[%s634] sm:%s626] %v635
                %v637 = vld [vmem:[%s633 + $0x8] sm:%s626]
                %638 = vst [vmem:[%s634 + $0x18] sm:%s626] %v637
              $region102: #{transformer_decoder_layer.9} parent=96 // loop_footer
                %s632 = sadd.s32 1, %s628
              $region103: #{transformer_decoder_layer.9} parent=96 // loop_footer_branch
                %627 = sbr.rel target = $region99
              $region104: #{transformer_decoder_layer.9} parent=96 // loop_exit
                _
            $region97: #{transformer_decoder_layer.9} parent=88 // pred_fallthru
              _
          $region89: #{transformer_decoder_layer.9} parent=84 // pred_fallthru
            _
          %655 = vnop
        $region85: #{transformer_decoder_layer.9} parent=76 // pred_fallthru
          _
      $region77: #{transformer_decoder_layer.9} parent=5 // pred_fallthru
        _
      %p656 = scmp.le.s32.totalorder 2, %s11
      // Predicated region
      $region120: #{transformer_decoder_layer.9} parent=5 // pred_check
        %p657 = pneg %p656
      $region121: #{transformer_decoder_layer.9} parent=5 // pred_check_branch
        %659 = sbr.rel (%p657) target = $region123
      $region122: #{transformer_decoder_layer.9} parent=5 // pred_region
        %s660 = ssub.s32 %s11, 2
        // Predicated region
        $region124: #{transformer_decoder_layer.9} parent=122 // pred_check
          %p661 = pneg %p197
        $region125: #{transformer_decoder_layer.9} parent=122 // pred_check_branch
          %663 = sbr.rel (%p661) target = $region127
        $region126: #{transformer_decoder_layer.9} parent=122 // pred_region
          %s664 = sand.u32 %s182, 1
          %s665 = sand.u32 %s182, 1
          %s666 = smul.addr %s665, 16
          %s667 = scalar_lea.vmem [#allocation3], %s666
        $region127: #{transformer_decoder_layer.9} parent=122 // pred_fallthru
          _
      $region123: #{transformer_decoder_layer.9} parent=5 // pred_fallthru
        _
    $region6: #{transformer_decoder_layer.9} parent=1 // loop_footer
      %s15 = sadd.s32 1, %s11
    $region7: #{transformer_decoder_layer.9} parent=1 // loop_footer_branch
      %10 = sbr.rel target = $region3
    $region8: #{transformer_decoder_layer.9} parent=1 // loop_exit
      _

// kernel: transformer_decoder_layer.10
$region0: #{transformer_decoder_layer.10}
  #allocation0 [shape = 'u32[]', space=smem, size = 0x4, offset = 0x4, fixed_abs, tag = 'smem constant byte address 0x4 - core index']
  #allocation1 [shape = 'u32[144,128]{1,0:T(1,128)}', space=vmem, size = 0x12000, scoped, tag = 'internal scratch']
  %s0 = inlined_call_operand.vmem [shape: f32[2,8,384], index: 0, kind: input, shape index: {}, may-alias: {0,1,2}]
  %s1 = inlined_call_operand.vmem [shape: f32[2,8,384], index: 1, kind: input, shape index: {}, may-alias: {0,1,2}]
  %s2 = inlined_call_operand.vmem [shape: f32[2,8,384], index: 2, kind: input, shape index: {}, may-alias: {0,1,2}]
  %s3 = inlined_call_operand.vmem [shape: f32[2,8,128], index: 3, kind: output, shape index: {}]
  %s4 = sld [smem:[#allocation0]]
  $region45: #{transformer_decoder_layer.10} parent=0
    _
  %s6 = ssub.s32 1, %s4
  %s7 = scalar_select 0, %s6, %s4
  loop: start=0, step=1, limit=4
  $region2: #{transformer_decoder_layer.10} parent=0 // loop_pre_header
    _
  $region3: #{transformer_decoder_layer.10} parent=0 // loop_header
    %s9 = sphi 0, %s13
    %p10 = scmp.ge.s32.totalorder %s9, 4
    %s19 = sphi 0, %s21
    %s22 = sphi 0, %s19
    %s23 = sphi 0, %s22
    %s39 = sphi 0, %s23
    %s45 = sphi 0, %s47
    %s48 = sphi 0, %s45
    %s49 = sphi 0, %s48
    %s65 = sphi 0, %s49
    %s71 = sphi 0, %s73
    %s74 = sphi 0, %s71
    %s75 = sphi 0, %s74
    %s91 = sphi 0, %s75
    %s97 = sphi 0, %s99
    %s100 = sphi 0, %s97
    %s101 = sphi 0, %s100
    %s117 = sphi 0, %s101
  $region4: #{transformer_decoder_layer.10} parent=0 // loop_header_branch
    %12 = sbr.rel (%p10) target = $region8
  $region5: #{transformer_decoder_layer.10} parent=0 // loop_body
    %s14 = ssub.s32 %s9, 1
    %s15 = ssub.s32 %s9, 2
    %s16 = sadd.s32 %s9, 1
    %s17 = ssub.s32 %s9, %s16
    %p18 = scmp.eq.s32.totalorder %s17, 0
    %s20 = sadd.s32 %s19, 1
    %s21 = scalar_select %p18, %s19, %s20
    %p24 = pneg %p18
    %p25 = scmp.eq.s32.totalorder %s9, 1
    %p26 = por %p24, %p25
    %p27 = scmp.ne.s32.totalorder %s19, %s22
    %p28 = scmp.eq.s32.totalorder %s9, 0
    %p29 = por %p27, %p28
    %p30 = scmp.ne.s32.totalorder %s19, %s22
    %p31 = scmp.eq.s32.totalorder %s14, 1
    %p32 = por %p30, %p31
    %p33 = scmp.ne.s32.totalorder %s22, %s23
    %p34 = scmp.eq.s32.totalorder %s14, 0
    %p35 = por %p33, %p34
    %p36 = scmp.ne.s32.totalorder %s22, %s23
    %p37 = scmp.eq.s32.totalorder %s15, 1
    %p38 = por %p36, %p37
    %p40 = scmp.ne.s32.totalorder %s23, %s39
    %p41 = scmp.eq.s32.totalorder %s15, 0
    %p42 = por %p40, %p41
    %s43 = ssub.s32 %s9, %s16
    %p44 = scmp.eq.s32.totalorder %s43, 0
    %s46 = sadd.s32 %s45, 1
    %s47 = scalar_select %p44, %s45, %s46
    %p50 = pneg %p44
    %p51 = scmp.eq.s32.totalorder %s9, 1
    %p52 = por %p50, %p51
    %p53 = scmp.ne.s32.totalorder %s45, %s48
    %p54 = scmp.eq.s32.totalorder %s9, 0
    %p55 = por %p53, %p54
    %p56 = scmp.ne.s32.totalorder %s45, %s48
    %p57 = scmp.eq.s32.totalorder %s14, 1
    %p58 = por %p56, %p57
    %p59 = scmp.ne.s32.totalorder %s48, %s49
    %p60 = scmp.eq.s32.totalorder %s14, 0
    %p61 = por %p59, %p60
    %p62 = scmp.ne.s32.totalorder %s48, %s49
    %p63 = scmp.eq.s32.totalorder %s15, 1
    %p64 = por %p62, %p63
    %p66 = scmp.ne.s32.totalorder %s49, %s65
    %p67 = scmp.eq.s32.totalorder %s15, 0
    %p68 = por %p66, %p67
    %s69 = ssub.s32 %s9, %s16
    %p70 = scmp.eq.s32.totalorder %s69, 0
    %s72 = sadd.s32 %s71, 1
    %s73 = scalar_select %p70, %s71, %s72
    %p76 = pneg %p70
    %p77 = scmp.eq.s32.totalorder %s9, 1
    %p78 = por %p76, %p77
    %p79 = scmp.ne.s32.totalorder %s71, %s74
    %p80 = scmp.eq.s32.totalorder %s9, 0
    %p81 = por %p79, %p80
    %p82 = scmp.ne.s32.totalorder %s71, %s74
    %p83 = scmp.eq.s32.totalorder %s14, 1
    %p84 = por %p82, %p83
    %p85 = scmp.ne.s32.totalorder %s74, %s75
    %p86 = scmp.eq.s32.totalorder %s14, 0
    %p87 = por %p85, %p86
    %p88 = scmp.ne.s32.totalorder %s74, %s75
    %p89 = scmp.eq.s32.totalorder %s15, 1
    %p90 = por %p88, %p89
    %p92 = scmp.ne.s32.totalorder %s75, %s91
    %p93 = scmp.eq.s32.totalorder %s15, 0
    %p94 = por %p92, %p93
    %s95 = ssub.s32 %s9, %s16
    %p96 = scmp.eq.s32.totalorder %s95, 0
    %s98 = sadd.s32 %s97, 1
    %s99 = scalar_select %p96, %s97, %s98
    %p102 = pneg %p96
    %p103 = scmp.eq.s32.totalorder %s9, 1
    %p104 = por %p102, %p103
    %p105 = scmp.ne.s32.totalorder %s97, %s100
    %p106 = scmp.eq.s32.totalorder %s9, 0
    %p107 = por %p105, %p106
    %p108 = scmp.ne.s32.totalorder %s97, %s100
    %p109 = scmp.eq.s32.totalorder %s14, 1
    %p110 = por %p108, %p109
    %p111 = scmp.ne.s32.totalorder %s100, %s101
    %p112 = scmp.eq.s32.totalorder %s14, 0
    %p113 = por %p111, %p112
    %p114 = scmp.ne.s32.totalorder %s100, %s101
    %p115 = scmp.eq.s32.totalorder %s15, 1
    %p116 = por %p114, %p115
    %p118 = scmp.ne.s32.totalorder %s101, %s117
    %p119 = scmp.eq.s32.totalorder %s15, 0
    %p120 = por %p118, %p119
    %p121 = scmp.le.s32.totalorder 1, %s9
    %p122 = scmp.lt.s32.totalorder %s9, 3
    %p123 = pnand %p121, %p122
    %p124 = pneg %p123
    // Predicated region
    $region9: #{transformer_decoder_layer.10} parent=5 // pred_check
      _
    $region10: #{transformer_decoder_layer.10} parent=5 // pred_check_branch
      %126 = sbr.rel (%p123) target = $region12
    $region11: #{transformer_decoder_layer.10} parent=5 // pred_region
      %s127 = ssub.s32 %s9, 1
    $region12: #{transformer_decoder_layer.10} parent=5 // pred_fallthru
      _
    %p128 = scmp.lt.s32.totalorder %s9, 2
    // Predicated region
    $region13: #{transformer_decoder_layer.10} parent=5 // pred_check
      %p129 = pneg %p128
    $region14: #{transformer_decoder_layer.10} parent=5 // pred_check_branch
      %131 = sbr.rel (%p129) target = $region16
    $region15: #{transformer_decoder_layer.10} parent=5 // pred_region
      // Predicated region
      $region17: #{transformer_decoder_layer.10} parent=15 // pred_check
        %p132 = pneg %p29
      $region18: #{transformer_decoder_layer.10} parent=15 // pred_check_branch
        %134 = sbr.rel (%p132) target = $region20
      $region19: #{transformer_decoder_layer.10} parent=15 // pred_region
        %p135 = scmp.lt.s32.totalorder %s9, 1
        %s136 = scalar_select %p135, %s9, 1
        %s137 = smul.addr %s136, 3
        %s138 = smul.addr %s137, 8
        %s139 = scalar_lea.vmem %s0, %s138
      $region20: #{transformer_decoder_layer.10} parent=15 // pred_fallthru
        _
      // Predicated region
      $region21: #{transformer_decoder_layer.10} parent=15 // pred_check
        %p140 = pneg %p55
      $region22: #{transformer_decoder_layer.10} parent=15 // pred_check_branch
        %142 = sbr.rel (%p140) target = $region24
      $region23: #{transformer_decoder_layer.10} parent=15 // pred_region
        %p143 = scmp.lt.s32.totalorder %s9, 1
        %s144 = scalar_select %p143, %s9, 1
        %s145 = smul.addr %s144, 3
        %s146 = sadd.s32 1, %s145
        %s147 = smul.addr %s146, 8
        %s148 = scalar_lea.vmem %s1, %s147
      $region24: #{transformer_decoder_layer.10} parent=15 // pred_fallthru
        _
      // Predicated region
      $region25: #{transformer_decoder_layer.10} parent=15 // pred_check
        %p149 = pneg %p81
      $region26: #{transformer_decoder_layer.10} parent=15 // pred_check_branch
        %151 = sbr.rel (%p149) target = $region28
      $region27: #{transformer_decoder_layer.10} parent=15 // pred_region
        %p152 = scmp.lt.s32.totalorder %s9, 1
        %s153 = scalar_select %p152, %s9, 1
        %s154 = smul.addr %s153, 3
        %s155 = sadd.s32 2, %s154
        %s156 = smul.addr %s155, 8
        %s157 = scalar_lea.vmem %s2, %s156
      $region28: #{transformer_decoder_layer.10} parent=15 // pred_fallthru
        _
    $region16: #{transformer_decoder_layer.10} parent=5 // pred_fallthru
      _
    %p158 = scmp.le.s32.totalorder 1, %s9
    %p159 = scmp.lt.s32.totalorder %s9, 3
    %p160 = pnand %p158, %p159
    %p161 = pneg %p160
    // Predicated region
    $region29: #{transformer_decoder_layer.10} parent=5 // pred_check
      _
    $region30: #{transformer_decoder_layer.10} parent=5 // pred_check_branch
      %163 = sbr.rel (%p160) target = $region32
    $region31: #{transformer_decoder_layer.10} parent=5 // pred_region
      %s164 = ssub.s32 %s9, 1
      %p165 = scmp.lt.s32.totalorder %s14, 1
      %s166 = scalar_select %p165, %s14, 1
      %s167 = smul.addr %s166, 3
      %s168 = smul.addr %s167, 8
      %s169 = scalar_lea.vmem %s0, %s168
      %p170 = pneg %p35
      %p171 = pneg %p32
      %p172 = scmp.lt.s32.totalorder %s14, 1
      %s173 = scalar_select %p172, %s14, 1
      %s174 = smul.addr %s173, 3
      %s175 = sadd.s32 1, %s174
      %s176 = smul.addr %s175, 8
      %s177 = scalar_lea.vmem %s1, %s176
      %p178 = pneg %p61
      %p179 = pneg %p58
      %p180 = scmp.lt.s32.totalorder %s14, 1
      %s181 = scalar_select %p180, %s14, 1
      %s182 = smul.addr %s181, 3
      %s183 = sadd.s32 2, %s182
      %s184 = smul.addr %s183, 8
      %s185 = scalar_lea.vmem %s2, %s184
      %p186 = pneg %p87
      %p187 = pneg %p84
      %p188 = pneg %p113
      %p189 = pneg %p110
      %p190 = scmp.lt.s32.totalorder %s14, 1
      %s191 = scalar_select %p190, %s14, 1
      %s192 = smul.addr %s191, 8
      %s193 = scalar_lea.vmem %s3, %s192
      %p194 = scmp.lt.s32.totalorder %s14, 1
      %s195 = scalar_select %p194, %s14, 1
      %s196 = smul.addr %s195, 3
      %s197 = smul.addr %s196, 8
      %s198 = scalar_lea.vmem %s0, %s197
      %p199 = scmp.lt.s32.totalorder %s14, 1
      %s200 = scalar_select %p199, %s14, 1
      %s201 = smul.addr %s200, 3
      %s202 = sadd.s32 1, %s201
      %s203 = smul.addr %s202, 8
      %s204 = scalar_lea.vmem %s1, %s203
      %p205 = scmp.lt.s32.totalorder %s14, 1
      %s206 = scalar_select %p205, %s14, 1
      %s207 = smul.addr %s206, 3
      %s208 = sadd.s32 2, %s207
      %s209 = smul.addr %s208, 8
      %s210 = scalar_lea.vmem %s2, %s209
      %p211 = scmp.lt.s32.totalorder %s14, 1
      %s212 = scalar_select %p211, %s14, 1
      %s213 = smul.addr %s212, 8
      %s214 = scalar_lea.vmem %s3, %s213
      %v216 = vld [vmem:[%s198] sm:$0xff]
      %v217 = vpack.c.bf16 %v216, %v216
      %v218 = vld [vmem:[%s204] sm:$0xff]
      %v219 = vpack.c.bf16 %v218, %v218
      %v220 = vld [vmem:[%s210] sm:$0xff]
      %v221 = vpack.c.bf16 %v220, %v220
      %vm222 = vcmask 261120
      %v224 = vsel %vm222, %v217, 0
      %v227 = vsel %vm222, %v219, 0
      %229 = vmatprep.subr.bf16.mxu0 0
      %230 = vmatpush1.bf16.xpose.msra.mxu0 0
      %231 = vmatprep.subr.bf16.mxu0 0
      %232 = vmatpush1.bf16.xpose.msra.mxu0 0
      %233 = vmatprep.subr.bf16.mxu0 0
      %234 = vmatpush1.bf16.xpose.msra.mxu0 0
      %235 = vmatprep.subr.bf16.mxu0 0
      %236 = vmatpush1.bf16.xpose.msra.mxu0 0
      %237 = vmatprep.subr.bf16.mxu0 0
      %238 = vmatpush1.bf16.xpose.msra.mxu0 0
      %239 = vmatprep.subr.bf16.mxu0 0
      %240 = vmatpush1.bf16.xpose.msra.mxu0 0
      %241 = vmatprep.subr.bf16.mxu0 0
      %242 = vmatpush1.bf16.xpose.msra.mxu0 0
      %243 = vmatprep.subr.bf16.mxu0 0
      %244 = vmatpush1.bf16.xpose.msra.mxu0 %v227
      %245 = vmatprep.subr.bf16.mxu0 0
      %246 = vmatpush2.bf16.xpose.msra.mxu0 0
      %247 = vmatprep.subr.bf16.mxu0 0
      %248 = vmatpush2.bf16.xpose.msra.mxu0 0
      %249 = vmatprep.subr.bf16.mxu0 0
      %250 = vmatpush2.bf16.xpose.msra.mxu0 0
      %251 = vmatprep.subr.bf16.mxu0 0
      %252 = vmatpush2.bf16.xpose.msra.mxu0 0
      %253 = vmatprep.subr.bf16.mxu0 0
      %254 = vmatpush2.bf16.xpose.msra.mxu0 0
      %255 = vmatprep.subr.bf16.mxu0 0
      %256 = vmatpush2.bf16.xpose.msra.mxu0 0
      %257 = vmatprep.subr.bf16.mxu0 0
      %258 = vmatpush2.bf16.xpose.msra.mxu0 0
      %259 = vmatprep.subr.bf16.mxu0 0
      %260 = vmatpush2.bf16.xpose.msra.mxu0 0
      %261 = vmatprep.mubr.bf16.mxu0 0
      %262 = vmatmul.mubr.bf16.gmra.mxu0 %v224
      %v263 = vpop.f32.mrf.mxu0
      %v264 = vadd.f32 0.0, %v263
      %v265 = vpop.f32.mrf.mxu0
      %v266 = vpop.f32.mrf.mxu0
      %v267 = vpop.f32.mrf.mxu0
      %268 = vdwg.mxu0
      %vm269 = vcmask 64512
      %v270 = vsel %vm269, %v264, -inf
      %271 = vmax.xlane.f32.xlu0 %v270
      %v272 = vpop.xlane.xlu0 %271
      %v273 = vsub.f32 %v264, %v272
      %v274 = vmul.f32 %v273, 1.442695
      %v275 = vpow.pop %v274
      %v276 = vsel %vm269, %v275, 0.0
      %277 = vadd.xlane.f32.xlu0 %v276
      %v278 = vpop.xlane.xlu0 %277
      %v279 = vrcp.pop %v278
      %v280 = vmul.f32 %v275, %v279
      %v281 = vpack.c.bf16 %v280, %v280
      %v283 = vsel %vm269, %v281, 0
      %vm285 = vcmask 1043456
      %v287 = vsel %vm285, %v221, 0
      %289 = vmatprep.subr.bf16.mxu0 0
      %290 = vmatpush1.bf16.msra.mxu0 0
      %291 = vmatprep.subr.bf16.mxu0 0
      %292 = vmatpush1.bf16.msra.mxu0 0
      %293 = vmatprep.subr.bf16.mxu0 0
      %294 = vmatpush1.bf16.msra.mxu0 0
      %295 = vmatprep.subr.bf16.mxu0 0
      %296 = vmatpush1.bf16.msra.mxu0 0
      %297 = vmatprep.subr.bf16.mxu0 0
      %298 = vmatpush1.bf16.msra.mxu0 0
      %299 = vmatprep.subr.bf16.mxu0 0
      %300 = vmatpush1.bf16.msra.mxu0 0
      %301 = vmatprep.subr.bf16.mxu0 0
      %302 = vmatpush1.bf16.msra.mxu0 0
      %303 = vmatprep.subr.bf16.mxu0 0
      %304 = vmatpush1.bf16.msra.mxu0 %v287
      %305 = vmatprep.subr.bf16.mxu0 0
      %306 = vmatpush2.bf16.msra.mxu0 0
      %307 = vmatprep.subr.bf16.mxu0 0
      %308 = vmatpush2.bf16.msra.mxu0 0
      %309 = vmatprep.subr.bf16.mxu0 0
      %310 = vmatpush2.bf16.msra.mxu0 0
      %311 = vmatprep.subr.bf16.mxu0 0
      %312 = vmatpush2.bf16.msra.mxu0 0
      %313 = vmatprep.subr.bf16.mxu0 0
      %314 = vmatpush2.bf16.msra.mxu0 0
      %315 = vmatprep.subr.bf16.mxu0 0
      %316 = vmatpush2.bf16.msra.mxu0 0
      %317 = vmatprep.subr.bf16.mxu0 0
      %318 = vmatpush2.bf16.msra.mxu0 0
      %319 = vmatprep.subr.bf16.mxu0 0
      %320 = vmatpush2.bf16.msra.mxu0 0
      %321 = vmatprep.mubr.bf16.mxu0 0
      %322 = vmatmul.mubr.bf16.gmra.mxu0 %v283
      %v323 = vpop.f32.mrf.mxu0
      %v324 = vadd.f32 0.0, %v323
      %v325 = vpop.f32.mrf.mxu0
      %v326 = vpop.f32.mrf.mxu0
      %v327 = vpop.f32.mrf.mxu0
      %328 = vdwg.mxu0
      %330 = vrot.lane.b32.xlu0 %v217, 96
      %v331 = vpop.permute.xlu0 %330
      %333 = vrot.lane.b32.xlu0 %v219, 96
      %v334 = vpop.permute.xlu0 %333
      %v336 = vsel %vm222, %v331, 0
      %v339 = vsel %vm222, %v334, 0
      %341 = vmatprep.subr.bf16.mxu0 0
      %342 = vmatpush1.bf16.xpose.msra.mxu0 0
      %343 = vmatprep.subr.bf16.mxu0 0
      %344 = vmatpush1.bf16.xpose.msra.mxu0 0
      %345 = vmatprep.subr.bf16.mxu0 0
      %346 = vmatpush1.bf16.xpose.msra.mxu0 0
      %347 = vmatprep.subr.bf16.mxu0 0
      %348 = vmatpush1.bf16.xpose.msra.mxu0 0
      %349 = vmatprep.subr.bf16.mxu0 0
      %350 = vmatpush1.bf16.xpose.msra.mxu0 0
      %351 = vmatprep.subr.bf16.mxu0 0
      %352 = vmatpush1.bf16.xpose.msra.mxu0 0
      %353 = vmatprep.subr.bf16.mxu0 0
      %354 = vmatpush1.bf16.xpose.msra.mxu0 0
      %355 = vmatprep.subr.bf16.mxu0 0
      %356 = vmatpush1.bf16.xpose.msra.mxu0 %v339
      %357 = vmatprep.subr.bf16.mxu0 0
      %358 = vmatpush2.bf16.xpose.msra.mxu0 0
      %359 = vmatprep.subr.bf16.mxu0 0
      %360 = vmatpush2.bf16.xpose.msra.mxu0 0
      %361 = vmatprep.subr.bf16.mxu0 0
      %362 = vmatpush2.bf16.xpose.msra.mxu0 0
      %363 = vmatprep.subr.bf16.mxu0 0
      %364 = vmatpush2.bf16.xpose.msra.mxu0 0
      %365 = vmatprep.subr.bf16.mxu0 0
      %366 = vmatpush2.bf16.xpose.msra.mxu0 0
      %367 = vmatprep.subr.bf16.mxu0 0
      %368 = vmatpush2.bf16.xpose.msra.mxu0 0
      %369 = vmatprep.subr.bf16.mxu0 0
      %370 = vmatpush2.bf16.xpose.msra.mxu0 0
      %371 = vmatprep.subr.bf16.mxu0 0
      %372 = vmatpush2.bf16.xpose.msra.mxu0 0
      %373 = vmatprep.mubr.bf16.mxu0 0
      %374 = vmatmul.mubr.bf16.gmra.mxu0 %v336
      %v375 = vpop.f32.mrf.mxu0
      %v376 = vadd.f32 0.0, %v375
      %v377 = vpop.f32.mrf.mxu0
      %v378 = vpop.f32.mrf.mxu0
      %v379 = vpop.f32.mrf.mxu0
      %380 = vdwg.mxu0
      %v381 = vsel %vm269, %v376, -inf
      %382 = vmax.xlane.f32.xlu0 %v381
      %v383 = vpop.xlane.xlu0 %382
      %v384 = vsub.f32 %v376, %v383
      %v385 = vmul.f32 %v384, 1.442695
      %v386 = vpow.pop %v385
      %v387 = vsel %vm269, %v386, 0.0
      %388 = vadd.xlane.f32.xlu0 %v387
      %v389 = vpop.xlane.xlu0 %388
      %v390 = vrcp.pop %v389
      %v391 = vmul.f32 %v386, %v390
      %v392 = vpack.c.bf16 %v391, %v391
      %394 = vrot.lane.b32.xlu0 %v221, 96
      %v395 = vpop.permute.xlu0 %394
      %v397 = vsel %vm269, %v392, 0
      %v400 = vsel %vm285, %v395, 0
      %402 = vmatprep.subr.bf16.mxu0 0
      %403 = vmatpush1.bf16.msra.mxu0 0
      %404 = vmatprep.subr.bf16.mxu0 0
      %405 = vmatpush1.bf16.msra.mxu0 0
      %406 = vmatprep.subr.bf16.mxu0 0
      %407 = vmatpush1.bf16.msra.mxu0 0
      %408 = vmatprep.subr.bf16.mxu0 0
      %409 = vmatpush1.bf16.msra.mxu0 0
      %410 = vmatprep.subr.bf16.mxu0 0
      %411 = vmatpush1.bf16.msra.mxu0 0
      %412 = vmatprep.subr.bf16.mxu0 0
      %413 = vmatpush1.bf16.msra.mxu0 0
      %414 = vmatprep.subr.bf16.mxu0 0
      %415 = vmatpush1.bf16.msra.mxu0 0
      %416 = vmatprep.subr.bf16.mxu0 0
      %417 = vmatpush1.bf16.msra.mxu0 %v400
      %418 = vmatprep.subr.bf16.mxu0 0
      %419 = vmatpush2.bf16.msra.mxu0 0
      %420 = vmatprep.subr.bf16.mxu0 0
      %421 = vmatpush2.bf16.msra.mxu0 0
      %422 = vmatprep.subr.bf16.mxu0 0
      %423 = vmatpush2.bf16.msra.mxu0 0
      %424 = vmatprep.subr.bf16.mxu0 0
      %425 = vmatpush2.bf16.msra.mxu0 0
      %426 = vmatprep.subr.bf16.mxu0 0
      %427 = vmatpush2.bf16.msra.mxu0 0
      %428 = vmatprep.subr.bf16.mxu0 0
      %429 = vmatpush2.bf16.msra.mxu0 0
      %430 = vmatprep.subr.bf16.mxu0 0
      %431 = vmatpush2.bf16.msra.mxu0 0
      %432 = vmatprep.subr.bf16.mxu0 0
      %433 = vmatpush2.bf16.msra.mxu0 0
      %434 = vmatprep.mubr.bf16.mxu0 0
      %435 = vmatmul.mubr.bf16.gmra.mxu0 %v397
      %v436 = vpop.f32.mrf.mxu0
      %v437 = vadd.f32 0.0, %v436
      %v438 = vpop.f32.mrf.mxu0
      %v439 = vpop.f32.mrf.mxu0
      %v440 = vpop.f32.mrf.mxu0
      %441 = vdwg.mxu0
      %442 = vrot.lane.b32.xlu0 %v217, 64
      %v443 = vpop.permute.xlu0 %442
      %444 = vrot.lane.b32.xlu0 %v219, 64
      %v445 = vpop.permute.xlu0 %444
      %v447 = vsel %vm222, %v443, 0
      %v450 = vsel %vm222, %v445, 0
      %452 = vmatprep.subr.bf16.mxu0 0
      %453 = vmatpush1.bf16.xpose.msra.mxu0 0
      %454 = vmatprep.subr.bf16.mxu0 0
      %455 = vmatpush1.bf16.xpose.msra.mxu0 0
      %456 = vmatprep.subr.bf16.mxu0 0
      %457 = vmatpush1.bf16.xpose.msra.mxu0 0
      %458 = vmatprep.subr.bf16.mxu0 0
      %459 = vmatpush1.bf16.xpose.msra.mxu0 0
      %460 = vmatprep.subr.bf16.mxu0 0
      %461 = vmatpush1.bf16.xpose.msra.mxu0 0
      %462 = vmatprep.subr.bf16.mxu0 0
      %463 = vmatpush1.bf16.xpose.msra.mxu0 0
      %464 = vmatprep.subr.bf16.mxu0 0
      %465 = vmatpush1.bf16.xpose.msra.mxu0 0
      %466 = vmatprep.subr.bf16.mxu0 0
      %467 = vmatpush1.bf16.xpose.msra.mxu0 %v450
      %468 = vmatprep.subr.bf16.mxu0 0
      %469 = vmatpush2.bf16.xpose.msra.mxu0 0
      %470 = vmatprep.subr.bf16.mxu0 0
      %471 = vmatpush2.bf16.xpose.msra.mxu0 0
      %472 = vmatprep.subr.bf16.mxu0 0
      %473 = vmatpush2.bf16.xpose.msra.mxu0 0
      %474 = vmatprep.subr.bf16.mxu0 0
      %475 = vmatpush2.bf16.xpose.msra.mxu0 0
      %476 = vmatprep.subr.bf16.mxu0 0
      %477 = vmatpush2.bf16.xpose.msra.mxu0 0
      %478 = vmatprep.subr.bf16.mxu0 0
      %479 = vmatpush2.bf16.xpose.msra.mxu0 0
      %480 = vmatprep.subr.bf16.mxu0 0
      %481 = vmatpush2.bf16.xpose.msra.mxu0 0
      %482 = vmatprep.subr.bf16.mxu0 0
      %483 = vmatpush2.bf16.xpose.msra.mxu0 0
      %484 = vmatprep.mubr.bf16.mxu0 0
      %485 = vmatmul.mubr.bf16.gmra.mxu0 %v447
      %v486 = vpop.f32.mrf.mxu0
      %v487 = vadd.f32 0.0, %v486
      %v488 = vpop.f32.mrf.mxu0
      %v489 = vpop.f32.mrf.mxu0
      %v490 = vpop.f32.mrf.mxu0
      %491 = vdwg.mxu0
      %v492 = vsel %vm269, %v487, -inf
      %493 = vmax.xlane.f32.xlu0 %v492
      %v494 = vpop.xlane.xlu0 %493
      %v495 = vsub.f32 %v487, %v494
      %v496 = vmul.f32 %v495, 1.442695
      %v497 = vpow.pop %v496
      %v498 = vsel %vm269, %v497, 0.0
      %499 = vadd.xlane.f32.xlu0 %v498
      %v500 = vpop.xlane.xlu0 %499
      %v501 = vrcp.pop %v500
      %v502 = vmul.f32 %v497, %v501
      %v503 = vpack.c.bf16 %v502, %v502
      %504 = vrot.lane.b32.xlu0 %v221, 64
      %v505 = vpop.permute.xlu0 %504
      %v507 = vsel %vm269, %v503, 0
      %v510 = vsel %vm285, %v505, 0
      %512 = vmatprep.subr.bf16.mxu0 0
      %513 = vmatpush1.bf16.msra.mxu0 0
      %514 = vmatprep.subr.bf16.mxu0 0
      %515 = vmatpush1.bf16.msra.mxu0 0
      %516 = vmatprep.subr.bf16.mxu0 0
      %517 = vmatpush1.bf16.msra.mxu0 0
      %518 = vmatprep.subr.bf16.mxu0 0
      %519 = vmatpush1.bf16.msra.mxu0 0
      %520 = vmatprep.subr.bf16.mxu0 0
      %521 = vmatpush1.bf16.msra.mxu0 0
      %522 = vmatprep.subr.bf16.mxu0 0
      %523 = vmatpush1.bf16.msra.mxu0 0
      %524 = vmatprep.subr.bf16.mxu0 0
      %525 = vmatpush1.bf16.msra.mxu0 0
      %526 = vmatprep.subr.bf16.mxu0 0
      %527 = vmatpush1.bf16.msra.mxu0 %v510
      %528 = vmatprep.subr.bf16.mxu0 0
      %529 = vmatpush2.bf16.msra.mxu0 0
      %530 = vmatprep.subr.bf16.mxu0 0
      %531 = vmatpush2.bf16.msra.mxu0 0
      %532 = vmatprep.subr.bf16.mxu0 0
      %533 = vmatpush2.bf16.msra.mxu0 0
      %534 = vmatprep.subr.bf16.mxu0 0
      %535 = vmatpush2.bf16.msra.mxu0 0
      %536 = vmatprep.subr.bf16.mxu0 0
      %537 = vmatpush2.bf16.msra.mxu0 0
      %538 = vmatprep.subr.bf16.mxu0 0
      %539 = vmatpush2.bf16.msra.mxu0 0
      %540 = vmatprep.subr.bf16.mxu0 0
      %541 = vmatpush2.bf16.msra.mxu0 0
      %542 = vmatprep.subr.bf16.mxu0 0
      %543 = vmatpush2.bf16.msra.mxu0 0
      %544 = vmatprep.mubr.bf16.mxu0 0
      %545 = vmatmul.mubr.bf16.gmra.mxu0 %v507
      %v546 = vpop.f32.mrf.mxu0
      %v547 = vadd.f32 0.0, %v546
      %v548 = vpop.f32.mrf.mxu0
      %v549 = vpop.f32.mrf.mxu0
      %v550 = vpop.f32.mrf.mxu0
      %551 = vdwg.mxu0
      %552 = vrot.lane.b32.xlu0 %v217, 32
      %v553 = vpop.permute.xlu0 %552
      %554 = vrot.lane.b32.xlu0 %v219, 32
      %v555 = vpop.permute.xlu0 %554
      %v557 = vsel %vm222, %v553, 0
      %v560 = vsel %vm222, %v555, 0
      %562 = vmatprep.subr.bf16.mxu0 0
      %563 = vmatpush1.bf16.xpose.msra.mxu0 0
      %564 = vmatprep.subr.bf16.mxu0 0
      %565 = vmatpush1.bf16.xpose.msra.mxu0 0
      %566 = vmatprep.subr.bf16.mxu0 0
      %567 = vmatpush1.bf16.xpose.msra.mxu0 0
      %568 = vmatprep.subr.bf16.mxu0 0
      %569 = vmatpush1.bf16.xpose.msra.mxu0 0
      %570 = vmatprep.subr.bf16.mxu0 0
      %571 = vmatpush1.bf16.xpose.msra.mxu0 0
      %572 = vmatprep.subr.bf16.mxu0 0
      %573 = vmatpush1.bf16.xpose.msra.mxu0 0
      %574 = vmatprep.subr.bf16.mxu0 0
      %575 = vmatpush1.bf16.xpose.msra.mxu0 0
      %576 = vmatprep.subr.bf16.mxu0 0
      %577 = vmatpush1.bf16.xpose.msra.mxu0 %v560
      %578 = vmatprep.subr.bf16.mxu0 0
      %579 = vmatpush2.bf16.xpose.msra.mxu0 0
      %580 = vmatprep.subr.bf16.mxu0 0
      %581 = vmatpush2.bf16.xpose.msra.mxu0 0
      %582 = vmatprep.subr.bf16.mxu0 0
      %583 = vmatpush2.bf16.xpose.msra.mxu0 0
      %584 = vmatprep.subr.bf16.mxu0 0
      %585 = vmatpush2.bf16.xpose.msra.mxu0 0
      %586 = vmatprep.subr.bf16.mxu0 0
      %587 = vmatpush2.bf16.xpose.msra.mxu0 0
      %588 = vmatprep.subr.bf16.mxu0 0
      %589 = vmatpush2.bf16.xpose.msra.mxu0 0
      %590 = vmatprep.subr.bf16.mxu0 0
      %591 = vmatpush2.bf16.xpose.msra.mxu0 0
      %592 = vmatprep.subr.bf16.mxu0 0
      %593 = vmatpush2.bf16.xpose.msra.mxu0 0
      %594 = vmatprep.mubr.bf16.mxu0 0
      %595 = vmatmul.mubr.bf16.gmra.mxu0 %v557
      %v596 = vpop.f32.mrf.mxu0
      %v597 = vadd.f32 0.0, %v596
      %v598 = vpop.f32.mrf.mxu0
      %v599 = vpop.f32.mrf.mxu0
      %v600 = vpop.f32.mrf.mxu0
      %601 = vdwg.mxu0
      %v602 = vsel %vm269, %v597, -inf
      %603 = vmax.xlane.f32.xlu0 %v602
      %v604 = vpop.xlane.xlu0 %603
      %v605 = vsub.f32 %v597, %v604
      %v606 = vmul.f32 %v605, 1.442695
      %v607 = vpow.pop %v606
      %v608 = vsel %vm269, %v607, 0.0
      %609 = vadd.xlane.f32.xlu0 %v608
      %v610 = vpop.xlane.xlu0 %609
      %v611 = vrcp.pop %v610
      %v612 = vmul.f32 %v607, %v611
      %v613 = vpack.c.bf16 %v612, %v612
      %614 = vrot.lane.b32.xlu0 %v221, 32
      %v615 = vpop.permute.xlu0 %614
      %v617 = vsel %vm269, %v613, 0
      %v620 = vsel %vm285, %v615, 0
      %622 = vmatprep.subr.bf16.mxu0 0
      %623 = vmatpush1.bf16.msra.mxu0 0
      %624 = vmatprep.subr.bf16.mxu0 0
      %625 = vmatpush1.bf16.msra.mxu0 0
      %626 = vmatprep.subr.bf16.mxu0 0
      %627 = vmatpush1.bf16.msra.mxu0 0
      %628 = vmatprep.subr.bf16.mxu0 0
      %629 = vmatpush1.bf16.msra.mxu0 0
      %630 = vmatprep.subr.bf16.mxu0 0
      %631 = vmatpush1.bf16.msra.mxu0 0
      %632 = vmatprep.subr.bf16.mxu0 0
      %633 = vmatpush1.bf16.msra.mxu0 0
      %634 = vmatprep.subr.bf16.mxu0 0
      %635 = vmatpush1.bf16.msra.mxu0 0
      %636 = vmatprep.subr.bf16.mxu0 0
      %637 = vmatpush1.bf16.msra.mxu0 %v620
      %638 = vmatprep.subr.bf16.mxu0 0
      %639 = vmatpush2.bf16.msra.mxu0 0
      %640 = vmatprep.subr.bf16.mxu0 0
      %641 = vmatpush2.bf16.msra.mxu0 0
      %642 = vmatprep.subr.bf16.mxu0 0
      %643 = vmatpush2.bf16.msra.mxu0 0
      %644 = vmatprep.subr.bf16.mxu0 0
      %645 = vmatpush2.bf16.msra.mxu0 0
      %646 = vmatprep.subr.bf16.mxu0 0
      %647 = vmatpush2.bf16.msra.mxu0 0
      %648 = vmatprep.subr.bf16.mxu0 0
      %649 = vmatpush2.bf16.msra.mxu0 0
      %650 = vmatprep.subr.bf16.mxu0 0
      %651 = vmatpush2.bf16.msra.mxu0 0
      %652 = vmatprep.subr.bf16.mxu0 0
      %653 = vmatpush2.bf16.msra.mxu0 0
      %654 = vmatprep.mubr.bf16.mxu0 0
      %655 = vmatmul.mubr.bf16.gmra.mxu0 %v617
      %v656 = vpop.f32.mrf.mxu0
      %v657 = vadd.f32 0.0, %v656
      %v658 = vpop.f32.mrf.mxu0
      %v659 = vpop.f32.mrf.mxu0
      %v660 = vpop.f32.mrf.mxu0
      %661 = vdwg.mxu0
      %663 = vrot.lane.b32.xlu0 %v437, 32
      %v664 = vpop.permute.xlu0 %663
      %667 = vrot.lane.b32.xlu0 %v547, 64
      %v668 = vpop.permute.xlu0 %667
      %671 = vrot.lane.b32.xlu0 %v657, 96
      %v672 = vpop.permute.xlu0 %671
      %v674 = vsel %vm222, %v324, %v664
      %vm675 = vcmask 523264
      %v676 = vsel %vm675, %v674, %v668
      %vm677 = vcmask 785408
      %v678 = vsel %vm677, %v676, %v672
      %679 = vst [vmem:[%s214] sm:$0xff] %v678
      %p680 = scmp.lt.s32.totalorder %s14, 1
      %s681 = scalar_select %p680, %s14, 1
      %s682 = smul.addr %s681, 8
      %s683 = scalar_lea.vmem %s3, %s682
      // Predicated region
      $region33: #{transformer_decoder_layer.10} parent=31 // pred_check
        %p684 = pneg %p110
      $region34: #{transformer_decoder_layer.10} parent=31 // pred_check_branch
        %686 = sbr.rel (%p684) target = $region36
      $region35: #{transformer_decoder_layer.10} parent=31 // pred_region
        _
      $region36: #{transformer_decoder_layer.10} parent=31 // pred_fallthru
        _
    $region32: #{transformer_decoder_layer.10} parent=5 // pred_fallthru
      _
    %p687 = scmp.le.s32.totalorder 2, %s9
    // Predicated region
    $region37: #{transformer_decoder_layer.10} parent=5 // pred_check
      %p688 = pneg %p687
    $region38: #{transformer_decoder_layer.10} parent=5 // pred_check_branch
      %690 = sbr.rel (%p688) target = $region40
    $region39: #{transformer_decoder_layer.10} parent=5 // pred_region
      %s691 = ssub.s32 %s9, 2
      // Predicated region
      $region41: #{transformer_decoder_layer.10} parent=39 // pred_check
        %p692 = pneg %p116
      $region42: #{transformer_decoder_layer.10} parent=39 // pred_check_branch
        %694 = sbr.rel (%p692) target = $region44
      $region43: #{transformer_decoder_layer.10} parent=39 // pred_region
        %p695 = scmp.lt.s32.totalorder %s15, 1
        %s696 = scalar_select %p695, %s15, 1
        %s697 = smul.addr %s696, 8
        %s698 = scalar_lea.vmem %s3, %s697
      $region44: #{transformer_decoder_layer.10} parent=39 // pred_fallthru
        _
    $region40: #{transformer_decoder_layer.10} parent=5 // pred_fallthru
      _
  $region6: #{transformer_decoder_layer.10} parent=0 // loop_footer
    %s13 = sadd.s32 1, %s9
  $region7: #{transformer_decoder_layer.10} parent=0 // loop_footer_branch
    %8 = sbr.rel target = $region3
  $region8: #{transformer_decoder_layer.10} parent=0 // loop_exit
    _

// kernel: transformer_decoder_layer.11
$region0: #{transformer_decoder_layer.11}
  #allocation0 [shape = 'u32[]', space=smem, size = 0x4, offset = 0x4, fixed_abs, tag = 'smem constant byte address 0x4 - core index']
  #allocation1 [shape = 'u32[144,128]{1,0:T(1,128)}', space=vmem, size = 0x12000, scoped, tag = 'internal scratch']
  %s0 = inlined_call_operand.vmem [shape: f32[16,128], index: 0, kind: input, shape index: {}]
  %s1 = inlined_call_operand.vmem [shape: bf16[128,128], index: 1, kind: input, shape index: {}]
  %s2 = inlined_call_operand.vmem [shape: f32[16,128], index: 2, kind: input, shape index: {}]
  %s3 = inlined_call_operand.vmem [shape: f32[16,128], index: 3, kind: output, shape index: {}]
  %s4 = sld [smem:[#allocation0]]
  $region22: #{transformer_decoder_layer.11} parent=0
    _
  %s6 = ssub.s32 1, %s4
  %s7 = scalar_select 0, %s6, %s4
  // Predicated region
  $region2: #{transformer_decoder_layer.11} parent=0 // pred_check
    _
  $region3: #{transformer_decoder_layer.11} parent=0 // pred_check_branch
    %9 = sbr.rel (0) target = $region5
  $region4: #{transformer_decoder_layer.11} parent=0 // pred_region
    _
  $region5: #{transformer_decoder_layer.11} parent=0 // pred_fallthru
    _
  // Predicated region
  $region6: #{transformer_decoder_layer.11} parent=0 // pred_check
    _
  $region7: #{transformer_decoder_layer.11} parent=0 // pred_check_branch
    %11 = sbr.rel (0) target = $region9
  $region8: #{transformer_decoder_layer.11} parent=0 // pred_region
    _
  $region9: #{transformer_decoder_layer.11} parent=0 // pred_fallthru
    _
  // Predicated region
  $region10: #{transformer_decoder_layer.11} parent=0 // pred_check
    _
  $region11: #{transformer_decoder_layer.11} parent=0 // pred_check_branch
    %13 = sbr.rel (0) target = $region13
  $region12: #{transformer_decoder_layer.11} parent=0 // pred_region
    _
  $region13: #{transformer_decoder_layer.11} parent=0 // pred_fallthru
    _
  %v15 = vld [vmem:[%s0] sm:$0xff]
  %v16 = vld [vmem:[%s0 + $0x8] sm:$0xff]
  %v17 = vpack.c.bf16 %v16, %v15
  %v18 = vld [vmem:[%s1] sm:$0xf]
  %v19 = vld [vmem:[%s1 + $0x4] sm:$0xf]
  %v20 = vld [vmem:[%s1 + $0x8] sm:$0xf]
  %v21 = vld [vmem:[%s1 + $0xc] sm:$0xf]
  %v22 = vld [vmem:[%s1 + $0x10] sm:$0xf]
  %v23 = vld [vmem:[%s1 + $0x14] sm:$0xf]
  %v24 = vld [vmem:[%s1 + $0x18] sm:$0xf]
  %v25 = vld [vmem:[%s1 + $0x1c] sm:$0xf]
  %v26 = vld [vmem:[%s1 + $0x20] sm:$0xf]
  %v27 = vld [vmem:[%s1 + $0x24] sm:$0xf]
  %v28 = vld [vmem:[%s1 + $0x28] sm:$0xf]
  %v29 = vld [vmem:[%s1 + $0x2c] sm:$0xf]
  %v30 = vld [vmem:[%s1 + $0x30] sm:$0xf]
  %v31 = vld [vmem:[%s1 + $0x34] sm:$0xf]
  %v32 = vld [vmem:[%s1 + $0x38] sm:$0xf]
  %v33 = vld [vmem:[%s1 + $0x3c] sm:$0xf]
  %v34 = vld [vmem:[%s2] sm:$0xff]
  %v35 = vld [vmem:[%s2 + $0x8] sm:$0xff]
  %v52 = vunpack.c.l.b16 %v18
  %v53 = vunpack.c.l.b16 %v19
  %v54 = vunpack.c.l.b16 %v20
  %v55 = vunpack.c.l.b16 %v21
  %v56 = vunpack.c.l.b16 %v22
  %v57 = vunpack.c.l.b16 %v23
  %v58 = vunpack.c.l.b16 %v24
  %v59 = vunpack.c.l.b16 %v25
  %v60 = vunpack.c.l.b16 %v26
  %v61 = vunpack.c.l.b16 %v27
  %v62 = vunpack.c.l.b16 %v28
  %v63 = vunpack.c.l.b16 %v29
  %v64 = vunpack.c.l.b16 %v30
  %v65 = vunpack.c.l.b16 %v31
  %v66 = vunpack.c.l.b16 %v32
  %v67 = vunpack.c.l.b16 %v33
  %v68 = vpack.c.b16 %v53, %v52
  %v69 = vpack.c.b16 %v55, %v54
  %v70 = vpack.c.b16 %v57, %v56
  %v71 = vpack.c.b16 %v59, %v58
  %v72 = vpack.c.b16 %v61, %v60
  %v73 = vpack.c.b16 %v63, %v62
  %v74 = vpack.c.b16 %v65, %v64
  %v75 = vpack.c.b16 %v67, %v66
  %84 = vmatprep.subr.bf16.mxu0 0
  %85 = vmatpush1.bf16.msra.mxu0 %v75
  %86 = vmatprep.subr.bf16.mxu0 0
  %87 = vmatpush1.bf16.msra.mxu0 %v74
  %88 = vmatprep.subr.bf16.mxu0 0
  %89 = vmatpush1.bf16.msra.mxu0 %v73
  %90 = vmatprep.subr.bf16.mxu0 0
  %91 = vmatpush1.bf16.msra.mxu0 %v72
  %92 = vmatprep.subr.bf16.mxu0 0
  %93 = vmatpush1.bf16.msra.mxu0 %v71
  %94 = vmatprep.subr.bf16.mxu0 0
  %95 = vmatpush1.bf16.msra.mxu0 %v70
  %96 = vmatprep.subr.bf16.mxu0 0
  %97 = vmatpush1.bf16.msra.mxu0 %v69
  %98 = vmatprep.subr.bf16.mxu0 0
  %99 = vmatpush1.bf16.msra.mxu0 %v68
  %100 = vmatprep.subr.bf16.mxu0 0
  %101 = vmatpush2.bf16.msra.mxu0 0
  %102 = vmatprep.subr.bf16.mxu0 0
  %103 = vmatpush2.bf16.msra.mxu0 0
  %104 = vmatprep.subr.bf16.mxu0 0
  %105 = vmatpush2.bf16.msra.mxu0 0
  %106 = vmatprep.subr.bf16.mxu0 0
  %107 = vmatpush2.bf16.msra.mxu0 0
  %108 = vmatprep.subr.bf16.mxu0 0
  %109 = vmatpush2.bf16.msra.mxu0 0
  %110 = vmatprep.subr.bf16.mxu0 0
  %111 = vmatpush2.bf16.msra.mxu0 0
  %112 = vmatprep.subr.bf16.mxu0 0
  %113 = vmatpush2.bf16.msra.mxu0 0
  %114 = vmatprep.subr.bf16.mxu0 0
  %115 = vmatpush2.bf16.msra.mxu0 0
  %116 = vmatprep.mubr.bf16.mxu0 0
  %117 = vmatmul.mubr.bf16.gmra.mxu0 %v17
  %v118 = vpop.f32.mrf.mxu0
  %v119 = vadd.f32 %v34, %v118
  %v120 = vpop.f32.mrf.mxu0
  %v121 = vpop.f32.mrf.mxu0
  %v122 = vadd.f32 %v35, %v121
  %v123 = vpop.f32.mrf.mxu0
  %124 = vdwg.mxu0
  %125 = vst [vmem:[%s3] sm:$0xff] %v119
  %126 = vst [vmem:[%s3 + $0x8] sm:$0xff] %v122
  // Predicated region
  $region14: #{transformer_decoder_layer.11} parent=0 // pred_check
    _
  $region15: #{transformer_decoder_layer.11} parent=0 // pred_check_branch
    %128 = sbr.rel (0) target = $region17
  $region16: #{transformer_decoder_layer.11} parent=0 // pred_region
    _
  $region17: #{transformer_decoder_layer.11} parent=0 // pred_fallthru
    _
  // Predicated region
  $region18: #{transformer_decoder_layer.11} parent=0 // pred_check
    _
  $region19: #{transformer_decoder_layer.11} parent=0 // pred_check_branch
    %130 = sbr.rel (0) target = $region21
  $region20: #{transformer_decoder_layer.11} parent=0 // pred_region
    _
  $region21: #{transformer_decoder_layer.11} parent=0 // pred_fallthru
    _

// kernel: transformer_decoder_layer.12
$region0: #{transformer_decoder_layer.12}
  #allocation0 [shape = 'u32[]', space=smem, size = 0x4, offset = 0x4, fixed_abs, tag = 'smem constant byte address 0x4 - core index']
  #allocation1 [shape = 'u32[144,128]{1,0:T(1,128)}', space=vmem, size = 0x12000, scoped, tag = 'internal scratch']
  %s0 = inlined_call_operand.vmem [shape: f32[16,128], index: 0, kind: input, shape index: {}]
  %s1 = inlined_call_operand.vmem [shape: f32[16,128], index: 1, kind: input, shape index: {}]
  %s2 = inlined_call_operand.vmem [shape: f32[1,128], index: 2, kind: input, shape index: {}]
  %s3 = inlined_call_operand.vmem [shape: f32[1,128], index: 3, kind: input, shape index: {}]
  %s4 = inlined_call_operand.vmem [shape: bf16[128,128], index: 4, kind: input, shape index: {}]
  %s5 = inlined_call_operand.vmem [shape: f32[16,128], index: 5, kind: output, shape index: {}]
  %s6 = sld [smem:[#allocation0]]
  $region30: #{transformer_decoder_layer.12} parent=0
    _
  %s8 = ssub.s32 1, %s6
  %s9 = scalar_select 0, %s8, %s6
  // Predicated region
  $region2: #{transformer_decoder_layer.12} parent=0 // pred_check
    _
  $region3: #{transformer_decoder_layer.12} parent=0 // pred_check_branch
    %11 = sbr.rel (0) target = $region5
  $region4: #{transformer_decoder_layer.12} parent=0 // pred_region
    _
  $region5: #{transformer_decoder_layer.12} parent=0 // pred_fallthru
    _
  // Predicated region
  $region6: #{transformer_decoder_layer.12} parent=0 // pred_check
    _
  $region7: #{transformer_decoder_layer.12} parent=0 // pred_check_branch
    %13 = sbr.rel (0) target = $region9
  $region8: #{transformer_decoder_layer.12} parent=0 // pred_region
    _
  $region9: #{transformer_decoder_layer.12} parent=0 // pred_fallthru
    _
  // Predicated region
  $region10: #{transformer_decoder_layer.12} parent=0 // pred_check
    _
  $region11: #{transformer_decoder_layer.12} parent=0 // pred_check_branch
    %15 = sbr.rel (0) target = $region13
  $region12: #{transformer_decoder_layer.12} parent=0 // pred_region
    _
  $region13: #{transformer_decoder_layer.12} parent=0 // pred_fallthru
    _
  // Predicated region
  $region14: #{transformer_decoder_layer.12} parent=0 // pred_check
    _
  $region15: #{transformer_decoder_layer.12} parent=0 // pred_check_branch
    %17 = sbr.rel (0) target = $region17
  $region16: #{transformer_decoder_layer.12} parent=0 // pred_region
    _
  $region17: #{transformer_decoder_layer.12} parent=0 // pred_fallthru
    _
  // Predicated region
  $region18: #{transformer_decoder_layer.12} parent=0 // pred_check
    _
  $region19: #{transformer_decoder_layer.12} parent=0 // pred_check_branch
    %19 = sbr.rel (0) target = $region21
  $region20: #{transformer_decoder_layer.12} parent=0 // pred_region
    _
  $region21: #{transformer_decoder_layer.12} parent=0 // pred_fallthru
    _
  %v21 = vld [vmem:[%s0] sm:$0xff]
  %v22 = vld [vmem:[%s0 + $0x8] sm:$0xff]
  %23 = vadd.xlane.f32.xlu0 %v21
  %v24 = vpop.xlane.xlu0 %23
  %25 = vadd.xlane.f32.xlu0 %v22
  %v26 = vpop.xlane.xlu0 %25
  %v27 = vrcp.pop 128.0
  %v28 = vmul.f32 %v24, %v27
  %v29 = vmul.f32 %v26, %v27
  %v30 = vsub.f32 %v21, %v28
  %v31 = vsub.f32 %v22, %v29
  %v32 = vmul.f32 %v30, %v30
  %v33 = vmul.f32 %v31, %v31
  %34 = vadd.xlane.f32.xlu0 %v32
  %v35 = vpop.xlane.xlu0 %34
  %36 = vadd.xlane.f32.xlu0 %v33
  %v37 = vpop.xlane.xlu0 %36
  %v38 = vmul.f32 %v35, %v27
  %v39 = vmul.f32 %v37, %v27
  %v40 = vadd.f32 %v38, 1e-05
  %v41 = vadd.f32 %v39, 1e-05
  %v42 = vrsqrt.pop %v40
  %v43 = vrsqrt.pop %v41
  %v44 = vmul.f32 %v30, %v42
  %v45 = vmul.f32 %v31, %v43
  %v46 = vld [vmem:[%s2] sm:$0x1]
  %v48 = vlaneseq
  %v49 = vshrl.u32 %v48, 7
  %v50 = vsub.s32 0, %v49
  %v51 = vrot.slane %v46, %v50
  %v53 = vmul.f32 %v44, %v51
  %v54 = vmul.f32 %v45, %v51
  %v55 = vld [vmem:[%s3] sm:$0x1]
  %v57 = vlaneseq
  %v58 = vshrl.u32 %v57, 7
  %v59 = vsub.s32 0, %v58
  %v60 = vrot.slane %v55, %v59
  %v62 = vadd.f32 %v53, %v60
  %v63 = vadd.f32 %v54, %v60
  %v64 = vld [vmem:[%s1] sm:$0xff]
  %v65 = vld [vmem:[%s1 + $0x8] sm:$0xff]
  %v66 = vadd.f32 %v62, %v64
  %v67 = vadd.f32 %v63, %v65
  %v68 = vpack.c.bf16 %v67, %v66
  %v69 = vld [vmem:[%s4] sm:$0xf]
  %v70 = vld [vmem:[%s4 + $0x4] sm:$0xf]
  %v71 = vld [vmem:[%s4 + $0x8] sm:$0xf]
  %v72 = vld [vmem:[%s4 + $0xc] sm:$0xf]
  %v73 = vld [vmem:[%s4 + $0x10] sm:$0xf]
  %v74 = vld [vmem:[%s4 + $0x14] sm:$0xf]
  %v75 = vld [vmem:[%s4 + $0x18] sm:$0xf]
  %v76 = vld [vmem:[%s4 + $0x1c] sm:$0xf]
  %v77 = vld [vmem:[%s4 + $0x20] sm:$0xf]
  %v78 = vld [vmem:[%s4 + $0x24] sm:$0xf]
  %v79 = vld [vmem:[%s4 + $0x28] sm:$0xf]
  %v80 = vld [vmem:[%s4 + $0x2c] sm:$0xf]
  %v81 = vld [vmem:[%s4 + $0x30] sm:$0xf]
  %v82 = vld [vmem:[%s4 + $0x34] sm:$0xf]
  %v83 = vld [vmem:[%s4 + $0x38] sm:$0xf]
  %v84 = vld [vmem:[%s4 + $0x3c] sm:$0xf]
  %v101 = vunpack.c.l.b16 %v69
  %v102 = vunpack.c.l.b16 %v70
  %v103 = vunpack.c.l.b16 %v71
  %v104 = vunpack.c.l.b16 %v72
  %v105 = vunpack.c.l.b16 %v73
  %v106 = vunpack.c.l.b16 %v74
  %v107 = vunpack.c.l.b16 %v75
  %v108 = vunpack.c.l.b16 %v76
  %v109 = vunpack.c.l.b16 %v77
  %v110 = vunpack.c.l.b16 %v78
  %v111 = vunpack.c.l.b16 %v79
  %v112 = vunpack.c.l.b16 %v80
  %v113 = vunpack.c.l.b16 %v81
  %v114 = vunpack.c.l.b16 %v82
  %v115 = vunpack.c.l.b16 %v83
  %v116 = vunpack.c.l.b16 %v84
  %v117 = vpack.c.b16 %v102, %v101
  %v118 = vpack.c.b16 %v104, %v103
  %v119 = vpack.c.b16 %v106, %v105
  %v120 = vpack.c.b16 %v108, %v107
  %v121 = vpack.c.b16 %v110, %v109
  %v122 = vpack.c.b16 %v112, %v111
  %v123 = vpack.c.b16 %v114, %v113
  %v124 = vpack.c.b16 %v116, %v115
  %133 = vmatprep.subr.bf16.mxu0 0
  %134 = vmatpush1.bf16.msra.mxu0 %v124
  %135 = vmatprep.subr.bf16.mxu0 0
  %136 = vmatpush1.bf16.msra.mxu0 %v123
  %137 = vmatprep.subr.bf16.mxu0 0
  %138 = vmatpush1.bf16.msra.mxu0 %v122
  %139 = vmatprep.subr.bf16.mxu0 0
  %140 = vmatpush1.bf16.msra.mxu0 %v121
  %141 = vmatprep.subr.bf16.mxu0 0
  %142 = vmatpush1.bf16.msra.mxu0 %v120
  %143 = vmatprep.subr.bf16.mxu0 0
  %144 = vmatpush1.bf16.msra.mxu0 %v119
  %145 = vmatprep.subr.bf16.mxu0 0
  %146 = vmatpush1.bf16.msra.mxu0 %v118
  %147 = vmatprep.subr.bf16.mxu0 0
  %148 = vmatpush1.bf16.msra.mxu0 %v117
  %149 = vmatprep.subr.bf16.mxu0 0
  %150 = vmatpush2.bf16.msra.mxu0 0
  %151 = vmatprep.subr.bf16.mxu0 0
  %152 = vmatpush2.bf16.msra.mxu0 0
  %153 = vmatprep.subr.bf16.mxu0 0
  %154 = vmatpush2.bf16.msra.mxu0 0
  %155 = vmatprep.subr.bf16.mxu0 0
  %156 = vmatpush2.bf16.msra.mxu0 0
  %157 = vmatprep.subr.bf16.mxu0 0
  %158 = vmatpush2.bf16.msra.mxu0 0
  %159 = vmatprep.subr.bf16.mxu0 0
  %160 = vmatpush2.bf16.msra.mxu0 0
  %161 = vmatprep.subr.bf16.mxu0 0
  %162 = vmatpush2.bf16.msra.mxu0 0
  %163 = vmatprep.subr.bf16.mxu0 0
  %164 = vmatpush2.bf16.msra.mxu0 0
  %165 = vmatprep.mubr.bf16.mxu0 0
  %166 = vmatmul.mubr.bf16.gmra.mxu0 %v68
  %v167 = vpop.f32.mrf.mxu0
  %v168 = vadd.f32 0.0, %v167
  %v169 = vpop.f32.mrf.mxu0
  %v170 = vpop.f32.mrf.mxu0
  %v171 = vadd.f32 0.0, %v170
  %v172 = vpop.f32.mrf.mxu0
  %173 = vdwg.mxu0
  %174 = vst [vmem:[%s5] sm:$0xff] %v168
  %175 = vst [vmem:[%s5 + $0x8] sm:$0xff] %v171
  // Predicated region
  $region22: #{transformer_decoder_layer.12} parent=0 // pred_check
    _
  $region23: #{transformer_decoder_layer.12} parent=0 // pred_check_branch
    %177 = sbr.rel (0) target = $region25
  $region24: #{transformer_decoder_layer.12} parent=0 // pred_region
    _
  $region25: #{transformer_decoder_layer.12} parent=0 // pred_fallthru
    _
  // Predicated region
  $region26: #{transformer_decoder_layer.12} parent=0 // pred_check
    _
  $region27: #{transformer_decoder_layer.12} parent=0 // pred_check_branch
    %179 = sbr.rel (0) target = $region29
  $region28: #{transformer_decoder_layer.12} parent=0 // pred_region
    _
  $region29: #{transformer_decoder_layer.12} parent=0 // pred_fallthru
    _

// kernel: transformer_decoder_layer.14
$region0: #{transformer_decoder_layer.14}
  #allocation0 [shape = 'u32[]', space=smem, size = 0x4, offset = 0x4, fixed_abs, tag = 'smem constant byte address 0x4 - core index']
  #allocation1 [shape = 'u32[144,128]{1,0:T(1,128)}', space=vmem, size = 0x12000, scoped, tag = 'internal scratch']
  %s0 = inlined_call_operand.vmem [shape: f32[2,8,128], index: 0, kind: input, shape index: {}]
  %s1 = inlined_call_operand.vmem [shape: f32[2,8,256], index: 1, kind: input, shape index: {}, may-alias: {1,2}]
  %s2 = inlined_call_operand.vmem [shape: f32[2,8,256], index: 2, kind: input, shape index: {}, may-alias: {1,2}]
  %s3 = inlined_call_operand.vmem [shape: f32[2,8,128], index: 3, kind: output, shape index: {}]
  %s4 = sld [smem:[#allocation0]]
  $region45: #{transformer_decoder_layer.14} parent=0
    _
  %s6 = ssub.s32 1, %s4
  %s7 = scalar_select 0, %s6, %s4
  loop: start=0, step=1, limit=4
  $region2: #{transformer_decoder_layer.14} parent=0 // loop_pre_header
    _
  $region3: #{transformer_decoder_layer.14} parent=0 // loop_header
    %s9 = sphi 0, %s13
    %p10 = scmp.ge.s32.totalorder %s9, 4
    %s19 = sphi 0, %s21
    %s22 = sphi 0, %s19
    %s23 = sphi 0, %s22
    %s39 = sphi 0, %s23
    %s45 = sphi 0, %s47
    %s48 = sphi 0, %s45
    %s49 = sphi 0, %s48
    %s65 = sphi 0, %s49
    %s71 = sphi 0, %s73
    %s74 = sphi 0, %s71
    %s75 = sphi 0, %s74
    %s91 = sphi 0, %s75
    %s97 = sphi 0, %s99
    %s100 = sphi 0, %s97
    %s101 = sphi 0, %s100
    %s117 = sphi 0, %s101
  $region4: #{transformer_decoder_layer.14} parent=0 // loop_header_branch
    %12 = sbr.rel (%p10) target = $region8
  $region5: #{transformer_decoder_layer.14} parent=0 // loop_body
    %s14 = ssub.s32 %s9, 1
    %s15 = ssub.s32 %s9, 2
    %s16 = sadd.s32 %s9, 1
    %s17 = ssub.s32 %s9, %s16
    %p18 = scmp.eq.s32.totalorder %s17, 0
    %s20 = sadd.s32 %s19, 1
    %s21 = scalar_select %p18, %s19, %s20
    %p24 = pneg %p18
    %p25 = scmp.eq.s32.totalorder %s9, 1
    %p26 = por %p24, %p25
    %p27 = scmp.ne.s32.totalorder %s19, %s22
    %p28 = scmp.eq.s32.totalorder %s9, 0
    %p29 = por %p27, %p28
    %p30 = scmp.ne.s32.totalorder %s19, %s22
    %p31 = scmp.eq.s32.totalorder %s14, 1
    %p32 = por %p30, %p31
    %p33 = scmp.ne.s32.totalorder %s22, %s23
    %p34 = scmp.eq.s32.totalorder %s14, 0
    %p35 = por %p33, %p34
    %p36 = scmp.ne.s32.totalorder %s22, %s23
    %p37 = scmp.eq.s32.totalorder %s15, 1
    %p38 = por %p36, %p37
    %p40 = scmp.ne.s32.totalorder %s23, %s39
    %p41 = scmp.eq.s32.totalorder %s15, 0
    %p42 = por %p40, %p41
    %s43 = ssub.s32 %s9, %s16
    %p44 = scmp.eq.s32.totalorder %s43, 0
    %s46 = sadd.s32 %s45, 1
    %s47 = scalar_select %p44, %s45, %s46
    %p50 = pneg %p44
    %p51 = scmp.eq.s32.totalorder %s9, 1
    %p52 = por %p50, %p51
    %p53 = scmp.ne.s32.totalorder %s45, %s48
    %p54 = scmp.eq.s32.totalorder %s9, 0
    %p55 = por %p53, %p54
    %p56 = scmp.ne.s32.totalorder %s45, %s48
    %p57 = scmp.eq.s32.totalorder %s14, 1
    %p58 = por %p56, %p57
    %p59 = scmp.ne.s32.totalorder %s48, %s49
    %p60 = scmp.eq.s32.totalorder %s14, 0
    %p61 = por %p59, %p60
    %p62 = scmp.ne.s32.totalorder %s48, %s49
    %p63 = scmp.eq.s32.totalorder %s15, 1
    %p64 = por %p62, %p63
    %p66 = scmp.ne.s32.totalorder %s49, %s65
    %p67 = scmp.eq.s32.totalorder %s15, 0
    %p68 = por %p66, %p67
    %s69 = ssub.s32 %s9, %s16
    %p70 = scmp.eq.s32.totalorder %s69, 0
    %s72 = sadd.s32 %s71, 1
    %s73 = scalar_select %p70, %s71, %s72
    %p76 = pneg %p70
    %p77 = scmp.eq.s32.totalorder %s9, 1
    %p78 = por %p76, %p77
    %p79 = scmp.ne.s32.totalorder %s71, %s74
    %p80 = scmp.eq.s32.totalorder %s9, 0
    %p81 = por %p79, %p80
    %p82 = scmp.ne.s32.totalorder %s71, %s74
    %p83 = scmp.eq.s32.totalorder %s14, 1
    %p84 = por %p82, %p83
    %p85 = scmp.ne.s32.totalorder %s74, %s75
    %p86 = scmp.eq.s32.totalorder %s14, 0
    %p87 = por %p85, %p86
    %p88 = scmp.ne.s32.totalorder %s74, %s75
    %p89 = scmp.eq.s32.totalorder %s15, 1
    %p90 = por %p88, %p89
    %p92 = scmp.ne.s32.totalorder %s75, %s91
    %p93 = scmp.eq.s32.totalorder %s15, 0
    %p94 = por %p92, %p93
    %s95 = ssub.s32 %s9, %s16
    %p96 = scmp.eq.s32.totalorder %s95, 0
    %s98 = sadd.s32 %s97, 1
    %s99 = scalar_select %p96, %s97, %s98
    %p102 = pneg %p96
    %p103 = scmp.eq.s32.totalorder %s9, 1
    %p104 = por %p102, %p103
    %p105 = scmp.ne.s32.totalorder %s97, %s100
    %p106 = scmp.eq.s32.totalorder %s9, 0
    %p107 = por %p105, %p106
    %p108 = scmp.ne.s32.totalorder %s97, %s100
    %p109 = scmp.eq.s32.totalorder %s14, 1
    %p110 = por %p108, %p109
    %p111 = scmp.ne.s32.totalorder %s100, %s101
    %p112 = scmp.eq.s32.totalorder %s14, 0
    %p113 = por %p111, %p112
    %p114 = scmp.ne.s32.totalorder %s100, %s101
    %p115 = scmp.eq.s32.totalorder %s15, 1
    %p116 = por %p114, %p115
    %p118 = scmp.ne.s32.totalorder %s101, %s117
    %p119 = scmp.eq.s32.totalorder %s15, 0
    %p120 = por %p118, %p119
    %p121 = scmp.le.s32.totalorder 1, %s9
    %p122 = scmp.lt.s32.totalorder %s9, 3
    %p123 = pnand %p121, %p122
    %p124 = pneg %p123
    // Predicated region
    $region9: #{transformer_decoder_layer.14} parent=5 // pred_check
      _
    $region10: #{transformer_decoder_layer.14} parent=5 // pred_check_branch
      %126 = sbr.rel (%p123) target = $region12
    $region11: #{transformer_decoder_layer.14} parent=5 // pred_region
      %s127 = ssub.s32 %s9, 1
    $region12: #{transformer_decoder_layer.14} parent=5 // pred_fallthru
      _
    %p128 = scmp.lt.s32.totalorder %s9, 2
    // Predicated region
    $region13: #{transformer_decoder_layer.14} parent=5 // pred_check
      %p129 = pneg %p128
    $region14: #{transformer_decoder_layer.14} parent=5 // pred_check_branch
      %131 = sbr.rel (%p129) target = $region16
    $region15: #{transformer_decoder_layer.14} parent=5 // pred_region
      // Predicated region
      $region17: #{transformer_decoder_layer.14} parent=15 // pred_check
        %p132 = pneg %p29
      $region18: #{transformer_decoder_layer.14} parent=15 // pred_check_branch
        %134 = sbr.rel (%p132) target = $region20
      $region19: #{transformer_decoder_layer.14} parent=15 // pred_region
        %p135 = scmp.lt.s32.totalorder %s9, 1
        %s136 = scalar_select %p135, %s9, 1
        %s137 = smul.addr %s136, 8
        %s138 = scalar_lea.vmem %s0, %s137
      $region20: #{transformer_decoder_layer.14} parent=15 // pred_fallthru
        _
      // Predicated region
      $region21: #{transformer_decoder_layer.14} parent=15 // pred_check
        %p139 = pneg %p55
      $region22: #{transformer_decoder_layer.14} parent=15 // pred_check_branch
        %141 = sbr.rel (%p139) target = $region24
      $region23: #{transformer_decoder_layer.14} parent=15 // pred_region
        %p142 = scmp.lt.s32.totalorder %s9, 1
        %s143 = scalar_select %p142, %s9, 1
        %s144 = smul.addr %s143, 2
        %s145 = smul.addr %s144, 8
        %s146 = scalar_lea.vmem %s1, %s145
      $region24: #{transformer_decoder_layer.14} parent=15 // pred_fallthru
        _
      // Predicated region
      $region25: #{transformer_decoder_layer.14} parent=15 // pred_check
        %p147 = pneg %p81
      $region26: #{transformer_decoder_layer.14} parent=15 // pred_check_branch
        %149 = sbr.rel (%p147) target = $region28
      $region27: #{transformer_decoder_layer.14} parent=15 // pred_region
        %p150 = scmp.lt.s32.totalorder %s9, 1
        %s151 = scalar_select %p150, %s9, 1
        %s152 = smul.addr %s151, 2
        %s153 = sadd.s32 1, %s152
        %s154 = smul.addr %s153, 8
        %s155 = scalar_lea.vmem %s2, %s154
      $region28: #{transformer_decoder_layer.14} parent=15 // pred_fallthru
        _
    $region16: #{transformer_decoder_layer.14} parent=5 // pred_fallthru
      _
    %p156 = scmp.le.s32.totalorder 1, %s9
    %p157 = scmp.lt.s32.totalorder %s9, 3
    %p158 = pnand %p156, %p157
    %p159 = pneg %p158
    // Predicated region
    $region29: #{transformer_decoder_layer.14} parent=5 // pred_check
      _
    $region30: #{transformer_decoder_layer.14} parent=5 // pred_check_branch
      %161 = sbr.rel (%p158) target = $region32
    $region31: #{transformer_decoder_layer.14} parent=5 // pred_region
      %s162 = ssub.s32 %s9, 1
      %p163 = scmp.lt.s32.totalorder %s14, 1
      %s164 = scalar_select %p163, %s14, 1
      %s165 = smul.addr %s164, 8
      %s166 = scalar_lea.vmem %s0, %s165
      %p167 = pneg %p35
      %p168 = pneg %p32
      %p169 = scmp.lt.s32.totalorder %s14, 1
      %s170 = scalar_select %p169, %s14, 1
      %s171 = smul.addr %s170, 2
      %s172 = smul.addr %s171, 8
      %s173 = scalar_lea.vmem %s1, %s172
      %p174 = pneg %p61
      %p175 = pneg %p58
      %p176 = scmp.lt.s32.totalorder %s14, 1
      %s177 = scalar_select %p176, %s14, 1
      %s178 = smul.addr %s177, 2
      %s179 = sadd.s32 1, %s178
      %s180 = smul.addr %s179, 8
      %s181 = scalar_lea.vmem %s2, %s180
      %p182 = pneg %p87
      %p183 = pneg %p84
      %p184 = pneg %p113
      %p185 = pneg %p110
      %p186 = scmp.lt.s32.totalorder %s14, 1
      %s187 = scalar_select %p186, %s14, 1
      %s188 = smul.addr %s187, 8
      %s189 = scalar_lea.vmem %s3, %s188
      %p190 = scmp.lt.s32.totalorder %s14, 1
      %s191 = scalar_select %p190, %s14, 1
      %s192 = smul.addr %s191, 8
      %s193 = scalar_lea.vmem %s0, %s192
      %p194 = scmp.lt.s32.totalorder %s14, 1
      %s195 = scalar_select %p194, %s14, 1
      %s196 = smul.addr %s195, 2
      %s197 = smul.addr %s196, 8
      %s198 = scalar_lea.vmem %s1, %s197
      %p199 = scmp.lt.s32.totalorder %s14, 1
      %s200 = scalar_select %p199, %s14, 1
      %s201 = smul.addr %s200, 2
      %s202 = sadd.s32 1, %s201
      %s203 = smul.addr %s202, 8
      %s204 = scalar_lea.vmem %s2, %s203
      %p205 = scmp.lt.s32.totalorder %s14, 1
      %s206 = scalar_select %p205, %s14, 1
      %s207 = smul.addr %s206, 8
      %s208 = scalar_lea.vmem %s3, %s207
      %v210 = vld [vmem:[%s193] sm:$0xff]
      %v211 = vpack.c.bf16 %v210, %v210
      %v212 = vld [vmem:[%s198] sm:$0xff]
      %v213 = vpack.c.bf16 %v212, %v212
      %v214 = vld [vmem:[%s204] sm:$0xff]
      %v215 = vpack.c.bf16 %v214, %v214
      %vm216 = vcmask 261120
      %v218 = vsel %vm216, %v211, 0
      %v221 = vsel %vm216, %v213, 0
      %223 = vmatprep.subr.bf16.mxu0 0
      %224 = vmatpush1.bf16.xpose.msra.mxu0 0
      %225 = vmatprep.subr.bf16.mxu0 0
      %226 = vmatpush1.bf16.xpose.msra.mxu0 0
      %227 = vmatprep.subr.bf16.mxu0 0
      %228 = vmatpush1.bf16.xpose.msra.mxu0 0
      %229 = vmatprep.subr.bf16.mxu0 0
      %230 = vmatpush1.bf16.xpose.msra.mxu0 0
      %231 = vmatprep.subr.bf16.mxu0 0
      %232 = vmatpush1.bf16.xpose.msra.mxu0 0
      %233 = vmatprep.subr.bf16.mxu0 0
      %234 = vmatpush1.bf16.xpose.msra.mxu0 0
      %235 = vmatprep.subr.bf16.mxu0 0
      %236 = vmatpush1.bf16.xpose.msra.mxu0 0
      %237 = vmatprep.subr.bf16.mxu0 0
      %238 = vmatpush1.bf16.xpose.msra.mxu0 %v221
      %239 = vmatprep.subr.bf16.mxu0 0
      %240 = vmatpush2.bf16.xpose.msra.mxu0 0
      %241 = vmatprep.subr.bf16.mxu0 0
      %242 = vmatpush2.bf16.xpose.msra.mxu0 0
      %243 = vmatprep.subr.bf16.mxu0 0
      %244 = vmatpush2.bf16.xpose.msra.mxu0 0
      %245 = vmatprep.subr.bf16.mxu0 0
      %246 = vmatpush2.bf16.xpose.msra.mxu0 0
      %247 = vmatprep.subr.bf16.mxu0 0
      %248 = vmatpush2.bf16.xpose.msra.mxu0 0
      %249 = vmatprep.subr.bf16.mxu0 0
      %250 = vmatpush2.bf16.xpose.msra.mxu0 0
      %251 = vmatprep.subr.bf16.mxu0 0
      %252 = vmatpush2.bf16.xpose.msra.mxu0 0
      %253 = vmatprep.subr.bf16.mxu0 0
      %254 = vmatpush2.bf16.xpose.msra.mxu0 0
      %255 = vmatprep.mubr.bf16.mxu0 0
      %256 = vmatmul.mubr.bf16.gmra.mxu0 %v218
      %v257 = vpop.f32.mrf.mxu0
      %v258 = vadd.f32 0.0, %v257
      %v259 = vpop.f32.mrf.mxu0
      %v260 = vpop.f32.mrf.mxu0
      %v261 = vpop.f32.mrf.mxu0
      %262 = vdwg.mxu0
      %vm263 = vcmask 64512
      %v264 = vsel %vm263, %v258, -inf
      %265 = vmax.xlane.f32.xlu0 %v264
      %v266 = vpop.xlane.xlu0 %265
      %v267 = vsub.f32 %v258, %v266
      %v268 = vmul.f32 %v267, 1.442695
      %v269 = vpow.pop %v268
      %v270 = vsel %vm263, %v269, 0.0
      %271 = vadd.xlane.f32.xlu0 %v270
      %v272 = vpop.xlane.xlu0 %271
      %v273 = vrcp.pop %v272
      %v274 = vmul.f32 %v269, %v273
      %v275 = vpack.c.bf16 %v274, %v274
      %v277 = vsel %vm263, %v275, 0
      %vm279 = vcmask 1043456
      %v281 = vsel %vm279, %v215, 0
      %283 = vmatprep.subr.bf16.mxu0 0
      %284 = vmatpush1.bf16.msra.mxu0 0
      %285 = vmatprep.subr.bf16.mxu0 0
      %286 = vmatpush1.bf16.msra.mxu0 0
      %287 = vmatprep.subr.bf16.mxu0 0
      %288 = vmatpush1.bf16.msra.mxu0 0
      %289 = vmatprep.subr.bf16.mxu0 0
      %290 = vmatpush1.bf16.msra.mxu0 0
      %291 = vmatprep.subr.bf16.mxu0 0
      %292 = vmatpush1.bf16.msra.mxu0 0
      %293 = vmatprep.subr.bf16.mxu0 0
      %294 = vmatpush1.bf16.msra.mxu0 0
      %295 = vmatprep.subr.bf16.mxu0 0
      %296 = vmatpush1.bf16.msra.mxu0 0
      %297 = vmatprep.subr.bf16.mxu0 0
      %298 = vmatpush1.bf16.msra.mxu0 %v281
      %299 = vmatprep.subr.bf16.mxu0 0
      %300 = vmatpush2.bf16.msra.mxu0 0
      %301 = vmatprep.subr.bf16.mxu0 0
      %302 = vmatpush2.bf16.msra.mxu0 0
      %303 = vmatprep.subr.bf16.mxu0 0
      %304 = vmatpush2.bf16.msra.mxu0 0
      %305 = vmatprep.subr.bf16.mxu0 0
      %306 = vmatpush2.bf16.msra.mxu0 0
      %307 = vmatprep.subr.bf16.mxu0 0
      %308 = vmatpush2.bf16.msra.mxu0 0
      %309 = vmatprep.subr.bf16.mxu0 0
      %310 = vmatpush2.bf16.msra.mxu0 0
      %311 = vmatprep.subr.bf16.mxu0 0
      %312 = vmatpush2.bf16.msra.mxu0 0
      %313 = vmatprep.subr.bf16.mxu0 0
      %314 = vmatpush2.bf16.msra.mxu0 0
      %315 = vmatprep.mubr.bf16.mxu0 0
      %316 = vmatmul.mubr.bf16.gmra.mxu0 %v277
      %v317 = vpop.f32.mrf.mxu0
      %v318 = vadd.f32 0.0, %v317
      %v319 = vpop.f32.mrf.mxu0
      %v320 = vpop.f32.mrf.mxu0
      %v321 = vpop.f32.mrf.mxu0
      %322 = vdwg.mxu0
      %324 = vrot.lane.b32.xlu0 %v211, 96
      %v325 = vpop.permute.xlu0 %324
      %327 = vrot.lane.b32.xlu0 %v213, 96
      %v328 = vpop.permute.xlu0 %327
      %v330 = vsel %vm216, %v325, 0
      %v333 = vsel %vm216, %v328, 0
      %335 = vmatprep.subr.bf16.mxu0 0
      %336 = vmatpush1.bf16.xpose.msra.mxu0 0
      %337 = vmatprep.subr.bf16.mxu0 0
      %338 = vmatpush1.bf16.xpose.msra.mxu0 0
      %339 = vmatprep.subr.bf16.mxu0 0
      %340 = vmatpush1.bf16.xpose.msra.mxu0 0
      %341 = vmatprep.subr.bf16.mxu0 0
      %342 = vmatpush1.bf16.xpose.msra.mxu0 0
      %343 = vmatprep.subr.bf16.mxu0 0
      %344 = vmatpush1.bf16.xpose.msra.mxu0 0
      %345 = vmatprep.subr.bf16.mxu0 0
      %346 = vmatpush1.bf16.xpose.msra.mxu0 0
      %347 = vmatprep.subr.bf16.mxu0 0
      %348 = vmatpush1.bf16.xpose.msra.mxu0 0
      %349 = vmatprep.subr.bf16.mxu0 0
      %350 = vmatpush1.bf16.xpose.msra.mxu0 %v333
      %351 = vmatprep.subr.bf16.mxu0 0
      %352 = vmatpush2.bf16.xpose.msra.mxu0 0
      %353 = vmatprep.subr.bf16.mxu0 0
      %354 = vmatpush2.bf16.xpose.msra.mxu0 0
      %355 = vmatprep.subr.bf16.mxu0 0
      %356 = vmatpush2.bf16.xpose.msra.mxu0 0
      %357 = vmatprep.subr.bf16.mxu0 0
      %358 = vmatpush2.bf16.xpose.msra.mxu0 0
      %359 = vmatprep.subr.bf16.mxu0 0
      %360 = vmatpush2.bf16.xpose.msra.mxu0 0
      %361 = vmatprep.subr.bf16.mxu0 0
      %362 = vmatpush2.bf16.xpose.msra.mxu0 0
      %363 = vmatprep.subr.bf16.mxu0 0
      %364 = vmatpush2.bf16.xpose.msra.mxu0 0
      %365 = vmatprep.subr.bf16.mxu0 0
      %366 = vmatpush2.bf16.xpose.msra.mxu0 0
      %367 = vmatprep.mubr.bf16.mxu0 0
      %368 = vmatmul.mubr.bf16.gmra.mxu0 %v330
      %v369 = vpop.f32.mrf.mxu0
      %v370 = vadd.f32 0.0, %v369
      %v371 = vpop.f32.mrf.mxu0
      %v372 = vpop.f32.mrf.mxu0
      %v373 = vpop.f32.mrf.mxu0
      %374 = vdwg.mxu0
      %v375 = vsel %vm263, %v370, -inf
      %376 = vmax.xlane.f32.xlu0 %v375
      %v377 = vpop.xlane.xlu0 %376
      %v378 = vsub.f32 %v370, %v377
      %v379 = vmul.f32 %v378, 1.442695
      %v380 = vpow.pop %v379
      %v381 = vsel %vm263, %v380, 0.0
      %382 = vadd.xlane.f32.xlu0 %v381
      %v383 = vpop.xlane.xlu0 %382
      %v384 = vrcp.pop %v383
      %v385 = vmul.f32 %v380, %v384
      %v386 = vpack.c.bf16 %v385, %v385
      %388 = vrot.lane.b32.xlu0 %v215, 96
      %v389 = vpop.permute.xlu0 %388
      %v391 = vsel %vm263, %v386, 0
      %v394 = vsel %vm279, %v389, 0
      %396 = vmatprep.subr.bf16.mxu0 0
      %397 = vmatpush1.bf16.msra.mxu0 0
      %398 = vmatprep.subr.bf16.mxu0 0
      %399 = vmatpush1.bf16.msra.mxu0 0
      %400 = vmatprep.subr.bf16.mxu0 0
      %401 = vmatpush1.bf16.msra.mxu0 0
      %402 = vmatprep.subr.bf16.mxu0 0
      %403 = vmatpush1.bf16.msra.mxu0 0
      %404 = vmatprep.subr.bf16.mxu0 0
      %405 = vmatpush1.bf16.msra.mxu0 0
      %406 = vmatprep.subr.bf16.mxu0 0
      %407 = vmatpush1.bf16.msra.mxu0 0
      %408 = vmatprep.subr.bf16.mxu0 0
      %409 = vmatpush1.bf16.msra.mxu0 0
      %410 = vmatprep.subr.bf16.mxu0 0
      %411 = vmatpush1.bf16.msra.mxu0 %v394
      %412 = vmatprep.subr.bf16.mxu0 0
      %413 = vmatpush2.bf16.msra.mxu0 0
      %414 = vmatprep.subr.bf16.mxu0 0
      %415 = vmatpush2.bf16.msra.mxu0 0
      %416 = vmatprep.subr.bf16.mxu0 0
      %417 = vmatpush2.bf16.msra.mxu0 0
      %418 = vmatprep.subr.bf16.mxu0 0
      %419 = vmatpush2.bf16.msra.mxu0 0
      %420 = vmatprep.subr.bf16.mxu0 0
      %421 = vmatpush2.bf16.msra.mxu0 0
      %422 = vmatprep.subr.bf16.mxu0 0
      %423 = vmatpush2.bf16.msra.mxu0 0
      %424 = vmatprep.subr.bf16.mxu0 0
      %425 = vmatpush2.bf16.msra.mxu0 0
      %426 = vmatprep.subr.bf16.mxu0 0
      %427 = vmatpush2.bf16.msra.mxu0 0
      %428 = vmatprep.mubr.bf16.mxu0 0
      %429 = vmatmul.mubr.bf16.gmra.mxu0 %v391
      %v430 = vpop.f32.mrf.mxu0
      %v431 = vadd.f32 0.0, %v430
      %v432 = vpop.f32.mrf.mxu0
      %v433 = vpop.f32.mrf.mxu0
      %v434 = vpop.f32.mrf.mxu0
      %435 = vdwg.mxu0
      %436 = vrot.lane.b32.xlu0 %v211, 64
      %v437 = vpop.permute.xlu0 %436
      %438 = vrot.lane.b32.xlu0 %v213, 64
      %v439 = vpop.permute.xlu0 %438
      %v441 = vsel %vm216, %v437, 0
      %v444 = vsel %vm216, %v439, 0
      %446 = vmatprep.subr.bf16.mxu0 0
      %447 = vmatpush1.bf16.xpose.msra.mxu0 0
      %448 = vmatprep.subr.bf16.mxu0 0
      %449 = vmatpush1.bf16.xpose.msra.mxu0 0
      %450 = vmatprep.subr.bf16.mxu0 0
      %451 = vmatpush1.bf16.xpose.msra.mxu0 0
      %452 = vmatprep.subr.bf16.mxu0 0
      %453 = vmatpush1.bf16.xpose.msra.mxu0 0
      %454 = vmatprep.subr.bf16.mxu0 0
      %455 = vmatpush1.bf16.xpose.msra.mxu0 0
      %456 = vmatprep.subr.bf16.mxu0 0
      %457 = vmatpush1.bf16.xpose.msra.mxu0 0
      %458 = vmatprep.subr.bf16.mxu0 0
      %459 = vmatpush1.bf16.xpose.msra.mxu0 0
      %460 = vmatprep.subr.bf16.mxu0 0
      %461 = vmatpush1.bf16.xpose.msra.mxu0 %v444
      %462 = vmatprep.subr.bf16.mxu0 0
      %463 = vmatpush2.bf16.xpose.msra.mxu0 0
      %464 = vmatprep.subr.bf16.mxu0 0
      %465 = vmatpush2.bf16.xpose.msra.mxu0 0
      %466 = vmatprep.subr.bf16.mxu0 0
      %467 = vmatpush2.bf16.xpose.msra.mxu0 0
      %468 = vmatprep.subr.bf16.mxu0 0
      %469 = vmatpush2.bf16.xpose.msra.mxu0 0
      %470 = vmatprep.subr.bf16.mxu0 0
      %471 = vmatpush2.bf16.xpose.msra.mxu0 0
      %472 = vmatprep.subr.bf16.mxu0 0
      %473 = vmatpush2.bf16.xpose.msra.mxu0 0
      %474 = vmatprep.subr.bf16.mxu0 0
      %475 = vmatpush2.bf16.xpose.msra.mxu0 0
      %476 = vmatprep.subr.bf16.mxu0 0
      %477 = vmatpush2.bf16.xpose.msra.mxu0 0
      %478 = vmatprep.mubr.bf16.mxu0 0
      %479 = vmatmul.mubr.bf16.gmra.mxu0 %v441
      %v480 = vpop.f32.mrf.mxu0
      %v481 = vadd.f32 0.0, %v480
      %v482 = vpop.f32.mrf.mxu0
      %v483 = vpop.f32.mrf.mxu0
      %v484 = vpop.f32.mrf.mxu0
      %485 = vdwg.mxu0
      %v486 = vsel %vm263, %v481, -inf
      %487 = vmax.xlane.f32.xlu0 %v486
      %v488 = vpop.xlane.xlu0 %487
      %v489 = vsub.f32 %v481, %v488
      %v490 = vmul.f32 %v489, 1.442695
      %v491 = vpow.pop %v490
      %v492 = vsel %vm263, %v491, 0.0
      %493 = vadd.xlane.f32.xlu0 %v492
      %v494 = vpop.xlane.xlu0 %493
      %v495 = vrcp.pop %v494
      %v496 = vmul.f32 %v491, %v495
      %v497 = vpack.c.bf16 %v496, %v496
      %498 = vrot.lane.b32.xlu0 %v215, 64
      %v499 = vpop.permute.xlu0 %498
      %v501 = vsel %vm263, %v497, 0
      %v504 = vsel %vm279, %v499, 0
      %506 = vmatprep.subr.bf16.mxu0 0
      %507 = vmatpush1.bf16.msra.mxu0 0
      %508 = vmatprep.subr.bf16.mxu0 0
      %509 = vmatpush1.bf16.msra.mxu0 0
      %510 = vmatprep.subr.bf16.mxu0 0
      %511 = vmatpush1.bf16.msra.mxu0 0
      %512 = vmatprep.subr.bf16.mxu0 0
      %513 = vmatpush1.bf16.msra.mxu0 0
      %514 = vmatprep.subr.bf16.mxu0 0
      %515 = vmatpush1.bf16.msra.mxu0 0
      %516 = vmatprep.subr.bf16.mxu0 0
      %517 = vmatpush1.bf16.msra.mxu0 0
      %518 = vmatprep.subr.bf16.mxu0 0
      %519 = vmatpush1.bf16.msra.mxu0 0
      %520 = vmatprep.subr.bf16.mxu0 0
      %521 = vmatpush1.bf16.msra.mxu0 %v504
      %522 = vmatprep.subr.bf16.mxu0 0
      %523 = vmatpush2.bf16.msra.mxu0 0
      %524 = vmatprep.subr.bf16.mxu0 0
      %525 = vmatpush2.bf16.msra.mxu0 0
      %526 = vmatprep.subr.bf16.mxu0 0
      %527 = vmatpush2.bf16.msra.mxu0 0
      %528 = vmatprep.subr.bf16.mxu0 0
      %529 = vmatpush2.bf16.msra.mxu0 0
      %530 = vmatprep.subr.bf16.mxu0 0
      %531 = vmatpush2.bf16.msra.mxu0 0
      %532 = vmatprep.subr.bf16.mxu0 0
      %533 = vmatpush2.bf16.msra.mxu0 0
      %534 = vmatprep.subr.bf16.mxu0 0
      %535 = vmatpush2.bf16.msra.mxu0 0
      %536 = vmatprep.subr.bf16.mxu0 0
      %537 = vmatpush2.bf16.msra.mxu0 0
      %538 = vmatprep.mubr.bf16.mxu0 0
      %539 = vmatmul.mubr.bf16.gmra.mxu0 %v501
      %v540 = vpop.f32.mrf.mxu0
      %v541 = vadd.f32 0.0, %v540
      %v542 = vpop.f32.mrf.mxu0
      %v543 = vpop.f32.mrf.mxu0
      %v544 = vpop.f32.mrf.mxu0
      %545 = vdwg.mxu0
      %546 = vrot.lane.b32.xlu0 %v211, 32
      %v547 = vpop.permute.xlu0 %546
      %548 = vrot.lane.b32.xlu0 %v213, 32
      %v549 = vpop.permute.xlu0 %548
      %v551 = vsel %vm216, %v547, 0
      %v554 = vsel %vm216, %v549, 0
      %556 = vmatprep.subr.bf16.mxu0 0
      %557 = vmatpush1.bf16.xpose.msra.mxu0 0
      %558 = vmatprep.subr.bf16.mxu0 0
      %559 = vmatpush1.bf16.xpose.msra.mxu0 0
      %560 = vmatprep.subr.bf16.mxu0 0
      %561 = vmatpush1.bf16.xpose.msra.mxu0 0
      %562 = vmatprep.subr.bf16.mxu0 0
      %563 = vmatpush1.bf16.xpose.msra.mxu0 0
      %564 = vmatprep.subr.bf16.mxu0 0
      %565 = vmatpush1.bf16.xpose.msra.mxu0 0
      %566 = vmatprep.subr.bf16.mxu0 0
      %567 = vmatpush1.bf16.xpose.msra.mxu0 0
      %568 = vmatprep.subr.bf16.mxu0 0
      %569 = vmatpush1.bf16.xpose.msra.mxu0 0
      %570 = vmatprep.subr.bf16.mxu0 0
      %571 = vmatpush1.bf16.xpose.msra.mxu0 %v554
      %572 = vmatprep.subr.bf16.mxu0 0
      %573 = vmatpush2.bf16.xpose.msra.mxu0 0
      %574 = vmatprep.subr.bf16.mxu0 0
      %575 = vmatpush2.bf16.xpose.msra.mxu0 0
      %576 = vmatprep.subr.bf16.mxu0 0
      %577 = vmatpush2.bf16.xpose.msra.mxu0 0
      %578 = vmatprep.subr.bf16.mxu0 0
      %579 = vmatpush2.bf16.xpose.msra.mxu0 0
      %580 = vmatprep.subr.bf16.mxu0 0
      %581 = vmatpush2.bf16.xpose.msra.mxu0 0
      %582 = vmatprep.subr.bf16.mxu0 0
      %583 = vmatpush2.bf16.xpose.msra.mxu0 0
      %584 = vmatprep.subr.bf16.mxu0 0
      %585 = vmatpush2.bf16.xpose.msra.mxu0 0
      %586 = vmatprep.subr.bf16.mxu0 0
      %587 = vmatpush2.bf16.xpose.msra.mxu0 0
      %588 = vmatprep.mubr.bf16.mxu0 0
      %589 = vmatmul.mubr.bf16.gmra.mxu0 %v551
      %v590 = vpop.f32.mrf.mxu0
      %v591 = vadd.f32 0.0, %v590
      %v592 = vpop.f32.mrf.mxu0
      %v593 = vpop.f32.mrf.mxu0
      %v594 = vpop.f32.mrf.mxu0
      %595 = vdwg.mxu0
      %v596 = vsel %vm263, %v591, -inf
      %597 = vmax.xlane.f32.xlu0 %v596
      %v598 = vpop.xlane.xlu0 %597
      %v599 = vsub.f32 %v591, %v598
      %v600 = vmul.f32 %v599, 1.442695
      %v601 = vpow.pop %v600
      %v602 = vsel %vm263, %v601, 0.0
      %603 = vadd.xlane.f32.xlu0 %v602
      %v604 = vpop.xlane.xlu0 %603
      %v605 = vrcp.pop %v604
      %v606 = vmul.f32 %v601, %v605
      %v607 = vpack.c.bf16 %v606, %v606
      %608 = vrot.lane.b32.xlu0 %v215, 32
      %v609 = vpop.permute.xlu0 %608
      %v611 = vsel %vm263, %v607, 0
      %v614 = vsel %vm279, %v609, 0
      %616 = vmatprep.subr.bf16.mxu0 0
      %617 = vmatpush1.bf16.msra.mxu0 0
      %618 = vmatprep.subr.bf16.mxu0 0
      %619 = vmatpush1.bf16.msra.mxu0 0
      %620 = vmatprep.subr.bf16.mxu0 0
      %621 = vmatpush1.bf16.msra.mxu0 0
      %622 = vmatprep.subr.bf16.mxu0 0
      %623 = vmatpush1.bf16.msra.mxu0 0
      %624 = vmatprep.subr.bf16.mxu0 0
      %625 = vmatpush1.bf16.msra.mxu0 0
      %626 = vmatprep.subr.bf16.mxu0 0
      %627 = vmatpush1.bf16.msra.mxu0 0
      %628 = vmatprep.subr.bf16.mxu0 0
      %629 = vmatpush1.bf16.msra.mxu0 0
      %630 = vmatprep.subr.bf16.mxu0 0
      %631 = vmatpush1.bf16.msra.mxu0 %v614
      %632 = vmatprep.subr.bf16.mxu0 0
      %633 = vmatpush2.bf16.msra.mxu0 0
      %634 = vmatprep.subr.bf16.mxu0 0
      %635 = vmatpush2.bf16.msra.mxu0 0
      %636 = vmatprep.subr.bf16.mxu0 0
      %637 = vmatpush2.bf16.msra.mxu0 0
      %638 = vmatprep.subr.bf16.mxu0 0
      %639 = vmatpush2.bf16.msra.mxu0 0
      %640 = vmatprep.subr.bf16.mxu0 0
      %641 = vmatpush2.bf16.msra.mxu0 0
      %642 = vmatprep.subr.bf16.mxu0 0
      %643 = vmatpush2.bf16.msra.mxu0 0
      %644 = vmatprep.subr.bf16.mxu0 0
      %645 = vmatpush2.bf16.msra.mxu0 0
      %646 = vmatprep.subr.bf16.mxu0 0
      %647 = vmatpush2.bf16.msra.mxu0 0
      %648 = vmatprep.mubr.bf16.mxu0 0
      %649 = vmatmul.mubr.bf16.gmra.mxu0 %v611
      %v650 = vpop.f32.mrf.mxu0
      %v651 = vadd.f32 0.0, %v650
      %v652 = vpop.f32.mrf.mxu0
      %v653 = vpop.f32.mrf.mxu0
      %v654 = vpop.f32.mrf.mxu0
      %655 = vdwg.mxu0
      %657 = vrot.lane.b32.xlu0 %v431, 32
      %v658 = vpop.permute.xlu0 %657
      %661 = vrot.lane.b32.xlu0 %v541, 64
      %v662 = vpop.permute.xlu0 %661
      %665 = vrot.lane.b32.xlu0 %v651, 96
      %v666 = vpop.permute.xlu0 %665
      %v668 = vsel %vm216, %v318, %v658
      %vm669 = vcmask 523264
      %v670 = vsel %vm669, %v668, %v662
      %vm671 = vcmask 785408
      %v672 = vsel %vm671, %v670, %v666
      %673 = vst [vmem:[%s208] sm:$0xff] %v672
      %p674 = scmp.lt.s32.totalorder %s14, 1
      %s675 = scalar_select %p674, %s14, 1
      %s676 = smul.addr %s675, 8
      %s677 = scalar_lea.vmem %s3, %s676
      // Predicated region
      $region33: #{transformer_decoder_layer.14} parent=31 // pred_check
        %p678 = pneg %p110
      $region34: #{transformer_decoder_layer.14} parent=31 // pred_check_branch
        %680 = sbr.rel (%p678) target = $region36
      $region35: #{transformer_decoder_layer.14} parent=31 // pred_region
        _
      $region36: #{transformer_decoder_layer.14} parent=31 // pred_fallthru
        _
    $region32: #{transformer_decoder_layer.14} parent=5 // pred_fallthru
      _
    %p681 = scmp.le.s32.totalorder 2, %s9
    // Predicated region
    $region37: #{transformer_decoder_layer.14} parent=5 // pred_check
      %p682 = pneg %p681
    $region38: #{transformer_decoder_layer.14} parent=5 // pred_check_branch
      %684 = sbr.rel (%p682) target = $region40
    $region39: #{transformer_decoder_layer.14} parent=5 // pred_region
      %s685 = ssub.s32 %s9, 2
      // Predicated region
      $region41: #{transformer_decoder_layer.14} parent=39 // pred_check
        %p686 = pneg %p116
      $region42: #{transformer_decoder_layer.14} parent=39 // pred_check_branch
        %688 = sbr.rel (%p686) target = $region44
      $region43: #{transformer_decoder_layer.14} parent=39 // pred_region
        %p689 = scmp.lt.s32.totalorder %s15, 1
        %s690 = scalar_select %p689, %s15, 1
        %s691 = smul.addr %s690, 8
        %s692 = scalar_lea.vmem %s3, %s691
      $region44: #{transformer_decoder_layer.14} parent=39 // pred_fallthru
        _
    $region40: #{transformer_decoder_layer.14} parent=5 // pred_fallthru
      _
  $region6: #{transformer_decoder_layer.14} parent=0 // loop_footer
    %s13 = sadd.s32 1, %s9
  $region7: #{transformer_decoder_layer.14} parent=0 // loop_footer_branch
    %8 = sbr.rel target = $region3
  $region8: #{transformer_decoder_layer.14} parent=0 // loop_exit
    _

// kernel: transformer_decoder_layer.16
$region0: #{transformer_decoder_layer.16}
  #allocation0 [shape = 'u32[]', space=smem, size = 0x4, offset = 0x4, fixed_abs, tag = 'smem constant byte address 0x4 - core index']
  #allocation1 [shape = 'u32[144,128]{1,0:T(1,128)}', space=vmem, size = 0x12000, scoped, tag = 'internal scratch']
  %s0 = inlined_call_operand.vmem [shape: f32[16,128], index: 0, kind: input, shape index: {}]
  %s1 = inlined_call_operand.vmem [shape: f32[1,128], index: 1, kind: input, shape index: {}]
  %s2 = inlined_call_operand.vmem [shape: f32[1,128], index: 2, kind: input, shape index: {}]
  %s3 = inlined_call_operand.vmem [shape: bf16[128,1024], index: 3, kind: input, shape index: {}]
  %s4 = inlined_call_operand.vmem [shape: f32[1,1024], index: 4, kind: input, shape index: {}]
  %s5 = inlined_call_operand.vmem [shape: f32[16,1024], index: 5, kind: output, shape index: {}]
  %s6 = sld [smem:[#allocation0]]
  $region95: #{transformer_decoder_layer.16} parent=0
    _
  %s8 = ssub.s32 1, %s6
  %s9 = scalar_select 0, %s8, %s6
  $region1: #{transformer_decoder_layer.16} parent=0
    #allocation2 [shape = 'u8[262144]{0}', space=vmem, size = 0x40000, scoped, tag = 'input window, operand 3']
    #allocation3 [shape = 'u8[65536]{0}', space=vmem, size = 0x10000, scoped, tag = 'output window, operand 0']
    loop: start=0, step=1, limit=4
    $region2: #{transformer_decoder_layer.16} parent=1 // loop_pre_header
      _
    $region3: #{transformer_decoder_layer.16} parent=1 // loop_header
      %s11 = sphi 0, %s15
      %p12 = scmp.ge.s32.totalorder %s11, 4
      %s18 = sphi 0, %s37
      %s19 = sphi 0, %s33
      %s20 = sphi 0, %s29
      %s21 = sphi 0, %s18
      %s22 = sphi 0, %s19
      %s23 = sphi 0, %s20
      %s24 = sphi 0, %s21
      %s25 = sphi 0, %s22
      %s26 = sphi 0, %s23
      %s42 = sphi 0, %s44
      %s45 = sphi 0, %s42
      %s46 = sphi 0, %s45
      %s62 = sphi 0, %s46
      %s68 = sphi 0, %s70
      %s71 = sphi 0, %s68
      %s72 = sphi 0, %s71
      %s88 = sphi 0, %s72
      %s94 = sphi 0, %s96
      %s97 = sphi 0, %s94
      %s98 = sphi 0, %s97
      %s114 = sphi 0, %s98
      %s122 = sphi 0, %s124
      %s125 = sphi 0, %s122
      %s126 = sphi 0, %s125
      %s142 = sphi 0, %s126
      %s148 = sphi 0, %s150
      %s151 = sphi 0, %s148
      %s152 = sphi 0, %s151
      %s168 = sphi 0, %s152
      %s176 = sphi 0, %s178
      %s179 = sphi 0, %s176
      %s180 = sphi 0, %s179
      %s196 = sphi 0, %s180
    $region4: #{transformer_decoder_layer.16} parent=1 // loop_header_branch
      %14 = sbr.rel (%p12) target = $region8
    $region5: #{transformer_decoder_layer.16} parent=1 // loop_body
      %s16 = ssub.s32 %s11, 1
      %s17 = ssub.s32 %s11, 2
      %s27 = sadd.s32 1, %s20
      %p28 = scmp.ge.s32.totalorder %s27, 1
      %s29 = scalar_select %p28, 0, %s27
      %s30 = sadd.s32 1, %s19
      %s31 = scalar_select %p28, %s30, %s19
      %p32 = scmp.ge.s32.totalorder %s31, 2
      %s33 = scalar_select %p32, 0, %s31
      %s34 = sadd.s32 1, %s18
      %s35 = scalar_select %p32, %s34, %s18
      %p36 = scmp.ge.s32.totalorder %s35, 1
      %s37 = scalar_select %p36, 0, %s35
      %s38 = ssub.s32 %s18, %s37
      %s39 = ssub.s32 %s20, %s29
      %s40 = sor.u32 %s38, %s39
      %p41 = scmp.eq.s32.totalorder %s40, 0
      %s43 = sadd.s32 %s42, 1
      %s44 = scalar_select %p41, %s42, %s43
      %p47 = pneg %p41
      %p48 = scmp.eq.s32.totalorder %s11, 1
      %p49 = por %p47, %p48
      %p50 = scmp.ne.s32.totalorder %s42, %s45
      %p51 = scmp.eq.s32.totalorder %s11, 0
      %p52 = por %p50, %p51
      %p53 = scmp.ne.s32.totalorder %s42, %s45
      %p54 = scmp.eq.s32.totalorder %s16, 1
      %p55 = por %p53, %p54
      %p56 = scmp.ne.s32.totalorder %s45, %s46
      %p57 = scmp.eq.s32.totalorder %s16, 0
      %p58 = por %p56, %p57
      %p59 = scmp.ne.s32.totalorder %s45, %s46
      %p60 = scmp.eq.s32.totalorder %s17, 1
      %p61 = por %p59, %p60
      %p63 = scmp.ne.s32.totalorder %s46, %s62
      %p64 = scmp.eq.s32.totalorder %s17, 0
      %p65 = por %p63, %p64
      %s66 = ssub.s32 %s20, %s29
      %p67 = scmp.eq.s32.totalorder %s66, 0
      %s69 = sadd.s32 %s68, 1
      %s70 = scalar_select %p67, %s68, %s69
      %p73 = pneg %p67
      %p74 = scmp.eq.s32.totalorder %s11, 1
      %p75 = por %p73, %p74
      %p76 = scmp.ne.s32.totalorder %s68, %s71
      %p77 = scmp.eq.s32.totalorder %s11, 0
      %p78 = por %p76, %p77
      %p79 = scmp.ne.s32.totalorder %s68, %s71
      %p80 = scmp.eq.s32.totalorder %s16, 1
      %p81 = por %p79, %p80
      %p82 = scmp.ne.s32.totalorder %s71, %s72
      %p83 = scmp.eq.s32.totalorder %s16, 0
      %p84 = por %p82, %p83
      %p85 = scmp.ne.s32.totalorder %s71, %s72
      %p86 = scmp.eq.s32.totalorder %s17, 1
      %p87 = por %p85, %p86
      %p89 = scmp.ne.s32.totalorder %s72, %s88
      %p90 = scmp.eq.s32.totalorder %s17, 0
      %p91 = por %p89, %p90
      %s92 = ssub.s32 %s20, %s29
      %p93 = scmp.eq.s32.totalorder %s92, 0
      %s95 = sadd.s32 %s94, 1
      %s96 = scalar_select %p93, %s94, %s95
      %p99 = pneg %p93
      %p100 = scmp.eq.s32.totalorder %s11, 1
      %p101 = por %p99, %p100
      %p102 = scmp.ne.s32.totalorder %s94, %s97
      %p103 = scmp.eq.s32.totalorder %s11, 0
      %p104 = por %p102, %p103
      %p105 = scmp.ne.s32.totalorder %s94, %s97
      %p106 = scmp.eq.s32.totalorder %s16, 1
      %p107 = por %p105, %p106
      %p108 = scmp.ne.s32.totalorder %s97, %s98
      %p109 = scmp.eq.s32.totalorder %s16, 0
      %p110 = por %p108, %p109
      %p111 = scmp.ne.s32.totalorder %s97, %s98
      %p112 = scmp.eq.s32.totalorder %s17, 1
      %p113 = por %p111, %p112
      %p115 = scmp.ne.s32.totalorder %s98, %s114
      %p116 = scmp.eq.s32.totalorder %s17, 0
      %p117 = por %p115, %p116
      %s118 = ssub.s32 %s20, %s29
      %s119 = ssub.s32 %s19, %s33
      %s120 = sor.u32 %s118, %s119
      %p121 = scmp.eq.s32.totalorder %s120, 0
      %s123 = sadd.s32 %s122, 1
      %s124 = scalar_select %p121, %s122, %s123
      %p127 = pneg %p121
      %p128 = scmp.eq.s32.totalorder %s11, 1
      %p129 = por %p127, %p128
      %p130 = scmp.ne.s32.totalorder %s122, %s125
      %p131 = scmp.eq.s32.totalorder %s11, 0
      %p132 = por %p130, %p131
      %p133 = scmp.ne.s32.totalorder %s122, %s125
      %p134 = scmp.eq.s32.totalorder %s16, 1
      %p135 = por %p133, %p134
      %p136 = scmp.ne.s32.totalorder %s125, %s126
      %p137 = scmp.eq.s32.totalorder %s16, 0
      %p138 = por %p136, %p137
      %p139 = scmp.ne.s32.totalorder %s125, %s126
      %p140 = scmp.eq.s32.totalorder %s17, 1
      %p141 = por %p139, %p140
      %p143 = scmp.ne.s32.totalorder %s126, %s142
      %p144 = scmp.eq.s32.totalorder %s17, 0
      %p145 = por %p143, %p144
      %s146 = ssub.s32 %s19, %s33
      %p147 = scmp.eq.s32.totalorder %s146, 0
      %s149 = sadd.s32 %s148, 1
      %s150 = scalar_select %p147, %s148, %s149
      %p153 = pneg %p147
      %p154 = scmp.eq.s32.totalorder %s11, 1
      %p155 = por %p153, %p154
      %p156 = scmp.ne.s32.totalorder %s148, %s151
      %p157 = scmp.eq.s32.totalorder %s11, 0
      %p158 = por %p156, %p157
      %p159 = scmp.ne.s32.totalorder %s148, %s151
      %p160 = scmp.eq.s32.totalorder %s16, 1
      %p161 = por %p159, %p160
      %p162 = scmp.ne.s32.totalorder %s151, %s152
      %p163 = scmp.eq.s32.totalorder %s16, 0
      %p164 = por %p162, %p163
      %p165 = scmp.ne.s32.totalorder %s151, %s152
      %p166 = scmp.eq.s32.totalorder %s17, 1
      %p167 = por %p165, %p166
      %p169 = scmp.ne.s32.totalorder %s152, %s168
      %p170 = scmp.eq.s32.totalorder %s17, 0
      %p171 = por %p169, %p170
      %s172 = ssub.s32 %s18, %s37
      %s173 = ssub.s32 %s19, %s33
      %s174 = sor.u32 %s172, %s173
      %p175 = scmp.eq.s32.totalorder %s174, 0
      %s177 = sadd.s32 %s176, 1
      %s178 = scalar_select %p175, %s176, %s177
      %p181 = pneg %p175
      %p182 = scmp.eq.s32.totalorder %s11, 1
      %p183 = por %p181, %p182
      %p184 = scmp.ne.s32.totalorder %s176, %s179
      %p185 = scmp.eq.s32.totalorder %s11, 0
      %p186 = por %p184, %p185
      %p187 = scmp.ne.s32.totalorder %s176, %s179
      %p188 = scmp.eq.s32.totalorder %s16, 1
      %p189 = por %p187, %p188
      %p190 = scmp.ne.s32.totalorder %s179, %s180
      %p191 = scmp.eq.s32.totalorder %s16, 0
      %p192 = por %p190, %p191
      %p193 = scmp.ne.s32.totalorder %s179, %s180
      %p194 = scmp.eq.s32.totalorder %s17, 1
      %p195 = por %p193, %p194
      %p197 = scmp.ne.s32.totalorder %s180, %s196
      %p198 = scmp.eq.s32.totalorder %s17, 0
      %p199 = por %p197, %p198
      %p200 = scmp.le.s32.totalorder 1, %s11
      %p201 = scmp.lt.s32.totalorder %s11, 3
      %p202 = pnand %p200, %p201
      %p203 = pneg %p202
      // Predicated region
      $region9: #{transformer_decoder_layer.16} parent=5 // pred_check
        _
      $region10: #{transformer_decoder_layer.16} parent=5 // pred_check_branch
        %205 = sbr.rel (%p202) target = $region12
      $region11: #{transformer_decoder_layer.16} parent=5 // pred_region
        %s206 = ssub.s32 %s11, 1
        // Predicated region
        $region13: #{transformer_decoder_layer.16} parent=11 // pred_check
          %p207 = pneg %p58
        $region14: #{transformer_decoder_layer.16} parent=11 // pred_check_branch
          %209 = sbr.rel (%p207) target = $region16
        $region15: #{transformer_decoder_layer.16} parent=11 // pred_region
          %s210 = smul.u32 2, %s21
          %p211 = scmp.lt.s32.totalorder %s210, 1
          %s212 = scalar_select %p211, %s210, 1
          %p213 = scmp.lt.s32.totalorder %s23, 0
          %s214 = scalar_select %p213, %s23, 0
          %s215 = sadd.s32 %s214, %s212
          %s216 = smul.addr %s215, 8
          %s217 = scalar_lea.vmem %s0, %s216
          %s218 = smul.u32 2, %s21
        $region16: #{transformer_decoder_layer.16} parent=11 // pred_fallthru
          _
        // Predicated region
        $region17: #{transformer_decoder_layer.16} parent=11 // pred_check
          %p219 = pneg %p84
        $region18: #{transformer_decoder_layer.16} parent=11 // pred_check_branch
          %221 = sbr.rel (%p219) target = $region20
        $region19: #{transformer_decoder_layer.16} parent=11 // pred_region
          %p222 = scmp.lt.s32.totalorder %s23, 0
          %s223 = scalar_select %p222, %s23, 0
          %s224 = scalar_lea.vmem %s1, %s223
        $region20: #{transformer_decoder_layer.16} parent=11 // pred_fallthru
          _
        // Predicated region
        $region21: #{transformer_decoder_layer.16} parent=11 // pred_check
          %p225 = pneg %p110
        $region22: #{transformer_decoder_layer.16} parent=11 // pred_check_branch
          %227 = sbr.rel (%p225) target = $region24
        $region23: #{transformer_decoder_layer.16} parent=11 // pred_region
          %p228 = scmp.lt.s32.totalorder %s23, 0
          %s229 = scalar_select %p228, %s23, 0
          %s230 = scalar_lea.vmem %s2, %s229
        $region24: #{transformer_decoder_layer.16} parent=11 // pred_fallthru
          _
      $region12: #{transformer_decoder_layer.16} parent=5 // pred_fallthru
        _
      %p231 = scmp.lt.s32.totalorder %s11, 2
      // Predicated region
      $region25: #{transformer_decoder_layer.16} parent=5 // pred_check
        %p232 = pneg %p231
      $region26: #{transformer_decoder_layer.16} parent=5 // pred_check_branch
        %234 = sbr.rel (%p232) target = $region28
      $region27: #{transformer_decoder_layer.16} parent=5 // pred_region
        // Predicated region
        $region29: #{transformer_decoder_layer.16} parent=27 // pred_check
          %p235 = pneg %p132
        $region30: #{transformer_decoder_layer.16} parent=27 // pred_check_branch
          %237 = sbr.rel (%p235) target = $region32
        $region31: #{transformer_decoder_layer.16} parent=27 // pred_region
          %s238 = sand.u32 %s122, 1
          %s239 = sand.u32 %s122, 1
          %s240 = smul.addr %s239, 256
          %s241 = scalar_lea.vmem [#allocation2], %s240
          %s242 = smul.u32 16, %s20
          %s243 = smul.u32 4, %s19
          %s244 = smul.addr %s242, 8
          %s245 = sadd.s32 %s243, %s244
          %s246 = smul.addr %s245, 4
          %s247 = scalar_lea.vmem %s3, %s246
          // Predicated region
          $region33: #{transformer_decoder_layer.16} parent=31 // pred_check
            _
          $region34: #{transformer_decoder_layer.16} parent=31 // pred_check_branch
            %249 = sbr.rel (0) target = $region36
          $region35: #{transformer_decoder_layer.16} parent=31 // pred_region
            // Predicated region
            $region37: #{transformer_decoder_layer.16} parent=35 // pred_check
              _
            $region38: #{transformer_decoder_layer.16} parent=35 // pred_check_branch
              %251 = sbr.rel (0) target = $region40
            $region39: #{transformer_decoder_layer.16} parent=35 // pred_region
              loop: start=0, step=1, limit=1
              $region41: #{transformer_decoder_layer.16} parent=39 // loop_pre_header
                _
              $region42: #{transformer_decoder_layer.16} parent=39 // loop_header
                %s253 = sphi 0, %s257
                %p254 = scmp.ge.s32.totalorder %s253, 1
                %s258 = sphi %s247, %s247
                %s259 = sphi %s241, %s241
              $region43: #{transformer_decoder_layer.16} parent=39 // loop_header_branch
                %256 = sbr.rel (%p254) target = $region47
              $region44: #{transformer_decoder_layer.16} parent=39 // loop_body
                %v260 = vld [vmem:[%s258] sm:$0xff]
                %261 = vst [vmem:[%s259] sm:$0xff] %v260
                %v262 = vld [vmem:[%s258 + $0x8] sm:$0xff]
                %263 = vst [vmem:[%s259 + $0x8] sm:$0xff] %v262
                %v264 = vld [vmem:[%s258 + $0x20] sm:$0xff]
                %265 = vst [vmem:[%s259 + $0x10] sm:$0xff] %v264
                %v266 = vld [vmem:[%s258 + $0x28] sm:$0xff]
                %267 = vst [vmem:[%s259 + $0x18] sm:$0xff] %v266
                %v268 = vld [vmem:[%s258 + $0x40] sm:$0xff]
                %269 = vst [vmem:[%s259 + $0x20] sm:$0xff] %v268
                %v270 = vld [vmem:[%s258 + $0x48] sm:$0xff]
                %271 = vst [vmem:[%s259 + $0x28] sm:$0xff] %v270
                %v272 = vld [vmem:[%s258 + $0x60] sm:$0xff]
                %273 = vst [vmem:[%s259 + $0x30] sm:$0xff] %v272
                %v274 = vld [vmem:[%s258 + $0x68] sm:$0xff]
                %275 = vst [vmem:[%s259 + $0x38] sm:$0xff] %v274
                %v276 = vld [vmem:[%s258 + $0x80] sm:$0xff]
                %277 = vst [vmem:[%s259 + $0x40] sm:$0xff] %v276
                %v278 = vld [vmem:[%s258 + $0x88] sm:$0xff]
                %279 = vst [vmem:[%s259 + $0x48] sm:$0xff] %v278
                %v280 = vld [vmem:[%s258 + $0xa0] sm:$0xff]
                %281 = vst [vmem:[%s259 + $0x50] sm:$0xff] %v280
                %v282 = vld [vmem:[%s258 + $0xa8] sm:$0xff]
                %283 = vst [vmem:[%s259 + $0x58] sm:$0xff] %v282
                %v284 = vld [vmem:[%s258 + $0xc0] sm:$0xff]
                %285 = vst [vmem:[%s259 + $0x60] sm:$0xff] %v284
                %v286 = vld [vmem:[%s258 + $0xc8] sm:$0xff]
                %287 = vst [vmem:[%s259 + $0x68] sm:$0xff] %v286
                %v288 = vld [vmem:[%s258 + $0xe0] sm:$0xff]
                %289 = vst [vmem:[%s259 + $0x70] sm:$0xff] %v288
                %v290 = vld [vmem:[%s258 + $0xe8] sm:$0xff]
                %291 = vst [vmem:[%s259 + $0x78] sm:$0xff] %v290
                %v292 = vld [vmem:[%s258 + $0x100] sm:$0xff]
                %293 = vst [vmem:[%s259 + $0x80] sm:$0xff] %v292
                %v294 = vld [vmem:[%s258 + $0x108] sm:$0xff]
                %295 = vst [vmem:[%s259 + $0x88] sm:$0xff] %v294
                %v296 = vld [vmem:[%s258 + $0x120] sm:$0xff]
                %297 = vst [vmem:[%s259 + $0x90] sm:$0xff] %v296
                %v298 = vld [vmem:[%s258 + $0x128] sm:$0xff]
                %299 = vst [vmem:[%s259 + $0x98] sm:$0xff] %v298
                %v300 = vld [vmem:[%s258 + $0x140] sm:$0xff]
                %301 = vst [vmem:[%s259 + $0xa0] sm:$0xff] %v300
                %v302 = vld [vmem:[%s258 + $0x148] sm:$0xff]
                %303 = vst [vmem:[%s259 + $0xa8] sm:$0xff] %v302
                %v304 = vld [vmem:[%s258 + $0x160] sm:$0xff]
                %305 = vst [vmem:[%s259 + $0xb0] sm:$0xff] %v304
                %v306 = vld [vmem:[%s258 + $0x168] sm:$0xff]
                %307 = vst [vmem:[%s259 + $0xb8] sm:$0xff] %v306
                %v308 = vld [vmem:[%s258 + $0x180] sm:$0xff]
                %309 = vst [vmem:[%s259 + $0xc0] sm:$0xff] %v308
                %v310 = vld [vmem:[%s258 + $0x188] sm:$0xff]
                %311 = vst [vmem:[%s259 + $0xc8] sm:$0xff] %v310
                %v312 = vld [vmem:[%s258 + $0x1a0] sm:$0xff]
                %313 = vst [vmem:[%s259 + $0xd0] sm:$0xff] %v312
                %v314 = vld [vmem:[%s258 + $0x1a8] sm:$0xff]
                %315 = vst [vmem:[%s259 + $0xd8] sm:$0xff] %v314
                %v316 = vld [vmem:[%s258 + $0x1c0] sm:$0xff]
                %317 = vst [vmem:[%s259 + $0xe0] sm:$0xff] %v316
                %v318 = vld [vmem:[%s258 + $0x1c8] sm:$0xff]
                %319 = vst [vmem:[%s259 + $0xe8] sm:$0xff] %v318
                %v320 = vld [vmem:[%s258 + $0x1e0] sm:$0xff]
                %321 = vst [vmem:[%s259 + $0xf0] sm:$0xff] %v320
                %v322 = vld [vmem:[%s258 + $0x1e8] sm:$0xff]
                %323 = vst [vmem:[%s259 + $0xf8] sm:$0xff] %v322
              $region45: #{transformer_decoder_layer.16} parent=39 // loop_footer
                %s257 = sadd.s32 1, %s253
              $region46: #{transformer_decoder_layer.16} parent=39 // loop_footer_branch
                %252 = sbr.rel target = $region42
              $region47: #{transformer_decoder_layer.16} parent=39 // loop_exit
                _
            $region40: #{transformer_decoder_layer.16} parent=35 // pred_fallthru
              _
            // Predicated region
            $region48: #{transformer_decoder_layer.16} parent=35 // pred_check
              _
            $region49: #{transformer_decoder_layer.16} parent=35 // pred_check_branch
              %325 = sbr.rel target = $region51
            $region50: #{transformer_decoder_layer.16} parent=35 // pred_region
              _
            $region51: #{transformer_decoder_layer.16} parent=35 // pred_fallthru
              _
          $region36: #{transformer_decoder_layer.16} parent=31 // pred_fallthru
            _
          %326 = vnop
        $region32: #{transformer_decoder_layer.16} parent=27 // pred_fallthru
          _
        // Predicated region
        $region52: #{transformer_decoder_layer.16} parent=27 // pred_check
          %p327 = pneg %p158
        $region53: #{transformer_decoder_layer.16} parent=27 // pred_check_branch
          %329 = sbr.rel (%p327) target = $region55
        $region54: #{transformer_decoder_layer.16} parent=27 // pred_region
          %s330 = smul.u32 4, %s19
          %p331 = scmp.lt.s32.totalorder %s330, 7
          %s332 = scalar_select %p331, %s330, 7
          %s333 = scalar_lea.vmem %s4, %s332
          %s334 = smul.u32 4, %s19
        $region55: #{transformer_decoder_layer.16} parent=27 // pred_fallthru
          _
      $region28: #{transformer_decoder_layer.16} parent=5 // pred_fallthru
        _
      %p335 = scmp.le.s32.totalorder 1, %s11
      %p336 = scmp.lt.s32.totalorder %s11, 3
      %p337 = pnand %p335, %p336
      %p338 = pneg %p337
      // Predicated region
      $region56: #{transformer_decoder_layer.16} parent=5 // pred_check
        _
      $region57: #{transformer_decoder_layer.16} parent=5 // pred_check_branch
        %340 = sbr.rel (%p337) target = $region59
      $region58: #{transformer_decoder_layer.16} parent=5 // pred_region
        %s341 = ssub.s32 %s11, 1
        %s342 = sand.u32 %s125, 1
        %s343 = sand.u32 %s125, 1
        %s344 = smul.addr %s343, 256
        %s345 = scalar_lea.vmem [#allocation2], %s344
        // Predicated region
        $region60: #{transformer_decoder_layer.16} parent=58 // pred_check
          %p346 = pneg %p138
        $region61: #{transformer_decoder_layer.16} parent=58 // pred_check_branch
          %348 = sbr.rel (%p346) target = $region63
        $region62: #{transformer_decoder_layer.16} parent=58 // pred_region
          _
        $region63: #{transformer_decoder_layer.16} parent=58 // pred_fallthru
          _
        %s349 = smul.u32 2, %s21
        %p350 = scmp.lt.s32.totalorder %s349, 1
        %s351 = scalar_select %p350, %s349, 1
        %p352 = scmp.lt.s32.totalorder %s23, 0
        %s353 = scalar_select %p352, %s23, 0
        %s354 = sadd.s32 %s353, %s351
        %s355 = smul.addr %s354, 8
        %s356 = scalar_lea.vmem %s0, %s355
        %p357 = pneg %p58
        %p358 = pneg %p55
        %p359 = scmp.lt.s32.totalorder %s23, 0
        %s360 = scalar_select %p359, %s23, 0
        %s361 = scalar_lea.vmem %s1, %s360
        %p362 = pneg %p84
        %p363 = pneg %p81
        %p364 = scmp.lt.s32.totalorder %s23, 0
        %s365 = scalar_select %p364, %s23, 0
        %s366 = scalar_lea.vmem %s2, %s365
        %p367 = pneg %p110
        %p368 = pneg %p107
        %s369 = sand.u32 %s125, 1
        %s370 = sand.u32 %s125, 1
        %s371 = smul.addr %s370, 256
        %s372 = scalar_lea.vmem [#allocation2], %s371
        %p373 = pneg %p138
        %p374 = pneg %p135
        %s375 = smul.u32 4, %s22
        %p376 = scmp.lt.s32.totalorder %s375, 7
        %s377 = scalar_select %p376, %s375, 7
        %s378 = scalar_lea.vmem %s4, %s377
        %p379 = pneg %p164
        %p380 = pneg %p161
        %p381 = pneg %p192
        %p382 = pneg %p189
        %s383 = sand.u32 %s179, 1
        %s384 = sand.u32 %s179, 1
        %s385 = smul.addr %s384, 64
        %s386 = scalar_lea.vmem [#allocation3], %s385
        %s387 = smul.u32 2, %s21
        %p388 = scmp.lt.s32.totalorder %s387, 1
        %s389 = scalar_select %p388, %s387, 1
        %p390 = scmp.lt.s32.totalorder %s23, 0
        %s391 = scalar_select %p390, %s23, 0
        %s392 = sadd.s32 %s391, %s389
        %s393 = smul.addr %s392, 8
        %s394 = scalar_lea.vmem %s0, %s393
        %s395 = smul.u32 2, %s21
        %p396 = scmp.lt.s32.totalorder %s23, 0
        %s397 = scalar_select %p396, %s23, 0
        %s398 = scalar_lea.vmem %s1, %s397
        %p399 = scmp.lt.s32.totalorder %s23, 0
        %s400 = scalar_select %p399, %s23, 0
        %s401 = scalar_lea.vmem %s2, %s400
        %s402 = smul.u32 16, %s23
        %s403 = smul.u32 4, %s22
        %s404 = smul.u32 4, %s22
        %p405 = scmp.lt.s32.totalorder %s404, 7
        %s406 = scalar_select %p405, %s404, 7
        %s407 = scalar_lea.vmem %s4, %s406
        %s408 = smul.u32 4, %s22
        %s409 = smul.u32 2, %s21
        %s410 = smul.u32 4, %s22
        %v412 = vld [vmem:[%s394] sm:$0xff]
        %v413 = vld [vmem:[%s394 + $0x8] sm:$0xff]
        %414 = vadd.xlane.f32.xlu0 %v412
        %v415 = vpop.xlane.xlu0 %414
        %416 = vadd.xlane.f32.xlu0 %v413
        %v417 = vpop.xlane.xlu0 %416
        %v418 = vrcp.pop 128.0
        %v419 = vmul.f32 %v415, %v418
        %v420 = vmul.f32 %v417, %v418
        %v421 = vsub.f32 %v412, %v419
        %v422 = vsub.f32 %v413, %v420
        %v423 = vmul.f32 %v421, %v421
        %v424 = vmul.f32 %v422, %v422
        %425 = vadd.xlane.f32.xlu0 %v423
        %v426 = vpop.xlane.xlu0 %425
        %427 = vadd.xlane.f32.xlu0 %v424
        %v428 = vpop.xlane.xlu0 %427
        %v429 = vmul.f32 %v426, %v418
        %v430 = vmul.f32 %v428, %v418
        %v431 = vadd.f32 %v429, 1e-05
        %v432 = vadd.f32 %v430, 1e-05
        %v433 = vrsqrt.pop %v431
        %v434 = vrsqrt.pop %v432
        %v435 = vmul.f32 %v421, %v433
        %v436 = vmul.f32 %v422, %v434
        %v437 = vld [vmem:[%s398] sm:$0x1]
        %v439 = vlaneseq
        %v440 = vshrl.u32 %v439, 7
        %v441 = vsub.s32 0, %v440
        %v442 = vrot.slane %v437, %v441
        %v444 = vmul.f32 %v435, %v442
        %v445 = vmul.f32 %v436, %v442
        %v446 = vld [vmem:[%s401] sm:$0x1]
        %v448 = vlaneseq
        %v449 = vshrl.u32 %v448, 7
        %v450 = vsub.s32 0, %v449
        %v451 = vrot.slane %v446, %v450
        %v453 = vadd.f32 %v444, %v451
        %v454 = vadd.f32 %v445, %v451
        %v455 = vpack.c.bf16 %v454, %v453
        %v456 = vld [vmem:[%s345] sm:$0xff]
        %v457 = vld [vmem:[%s345 + $0x8] sm:$0xff]
        %v458 = vld [vmem:[%s345 + $0x10] sm:$0xff]
        %v459 = vld [vmem:[%s345 + $0x18] sm:$0xff]
        %v460 = vld [vmem:[%s345 + $0x20] sm:$0xff]
        %v461 = vld [vmem:[%s345 + $0x28] sm:$0xff]
        %v462 = vld [vmem:[%s345 + $0x30] sm:$0xff]
        %v463 = vld [vmem:[%s345 + $0x38] sm:$0xff]
        %v464 = vld [vmem:[%s345 + $0x40] sm:$0xff]
        %v465 = vld [vmem:[%s345 + $0x48] sm:$0xff]
        %v466 = vld [vmem:[%s345 + $0x50] sm:$0xff]
        %v467 = vld [vmem:[%s345 + $0x58] sm:$0xff]
        %v468 = vld [vmem:[%s345 + $0x60] sm:$0xff]
        %v469 = vld [vmem:[%s345 + $0x68] sm:$0xff]
        %v470 = vld [vmem:[%s345 + $0x70] sm:$0xff]
        %v471 = vld [vmem:[%s345 + $0x78] sm:$0xff]
        %v472 = vld [vmem:[%s345 + $0x80] sm:$0xff]
        %v473 = vld [vmem:[%s345 + $0x88] sm:$0xff]
        %v474 = vld [vmem:[%s345 + $0x90] sm:$0xff]
        %v475 = vld [vmem:[%s345 + $0x98] sm:$0xff]
        %v476 = vld [vmem:[%s345 + $0xa0] sm:$0xff]
        %v477 = vld [vmem:[%s345 + $0xa8] sm:$0xff]
        %v478 = vld [vmem:[%s345 + $0xb0] sm:$0xff]
        %v479 = vld [vmem:[%s345 + $0xb8] sm:$0xff]
        %v480 = vld [vmem:[%s345 + $0xc0] sm:$0xff]
        %v481 = vld [vmem:[%s345 + $0xc8] sm:$0xff]
        %v482 = vld [vmem:[%s345 + $0xd0] sm:$0xff]
        %v483 = vld [vmem:[%s345 + $0xd8] sm:$0xff]
        %v484 = vld [vmem:[%s345 + $0xe0] sm:$0xff]
        %v485 = vld [vmem:[%s345 + $0xe8] sm:$0xff]
        %v486 = vld [vmem:[%s345 + $0xf0] sm:$0xff]
        %v487 = vld [vmem:[%s345 + $0xf8] sm:$0xff]
        %v488 = vld [vmem:[%s407] sm:$0xf]
        %v490 = vlaneseq
        %v491 = vshrl.u32 %v490, 7
        %v492 = vsub.s32 0, %v491
        %v493 = vrot.slane %v488, %v492
        %v494 = vlaneseq
        %v495 = vshrl.u32 %v494, 7
        %v496 = vsub.s32 1, %v495
        %v497 = vrot.slane %v488, %v496
        %v498 = vlaneseq
        %v499 = vshrl.u32 %v498, 7
        %v500 = vsub.s32 2, %v499
        %v501 = vrot.slane %v488, %v500
        %v502 = vlaneseq
        %v503 = vshrl.u32 %v502, 7
        %v504 = vsub.s32 3, %v503
        %v505 = vrot.slane %v488, %v504
        %v542 = vunpack.c.l.b16 %v456
        %v543 = vunpack.c.h.b16 %v456
        %v544 = vunpack.c.l.b16 %v457
        %v545 = vunpack.c.h.b16 %v457
        %v546 = vunpack.c.l.b16 %v458
        %v547 = vunpack.c.h.b16 %v458
        %v548 = vunpack.c.l.b16 %v459
        %v549 = vunpack.c.h.b16 %v459
        %v550 = vunpack.c.l.b16 %v460
        %v551 = vunpack.c.h.b16 %v460
        %v552 = vunpack.c.l.b16 %v461
        %v553 = vunpack.c.h.b16 %v461
        %v554 = vunpack.c.l.b16 %v462
        %v555 = vunpack.c.h.b16 %v462
        %v556 = vunpack.c.l.b16 %v463
        %v557 = vunpack.c.h.b16 %v463
        %v558 = vunpack.c.l.b16 %v464
        %v559 = vunpack.c.h.b16 %v464
        %v560 = vunpack.c.l.b16 %v465
        %v561 = vunpack.c.h.b16 %v465
        %v562 = vunpack.c.l.b16 %v466
        %v563 = vunpack.c.h.b16 %v466
        %v564 = vunpack.c.l.b16 %v467
        %v565 = vunpack.c.h.b16 %v467
        %v566 = vunpack.c.l.b16 %v468
        %v567 = vunpack.c.h.b16 %v468
        %v568 = vunpack.c.l.b16 %v469
        %v569 = vunpack.c.h.b16 %v469
        %v570 = vunpack.c.l.b16 %v470
        %v571 = vunpack.c.h.b16 %v470
        %v572 = vunpack.c.l.b16 %v471
        %v573 = vunpack.c.h.b16 %v471
        %v574 = vunpack.c.l.b16 %v472
        %v575 = vunpack.c.h.b16 %v472
        %v576 = vunpack.c.l.b16 %v473
        %v577 = vunpack.c.h.b16 %v473
        %v578 = vunpack.c.l.b16 %v474
        %v579 = vunpack.c.h.b16 %v474
        %v580 = vunpack.c.l.b16 %v475
        %v581 = vunpack.c.h.b16 %v475
        %v582 = vunpack.c.l.b16 %v476
        %v583 = vunpack.c.h.b16 %v476
        %v584 = vunpack.c.l.b16 %v477
        %v585 = vunpack.c.h.b16 %v477
        %v586 = vunpack.c.l.b16 %v478
        %v587 = vunpack.c.h.b16 %v478
        %v588 = vunpack.c.l.b16 %v479
        %v589 = vunpack.c.h.b16 %v479
        %v590 = vunpack.c.l.b16 %v480
        %v591 = vunpack.c.h.b16 %v480
        %v592 = vunpack.c.l.b16 %v481
        %v593 = vunpack.c.h.b16 %v481
        %v594 = vunpack.c.l.b16 %v482
        %v595 = vunpack.c.h.b16 %v482
        %v596 = vunpack.c.l.b16 %v483
        %v597 = vunpack.c.h.b16 %v483
        %v598 = vunpack.c.l.b16 %v484
        %v599 = vunpack.c.h.b16 %v484
        %v600 = vunpack.c.l.b16 %v485
        %v601 = vunpack.c.h.b16 %v485
        %v602 = vunpack.c.l.b16 %v486
        %v603 = vunpack.c.h.b16 %v486
        %v604 = vunpack.c.l.b16 %v487
        %v605 = vunpack.c.h.b16 %v487
        %v606 = vpack.c.b16 %v546, %v542
        %v607 = vpack.c.b16 %v547, %v543
        %v608 = vpack.c.b16 %v548, %v544
        %v609 = vpack.c.b16 %v549, %v545
        %v610 = vpack.c.b16 %v554, %v550
        %v611 = vpack.c.b16 %v555, %v551
        %v612 = vpack.c.b16 %v556, %v552
        %v613 = vpack.c.b16 %v557, %v553
        %v614 = vpack.c.b16 %v562, %v558
        %v615 = vpack.c.b16 %v563, %v559
        %v616 = vpack.c.b16 %v564, %v560
        %v617 = vpack.c.b16 %v565, %v561
        %v618 = vpack.c.b16 %v570, %v566
        %v619 = vpack.c.b16 %v571, %v567
        %v620 = vpack.c.b16 %v572, %v568
        %v621 = vpack.c.b16 %v573, %v569
        %v622 = vpack.c.b16 %v578, %v574
        %v623 = vpack.c.b16 %v579, %v575
        %v624 = vpack.c.b16 %v580, %v576
        %v625 = vpack.c.b16 %v581, %v577
        %v626 = vpack.c.b16 %v586, %v582
        %v627 = vpack.c.b16 %v587, %v583
        %v628 = vpack.c.b16 %v588, %v584
        %v629 = vpack.c.b16 %v589, %v585
        %v630 = vpack.c.b16 %v594, %v590
        %v631 = vpack.c.b16 %v595, %v591
        %v632 = vpack.c.b16 %v596, %v592
        %v633 = vpack.c.b16 %v597, %v593
        %v634 = vpack.c.b16 %v602, %v598
        %v635 = vpack.c.b16 %v603, %v599
        %v636 = vpack.c.b16 %v604, %v600
        %v637 = vpack.c.b16 %v605, %v601
        %670 = vmatprep.subr.bf16.mxu0 %v635
        %671 = vmatpush1.bf16.msra.mxu0 %v634
        %672 = vmatprep.subr.bf16.mxu0 %v631
        %673 = vmatpush1.bf16.msra.mxu0 %v630
        %674 = vmatprep.subr.bf16.mxu0 %v627
        %675 = vmatpush1.bf16.msra.mxu0 %v626
        %676 = vmatprep.subr.bf16.mxu0 %v623
        %677 = vmatpush1.bf16.msra.mxu0 %v622
        %678 = vmatprep.subr.bf16.mxu0 %v619
        %679 = vmatpush1.bf16.msra.mxu0 %v618
        %680 = vmatprep.subr.bf16.mxu0 %v615
        %681 = vmatpush1.bf16.msra.mxu0 %v614
        %682 = vmatprep.subr.bf16.mxu0 %v611
        %683 = vmatpush1.bf16.msra.mxu0 %v610
        %684 = vmatprep.subr.bf16.mxu0 %v607
        %685 = vmatpush1.bf16.msra.mxu0 %v606
        %686 = vmatprep.subr.bf16.mxu0 0
        %687 = vmatpush2.bf16.msra.mxu0 0
        %688 = vmatprep.subr.bf16.mxu0 0
        %689 = vmatpush2.bf16.msra.mxu0 0
        %690 = vmatprep.subr.bf16.mxu0 0
        %691 = vmatpush2.bf16.msra.mxu0 0
        %692 = vmatprep.subr.bf16.mxu0 0
        %693 = vmatpush2.bf16.msra.mxu0 0
        %694 = vmatprep.subr.bf16.mxu0 0
        %695 = vmatpush2.bf16.msra.mxu0 0
        %696 = vmatprep.subr.bf16.mxu0 0
        %697 = vmatpush2.bf16.msra.mxu0 0
        %698 = vmatprep.subr.bf16.mxu0 0
        %699 = vmatpush2.bf16.msra.mxu0 0
        %700 = vmatprep.subr.bf16.mxu0 0
        %701 = vmatpush2.bf16.msra.mxu0 0
        %702 = vmatprep.mubr.bf16.mxu0 0
        %703 = vmatmul.mubr.bf16.gmra.mxu0 %v455
        %v704 = vpop.f32.mrf.mxu0
        %v705 = vadd.f32 %v493, %v704
        %v706 = vpop.f32.mrf.mxu0
        %v707 = vadd.f32 %v497, %v706
        %v708 = vpop.f32.mrf.mxu0
        %v709 = vadd.f32 %v493, %v708
        %v710 = vpop.f32.mrf.mxu0
        %v711 = vadd.f32 %v497, %v710
        %712 = vdwg.mxu0
        %713 = vmatprep.subr.bf16.mxu0 %v637
        %714 = vmatpush1.bf16.msra.mxu0 %v636
        %715 = vmatprep.subr.bf16.mxu0 %v633
        %716 = vmatpush1.bf16.msra.mxu0 %v632
        %717 = vmatprep.subr.bf16.mxu0 %v629
        %718 = vmatpush1.bf16.msra.mxu0 %v628
        %719 = vmatprep.subr.bf16.mxu0 %v625
        %720 = vmatpush1.bf16.msra.mxu0 %v624
        %721 = vmatprep.subr.bf16.mxu0 %v621
        %722 = vmatpush1.bf16.msra.mxu0 %v620
        %723 = vmatprep.subr.bf16.mxu0 %v617
        %724 = vmatpush1.bf16.msra.mxu0 %v616
        %725 = vmatprep.subr.bf16.mxu0 %v613
        %726 = vmatpush1.bf16.msra.mxu0 %v612
        %727 = vmatprep.subr.bf16.mxu0 %v609
        %728 = vmatpush1.bf16.msra.mxu0 %v608
        %729 = vmatprep.subr.bf16.mxu0 0
        %730 = vmatpush2.bf16.msra.mxu0 0
        %731 = vmatprep.subr.bf16.mxu0 0
        %732 = vmatpush2.bf16.msra.mxu0 0
        %733 = vmatprep.subr.bf16.mxu0 0
        %734 = vmatpush2.bf16.msra.mxu0 0
        %735 = vmatprep.subr.bf16.mxu0 0
        %736 = vmatpush2.bf16.msra.mxu0 0
        %737 = vmatprep.subr.bf16.mxu0 0
        %738 = vmatpush2.bf16.msra.mxu0 0
        %739 = vmatprep.subr.bf16.mxu0 0
        %740 = vmatpush2.bf16.msra.mxu0 0
        %741 = vmatprep.subr.bf16.mxu0 0
        %742 = vmatpush2.bf16.msra.mxu0 0
        %743 = vmatprep.subr.bf16.mxu0 0
        %744 = vmatpush2.bf16.msra.mxu0 0
        %745 = vmatprep.mubr.bf16.mxu0 0
        %746 = vmatmul.mubr.bf16.gmra.mxu0 %v455
        %v747 = vpop.f32.mrf.mxu0
        %v748 = vadd.f32 %v501, %v747
        %v749 = vpop.f32.mrf.mxu0
        %v750 = vadd.f32 %v505, %v749
        %v751 = vpop.f32.mrf.mxu0
        %v752 = vadd.f32 %v501, %v751
        %v753 = vpop.f32.mrf.mxu0
        %v754 = vadd.f32 %v505, %v753
        %755 = vdwg.mxu0
        %v756 = vmax.f32 %v705, 0.0
        %v757 = vmax.f32 %v707, 0.0
        %v758 = vmax.f32 %v748, 0.0
        %v759 = vmax.f32 %v750, 0.0
        %v760 = vmax.f32 %v709, 0.0
        %v761 = vmax.f32 %v711, 0.0
        %v762 = vmax.f32 %v752, 0.0
        %v763 = vmax.f32 %v754, 0.0
        %764 = vst [vmem:[%s386] sm:$0xff] %v756
        %765 = vst [vmem:[%s386 + $0x8] sm:$0xff] %v757
        %766 = vst [vmem:[%s386 + $0x10] sm:$0xff] %v758
        %767 = vst [vmem:[%s386 + $0x18] sm:$0xff] %v759
        %768 = vst [vmem:[%s386 + $0x20] sm:$0xff] %v760
        %769 = vst [vmem:[%s386 + $0x28] sm:$0xff] %v761
        %770 = vst [vmem:[%s386 + $0x30] sm:$0xff] %v762
        %771 = vst [vmem:[%s386 + $0x38] sm:$0xff] %v763
        %s772 = sand.u32 %s179, 1
        %s773 = sand.u32 %s179, 1
        %s774 = smul.addr %s773, 64
        %s775 = scalar_lea.vmem [#allocation3], %s774
        // Predicated region
        $region64: #{transformer_decoder_layer.16} parent=58 // pred_check
          %p776 = pneg %p189
        $region65: #{transformer_decoder_layer.16} parent=58 // pred_check_branch
          %778 = sbr.rel (%p776) target = $region67
        $region66: #{transformer_decoder_layer.16} parent=58 // pred_region
          %s779 = smul.u32 2, %s21
          %s780 = smul.u32 4, %s22
          %s781 = smul.addr %s779, 8
          %s782 = sadd.s32 %s780, %s781
          %s783 = smul.addr %s782, 8
          %s784 = scalar_lea.vmem %s5, %s783
          // Predicated region
          $region68: #{transformer_decoder_layer.16} parent=66 // pred_check
            _
          $region69: #{transformer_decoder_layer.16} parent=66 // pred_check_branch
            %786 = sbr.rel (0) target = $region71
          $region70: #{transformer_decoder_layer.16} parent=66 // pred_region
            // Predicated region
            $region72: #{transformer_decoder_layer.16} parent=70 // pred_check
              _
            $region73: #{transformer_decoder_layer.16} parent=70 // pred_check_branch
              %788 = sbr.rel (0) target = $region75
            $region74: #{transformer_decoder_layer.16} parent=70 // pred_region
              loop: start=0, step=1, limit=1
              $region76: #{transformer_decoder_layer.16} parent=74 // loop_pre_header
                _
              $region77: #{transformer_decoder_layer.16} parent=74 // loop_header
                %s790 = sphi 0, %s794
                %p791 = scmp.ge.s32.totalorder %s790, 1
                %s795 = sphi %s775, %s775
                %s796 = sphi %s784, %s784
              $region78: #{transformer_decoder_layer.16} parent=74 // loop_header_branch
                %793 = sbr.rel (%p791) target = $region82
              $region79: #{transformer_decoder_layer.16} parent=74 // loop_body
                %v797 = vld [vmem:[%s795] sm:$0xff]
                %798 = vst [vmem:[%s796] sm:$0xff] %v797
                %v799 = vld [vmem:[%s795 + $0x8] sm:$0xff]
                %800 = vst [vmem:[%s796 + $0x8] sm:$0xff] %v799
                %v801 = vld [vmem:[%s795 + $0x10] sm:$0xff]
                %802 = vst [vmem:[%s796 + $0x10] sm:$0xff] %v801
                %v803 = vld [vmem:[%s795 + $0x18] sm:$0xff]
                %804 = vst [vmem:[%s796 + $0x18] sm:$0xff] %v803
                %v805 = vld [vmem:[%s795 + $0x20] sm:$0xff]
                %806 = vst [vmem:[%s796 + $0x40] sm:$0xff] %v805
                %v807 = vld [vmem:[%s795 + $0x28] sm:$0xff]
                %808 = vst [vmem:[%s796 + $0x48] sm:$0xff] %v807
                %v809 = vld [vmem:[%s795 + $0x30] sm:$0xff]
                %810 = vst [vmem:[%s796 + $0x50] sm:$0xff] %v809
                %v811 = vld [vmem:[%s795 + $0x38] sm:$0xff]
                %812 = vst [vmem:[%s796 + $0x58] sm:$0xff] %v811
              $region80: #{transformer_decoder_layer.16} parent=74 // loop_footer
                %s794 = sadd.s32 1, %s790
              $region81: #{transformer_decoder_layer.16} parent=74 // loop_footer_branch
                %789 = sbr.rel target = $region77
              $region82: #{transformer_decoder_layer.16} parent=74 // loop_exit
                _
            $region75: #{transformer_decoder_layer.16} parent=70 // pred_fallthru
              _
            // Predicated region
            $region83: #{transformer_decoder_layer.16} parent=70 // pred_check
              _
            $region84: #{transformer_decoder_layer.16} parent=70 // pred_check_branch
              %814 = sbr.rel target = $region86
            $region85: #{transformer_decoder_layer.16} parent=70 // pred_region
              _
            $region86: #{transformer_decoder_layer.16} parent=70 // pred_fallthru
              _
          $region71: #{transformer_decoder_layer.16} parent=66 // pred_fallthru
            _
          %815 = vnop
        $region67: #{transformer_decoder_layer.16} parent=58 // pred_fallthru
          _
      $region59: #{transformer_decoder_layer.16} parent=5 // pred_fallthru
        _
      %p816 = scmp.le.s32.totalorder 2, %s11
      // Predicated region
      $region87: #{transformer_decoder_layer.16} parent=5 // pred_check
        %p817 = pneg %p816
      $region88: #{transformer_decoder_layer.16} parent=5 // pred_check_branch
        %819 = sbr.rel (%p817) target = $region90
      $region89: #{transformer_decoder_layer.16} parent=5 // pred_region
        %s820 = ssub.s32 %s11, 2
        // Predicated region
        $region91: #{transformer_decoder_layer.16} parent=89 // pred_check
          %p821 = pneg %p195
        $region92: #{transformer_decoder_layer.16} parent=89 // pred_check_branch
          %823 = sbr.rel (%p821) target = $region94
        $region93: #{transformer_decoder_layer.16} parent=89 // pred_region
          %s824 = sand.u32 %s180, 1
          %s825 = sand.u32 %s180, 1
          %s826 = smul.addr %s825, 64
          %s827 = scalar_lea.vmem [#allocation3], %s826
        $region94: #{transformer_decoder_layer.16} parent=89 // pred_fallthru
          _
      $region90: #{transformer_decoder_layer.16} parent=5 // pred_fallthru
        _
    $region6: #{transformer_decoder_layer.16} parent=1 // loop_footer
      %s15 = sadd.s32 1, %s11
    $region7: #{transformer_decoder_layer.16} parent=1 // loop_footer_branch
      %10 = sbr.rel target = $region3
    $region8: #{transformer_decoder_layer.16} parent=1 // loop_exit
      _

// kernel: transformer_decoder_layer.17
$region0: #{transformer_decoder_layer.17}
  #allocation0 [shape = 'u32[]', space=smem, size = 0x4, offset = 0x4, fixed_abs, tag = 'smem constant byte address 0x4 - core index']
  #allocation1 [shape = 'u32[144,128]{1,0:T(1,128)}', space=vmem, size = 0x12000, scoped, tag = 'internal scratch']
  #allocation2 [shape = 'f32[16,128]{1,0:T(8,128)}', space=vmem, size = 0x2000, scoped, tag = 'scratch operand']
  %s0 = inlined_call_operand.vmem [shape: f32[16,1024], index: 0, kind: input, shape index: {}]
  %s1 = inlined_call_operand.vmem [shape: bf16[1024,128], index: 1, kind: input, shape index: {}]
  %s2 = inlined_call_operand.vmem [shape: f32[1,128], index: 2, kind: input, shape index: {}]
  %s3 = inlined_call_operand.vmem [shape: f32[16,128], index: 3, kind: input, shape index: {}]
  %s4 = inlined_call_operand.vmem [shape: f32[16,128], index: 4, kind: output, shape index: {}]
  %s5 = sld [smem:[#allocation0]]
  $region80: #{transformer_decoder_layer.17} parent=0
    _
  %s7 = ssub.s32 1, %s5
  %s8 = scalar_select 0, %s7, %s5
  $region1: #{transformer_decoder_layer.17} parent=0
    #allocation3 [shape = 'u8[65536]{0}', space=vmem, size = 0x10000, scoped, tag = 'input window, operand 0']
    loop: start=0, step=1, limit=4
    $region2: #{transformer_decoder_layer.17} parent=1 // loop_pre_header
      _
    $region3: #{transformer_decoder_layer.17} parent=1 // loop_header
      %s10 = sphi 0, %s14
      %p11 = scmp.ge.s32.totalorder %s10, 4
      %s17 = sphi 0, %s36
      %s18 = sphi 0, %s32
      %s19 = sphi 0, %s28
      %s20 = sphi 0, %s17
      %s21 = sphi 0, %s18
      %s22 = sphi 0, %s19
      %s23 = sphi 0, %s20
      %s24 = sphi 0, %s21
      %s25 = sphi 0, %s22
      %s41 = sphi 0, %s43
      %s44 = sphi 0, %s41
      %s45 = sphi 0, %s44
      %s61 = sphi 0, %s45
      %s69 = sphi 0, %s71
      %s72 = sphi 0, %s69
      %s73 = sphi 0, %s72
      %s89 = sphi 0, %s73
      %s95 = sphi 0, %s97
      %s98 = sphi 0, %s95
      %s99 = sphi 0, %s98
      %s115 = sphi 0, %s99
      %s123 = sphi 0, %s125
      %s126 = sphi 0, %s123
      %s127 = sphi 0, %s126
      %s143 = sphi 0, %s127
      %s151 = sphi 0, %s153
      %s154 = sphi 0, %s151
      %s155 = sphi 0, %s154
      %s171 = sphi 0, %s155
    $region4: #{transformer_decoder_layer.17} parent=1 // loop_header_branch
      %13 = sbr.rel (%p11) target = $region8
    $region5: #{transformer_decoder_layer.17} parent=1 // loop_body
      %s15 = ssub.s32 %s10, 1
      %s16 = ssub.s32 %s10, 2
      %s26 = sadd.s32 1, %s19
      %p27 = scmp.ge.s32.totalorder %s26, 2
      %s28 = scalar_select %p27, 0, %s26
      %s29 = sadd.s32 1, %s18
      %s30 = scalar_select %p27, %s29, %s18
      %p31 = scmp.ge.s32.totalorder %s30, 1
      %s32 = scalar_select %p31, 0, %s30
      %s33 = sadd.s32 1, %s17
      %s34 = scalar_select %p31, %s33, %s17
      %p35 = scmp.ge.s32.totalorder %s34, 1
      %s36 = scalar_select %p35, 0, %s34
      %s37 = ssub.s32 %s17, %s36
      %s38 = ssub.s32 %s19, %s28
      %s39 = sor.u32 %s37, %s38
      %p40 = scmp.eq.s32.totalorder %s39, 0
      %s42 = sadd.s32 %s41, 1
      %s43 = scalar_select %p40, %s41, %s42
      %p46 = pneg %p40
      %p47 = scmp.eq.s32.totalorder %s10, 1
      %p48 = por %p46, %p47
      %p49 = scmp.ne.s32.totalorder %s41, %s44
      %p50 = scmp.eq.s32.totalorder %s10, 0
      %p51 = por %p49, %p50
      %p52 = scmp.ne.s32.totalorder %s41, %s44
      %p53 = scmp.eq.s32.totalorder %s15, 1
      %p54 = por %p52, %p53
      %p55 = scmp.ne.s32.totalorder %s44, %s45
      %p56 = scmp.eq.s32.totalorder %s15, 0
      %p57 = por %p55, %p56
      %p58 = scmp.ne.s32.totalorder %s44, %s45
      %p59 = scmp.eq.s32.totalorder %s16, 1
      %p60 = por %p58, %p59
      %p62 = scmp.ne.s32.totalorder %s45, %s61
      %p63 = scmp.eq.s32.totalorder %s16, 0
      %p64 = por %p62, %p63
      %s65 = ssub.s32 %s19, %s28
      %s66 = ssub.s32 %s18, %s32
      %s67 = sor.u32 %s65, %s66
      %p68 = scmp.eq.s32.totalorder %s67, 0
      %s70 = sadd.s32 %s69, 1
      %s71 = scalar_select %p68, %s69, %s70
      %p74 = pneg %p68
      %p75 = scmp.eq.s32.totalorder %s10, 1
      %p76 = por %p74, %p75
      %p77 = scmp.ne.s32.totalorder %s69, %s72
      %p78 = scmp.eq.s32.totalorder %s10, 0
      %p79 = por %p77, %p78
      %p80 = scmp.ne.s32.totalorder %s69, %s72
      %p81 = scmp.eq.s32.totalorder %s15, 1
      %p82 = por %p80, %p81
      %p83 = scmp.ne.s32.totalorder %s72, %s73
      %p84 = scmp.eq.s32.totalorder %s15, 0
      %p85 = por %p83, %p84
      %p86 = scmp.ne.s32.totalorder %s72, %s73
      %p87 = scmp.eq.s32.totalorder %s16, 1
      %p88 = por %p86, %p87
      %p90 = scmp.ne.s32.totalorder %s73, %s89
      %p91 = scmp.eq.s32.totalorder %s16, 0
      %p92 = por %p90, %p91
      %s93 = ssub.s32 %s18, %s32
      %p94 = scmp.eq.s32.totalorder %s93, 0
      %s96 = sadd.s32 %s95, 1
      %s97 = scalar_select %p94, %s95, %s96
      %p100 = pneg %p94
      %p101 = scmp.eq.s32.totalorder %s10, 1
      %p102 = por %p100, %p101
      %p103 = scmp.ne.s32.totalorder %s95, %s98
      %p104 = scmp.eq.s32.totalorder %s10, 0
      %p105 = por %p103, %p104
      %p106 = scmp.ne.s32.totalorder %s95, %s98
      %p107 = scmp.eq.s32.totalorder %s15, 1
      %p108 = por %p106, %p107
      %p109 = scmp.ne.s32.totalorder %s98, %s99
      %p110 = scmp.eq.s32.totalorder %s15, 0
      %p111 = por %p109, %p110
      %p112 = scmp.ne.s32.totalorder %s98, %s99
      %p113 = scmp.eq.s32.totalorder %s16, 1
      %p114 = por %p112, %p113
      %p116 = scmp.ne.s32.totalorder %s99, %s115
      %p117 = scmp.eq.s32.totalorder %s16, 0
      %p118 = por %p116, %p117
      %s119 = ssub.s32 %s17, %s36
      %s120 = ssub.s32 %s18, %s32
      %s121 = sor.u32 %s119, %s120
      %p122 = scmp.eq.s32.totalorder %s121, 0
      %s124 = sadd.s32 %s123, 1
      %s125 = scalar_select %p122, %s123, %s124
      %p128 = pneg %p122
      %p129 = scmp.eq.s32.totalorder %s10, 1
      %p130 = por %p128, %p129
      %p131 = scmp.ne.s32.totalorder %s123, %s126
      %p132 = scmp.eq.s32.totalorder %s10, 0
      %p133 = por %p131, %p132
      %p134 = scmp.ne.s32.totalorder %s123, %s126
      %p135 = scmp.eq.s32.totalorder %s15, 1
      %p136 = por %p134, %p135
      %p137 = scmp.ne.s32.totalorder %s126, %s127
      %p138 = scmp.eq.s32.totalorder %s15, 0
      %p139 = por %p137, %p138
      %p140 = scmp.ne.s32.totalorder %s126, %s127
      %p141 = scmp.eq.s32.totalorder %s16, 1
      %p142 = por %p140, %p141
      %p144 = scmp.ne.s32.totalorder %s127, %s143
      %p145 = scmp.eq.s32.totalorder %s16, 0
      %p146 = por %p144, %p145
      %s147 = ssub.s32 %s17, %s36
      %s148 = ssub.s32 %s18, %s32
      %s149 = sor.u32 %s147, %s148
      %p150 = scmp.eq.s32.totalorder %s149, 0
      %s152 = sadd.s32 %s151, 1
      %s153 = scalar_select %p150, %s151, %s152
      %p156 = pneg %p150
      %p157 = scmp.eq.s32.totalorder %s10, 1
      %p158 = por %p156, %p157
      %p159 = scmp.ne.s32.totalorder %s151, %s154
      %p160 = scmp.eq.s32.totalorder %s10, 0
      %p161 = por %p159, %p160
      %p162 = scmp.ne.s32.totalorder %s151, %s154
      %p163 = scmp.eq.s32.totalorder %s15, 1
      %p164 = por %p162, %p163
      %p165 = scmp.ne.s32.totalorder %s154, %s155
      %p166 = scmp.eq.s32.totalorder %s15, 0
      %p167 = por %p165, %p166
      %p168 = scmp.ne.s32.totalorder %s154, %s155
      %p169 = scmp.eq.s32.totalorder %s16, 1
      %p170 = por %p168, %p169
      %p172 = scmp.ne.s32.totalorder %s155, %s171
      %p173 = scmp.eq.s32.totalorder %s16, 0
      %p174 = por %p172, %p173
      %p175 = scmp.le.s32.totalorder 1, %s10
      %p176 = scmp.lt.s32.totalorder %s10, 3
      %p177 = pnand %p175, %p176
      %p178 = pneg %p177
      // Predicated region
      $region9: #{transformer_decoder_layer.17} parent=5 // pred_check
        _
      $region10: #{transformer_decoder_layer.17} parent=5 // pred_check_branch
        %180 = sbr.rel (%p177) target = $region12
      $region11: #{transformer_decoder_layer.17} parent=5 // pred_region
        %s181 = ssub.s32 %s10, 1
        // Predicated region
        $region13: #{transformer_decoder_layer.17} parent=11 // pred_check
          %p182 = pneg %p111
        $region14: #{transformer_decoder_layer.17} parent=11 // pred_check_branch
          %184 = sbr.rel (%p182) target = $region16
        $region15: #{transformer_decoder_layer.17} parent=11 // pred_region
          %p185 = scmp.lt.s32.totalorder %s21, 0
          %s186 = scalar_select %p185, %s21, 0
          %s187 = scalar_lea.vmem %s2, %s186
        $region16: #{transformer_decoder_layer.17} parent=11 // pred_fallthru
          _
        // Predicated region
        $region17: #{transformer_decoder_layer.17} parent=11 // pred_check
          %p188 = pneg %p139
        $region18: #{transformer_decoder_layer.17} parent=11 // pred_check_branch
          %190 = sbr.rel (%p188) target = $region20
        $region19: #{transformer_decoder_layer.17} parent=11 // pred_region
          %s191 = smul.u32 2, %s20
          %p192 = scmp.lt.s32.totalorder %s191, 1
          %s193 = scalar_select %p192, %s191, 1
          %p194 = scmp.lt.s32.totalorder %s21, 0
          %s195 = scalar_select %p194, %s21, 0
          %s196 = sadd.s32 %s195, %s193
          %s197 = smul.addr %s196, 8
          %s198 = scalar_lea.vmem %s3, %s197
          %s199 = smul.u32 2, %s20
        $region20: #{transformer_decoder_layer.17} parent=11 // pred_fallthru
          _
      $region12: #{transformer_decoder_layer.17} parent=5 // pred_fallthru
        _
      %p200 = scmp.lt.s32.totalorder %s10, 2
      // Predicated region
      $region21: #{transformer_decoder_layer.17} parent=5 // pred_check
        %p201 = pneg %p200
      $region22: #{transformer_decoder_layer.17} parent=5 // pred_check_branch
        %203 = sbr.rel (%p201) target = $region24
      $region23: #{transformer_decoder_layer.17} parent=5 // pred_region
        // Predicated region
        $region25: #{transformer_decoder_layer.17} parent=23 // pred_check
          %p204 = pneg %p51
        $region26: #{transformer_decoder_layer.17} parent=23 // pred_check_branch
          %206 = sbr.rel (%p204) target = $region28
        $region27: #{transformer_decoder_layer.17} parent=23 // pred_region
          %s207 = sand.u32 %s41, 1
          %s208 = sand.u32 %s41, 1
          %s209 = smul.addr %s208, 64
          %s210 = scalar_lea.vmem [#allocation3], %s209
          %s211 = smul.u32 2, %s17
          %s212 = smul.u32 4, %s19
          %s213 = smul.addr %s211, 8
          %s214 = sadd.s32 %s212, %s213
          %s215 = smul.addr %s214, 8
          %s216 = scalar_lea.vmem %s0, %s215
          // Predicated region
          $region29: #{transformer_decoder_layer.17} parent=27 // pred_check
            _
          $region30: #{transformer_decoder_layer.17} parent=27 // pred_check_branch
            %218 = sbr.rel (0) target = $region32
          $region31: #{transformer_decoder_layer.17} parent=27 // pred_region
            // Predicated region
            $region33: #{transformer_decoder_layer.17} parent=31 // pred_check
              _
            $region34: #{transformer_decoder_layer.17} parent=31 // pred_check_branch
              %220 = sbr.rel (0) target = $region36
            $region35: #{transformer_decoder_layer.17} parent=31 // pred_region
              loop: start=0, step=1, limit=1
              $region37: #{transformer_decoder_layer.17} parent=35 // loop_pre_header
                _
              $region38: #{transformer_decoder_layer.17} parent=35 // loop_header
                %s222 = sphi 0, %s226
                %p223 = scmp.ge.s32.totalorder %s222, 1
                %s227 = sphi %s216, %s216
                %s228 = sphi %s210, %s210
              $region39: #{transformer_decoder_layer.17} parent=35 // loop_header_branch
                %225 = sbr.rel (%p223) target = $region43
              $region40: #{transformer_decoder_layer.17} parent=35 // loop_body
                %v229 = vld [vmem:[%s227] sm:$0xff]
                %230 = vst [vmem:[%s228] sm:$0xff] %v229
                %v231 = vld [vmem:[%s227 + $0x8] sm:$0xff]
                %232 = vst [vmem:[%s228 + $0x8] sm:$0xff] %v231
                %v233 = vld [vmem:[%s227 + $0x10] sm:$0xff]
                %234 = vst [vmem:[%s228 + $0x10] sm:$0xff] %v233
                %v235 = vld [vmem:[%s227 + $0x18] sm:$0xff]
                %236 = vst [vmem:[%s228 + $0x18] sm:$0xff] %v235
                %v237 = vld [vmem:[%s227 + $0x40] sm:$0xff]
                %238 = vst [vmem:[%s228 + $0x20] sm:$0xff] %v237
                %v239 = vld [vmem:[%s227 + $0x48] sm:$0xff]
                %240 = vst [vmem:[%s228 + $0x28] sm:$0xff] %v239
                %v241 = vld [vmem:[%s227 + $0x50] sm:$0xff]
                %242 = vst [vmem:[%s228 + $0x30] sm:$0xff] %v241
                %v243 = vld [vmem:[%s227 + $0x58] sm:$0xff]
                %244 = vst [vmem:[%s228 + $0x38] sm:$0xff] %v243
              $region41: #{transformer_decoder_layer.17} parent=35 // loop_footer
                %s226 = sadd.s32 1, %s222
              $region42: #{transformer_decoder_layer.17} parent=35 // loop_footer_branch
                %221 = sbr.rel target = $region38
              $region43: #{transformer_decoder_layer.17} parent=35 // loop_exit
                _
            $region36: #{transformer_decoder_layer.17} parent=31 // pred_fallthru
              _
            // Predicated region
            $region44: #{transformer_decoder_layer.17} parent=31 // pred_check
              _
            $region45: #{transformer_decoder_layer.17} parent=31 // pred_check_branch
              %246 = sbr.rel target = $region47
            $region46: #{transformer_decoder_layer.17} parent=31 // pred_region
              _
            $region47: #{transformer_decoder_layer.17} parent=31 // pred_fallthru
              _
          $region32: #{transformer_decoder_layer.17} parent=27 // pred_fallthru
            _
          %247 = vnop
        $region28: #{transformer_decoder_layer.17} parent=23 // pred_fallthru
          _
        // Predicated region
        $region48: #{transformer_decoder_layer.17} parent=23 // pred_check
          %p248 = pneg %p79
        $region49: #{transformer_decoder_layer.17} parent=23 // pred_check_branch
          %250 = sbr.rel (%p248) target = $region51
        $region50: #{transformer_decoder_layer.17} parent=23 // pred_region
          %s251 = smul.u32 64, %s19
          %p252 = scmp.lt.s32.totalorder %s251, 127
          %s253 = scalar_select %p252, %s251, 127
          %p254 = scmp.lt.s32.totalorder %s18, 0
          %s255 = scalar_select %p254, %s18, 0
          %s256 = sadd.s32 %s255, %s253
          %s257 = smul.addr %s256, 4
          %s258 = scalar_lea.vmem %s1, %s257
          %s259 = smul.u32 64, %s19
        $region51: #{transformer_decoder_layer.17} parent=23 // pred_fallthru
          _
      $region24: #{transformer_decoder_layer.17} parent=5 // pred_fallthru
        _
      %p260 = scmp.le.s32.totalorder 1, %s10
      %p261 = scmp.lt.s32.totalorder %s10, 3
      %p262 = pnand %p260, %p261
      %p263 = pneg %p262
      // Predicated region
      $region52: #{transformer_decoder_layer.17} parent=5 // pred_check
        _
      $region53: #{transformer_decoder_layer.17} parent=5 // pred_check_branch
        %265 = sbr.rel (%p262) target = $region55
      $region54: #{transformer_decoder_layer.17} parent=5 // pred_region
        %s266 = ssub.s32 %s10, 1
        %s267 = sand.u32 %s44, 1
        %s268 = sand.u32 %s44, 1
        %s269 = smul.addr %s268, 64
        %s270 = scalar_lea.vmem [#allocation3], %s269
        // Predicated region
        $region56: #{transformer_decoder_layer.17} parent=54 // pred_check
          %p271 = pneg %p57
        $region57: #{transformer_decoder_layer.17} parent=54 // pred_check_branch
          %273 = sbr.rel (%p271) target = $region59
        $region58: #{transformer_decoder_layer.17} parent=54 // pred_region
          _
        $region59: #{transformer_decoder_layer.17} parent=54 // pred_fallthru
          _
        %s274 = sand.u32 %s44, 1
        %s275 = sand.u32 %s44, 1
        %s276 = smul.addr %s275, 64
        %s277 = scalar_lea.vmem [#allocation3], %s276
        %p278 = pneg %p57
        %p279 = pneg %p54
        %s280 = smul.u32 64, %s22
        %p281 = scmp.lt.s32.totalorder %s280, 127
        %s282 = scalar_select %p281, %s280, 127
        %p283 = scmp.lt.s32.totalorder %s21, 0
        %s284 = scalar_select %p283, %s21, 0
        %s285 = sadd.s32 %s284, %s282
        %s286 = smul.addr %s285, 4
        %s287 = scalar_lea.vmem %s1, %s286
        %p288 = pneg %p85
        %p289 = pneg %p82
        %p290 = scmp.lt.s32.totalorder %s21, 0
        %s291 = scalar_select %p290, %s21, 0
        %s292 = scalar_lea.vmem %s2, %s291
        %p293 = pneg %p111
        %p294 = pneg %p108
        %s295 = smul.u32 2, %s20
        %p296 = scmp.lt.s32.totalorder %s295, 1
        %s297 = scalar_select %p296, %s295, 1
        %p298 = scmp.lt.s32.totalorder %s21, 0
        %s299 = scalar_select %p298, %s21, 0
        %s300 = sadd.s32 %s299, %s297
        %s301 = smul.addr %s300, 8
        %s302 = scalar_lea.vmem %s3, %s301
        %p303 = pneg %p139
        %p304 = pneg %p136
        %p305 = pneg %p167
        %p306 = pneg %p164
        %s307 = smul.u32 2, %s20
        %p308 = scmp.lt.s32.totalorder %s307, 1
        %s309 = scalar_select %p308, %s307, 1
        %p310 = scmp.lt.s32.totalorder %s21, 0
        %s311 = scalar_select %p310, %s21, 0
        %s312 = sadd.s32 %s311, %s309
        %s313 = smul.addr %s312, 8
        %s314 = scalar_lea.vmem %s4, %s313
        %s315 = smul.u32 2, %s20
        %s316 = smul.u32 4, %s22
        %s317 = smul.u32 64, %s22
        %p318 = scmp.lt.s32.totalorder %s317, 127
        %s319 = scalar_select %p318, %s317, 127
        %p320 = scmp.lt.s32.totalorder %s21, 0
        %s321 = scalar_select %p320, %s21, 0
        %s322 = sadd.s32 %s321, %s319
        %s323 = smul.addr %s322, 4
        %s324 = scalar_lea.vmem %s1, %s323
        %s325 = smul.u32 64, %s22
        %p326 = scmp.lt.s32.totalorder %s21, 0
        %s327 = scalar_select %p326, %s21, 0
        %s328 = scalar_lea.vmem %s2, %s327
        %s329 = smul.u32 2, %s20
        %p330 = scmp.lt.s32.totalorder %s329, 1
        %s331 = scalar_select %p330, %s329, 1
        %p332 = scmp.lt.s32.totalorder %s21, 0
        %s333 = scalar_select %p332, %s21, 0
        %s334 = sadd.s32 %s333, %s331
        %s335 = smul.addr %s334, 8
        %s336 = scalar_lea.vmem %s3, %s335
        %s337 = smul.u32 2, %s20
        %s338 = smul.u32 2, %s20
        %p339 = scmp.lt.s32.totalorder %s338, 1
        %s340 = scalar_select %p339, %s338, 1
        %p341 = scmp.lt.s32.totalorder %s21, 0
        %s342 = scalar_select %p341, %s21, 0
        %s343 = sadd.s32 %s342, %s340
        %s344 = smul.addr %s343, 8
        %s345 = scalar_lea.vmem %s4, %s344
        %s346 = smul.u32 2, %s20
        %v348 = vld [vmem:[%s270] sm:$0xff]
        %v349 = vld [vmem:[%s270 + $0x8] sm:$0xff]
        %v350 = vld [vmem:[%s270 + $0x10] sm:$0xff]
        %v351 = vld [vmem:[%s270 + $0x18] sm:$0xff]
        %v352 = vld [vmem:[%s270 + $0x20] sm:$0xff]
        %v353 = vld [vmem:[%s270 + $0x28] sm:$0xff]
        %v354 = vld [vmem:[%s270 + $0x30] sm:$0xff]
        %v355 = vld [vmem:[%s270 + $0x38] sm:$0xff]
        %v356 = vpack.c.bf16 %v352, %v348
        %v357 = vpack.c.bf16 %v353, %v349
        %v358 = vpack.c.bf16 %v354, %v350
        %v359 = vpack.c.bf16 %v355, %v351
        %v360 = vld [vmem:[%s324] sm:$0xf]
        %v361 = vld [vmem:[%s324 + $0x4] sm:$0xf]
        %v362 = vld [vmem:[%s324 + $0x8] sm:$0xf]
        %v363 = vld [vmem:[%s324 + $0xc] sm:$0xf]
        %v364 = vld [vmem:[%s324 + $0x10] sm:$0xf]
        %v365 = vld [vmem:[%s324 + $0x14] sm:$0xf]
        %v366 = vld [vmem:[%s324 + $0x18] sm:$0xf]
        %v367 = vld [vmem:[%s324 + $0x1c] sm:$0xf]
        %v368 = vld [vmem:[%s324 + $0x20] sm:$0xf]
        %v369 = vld [vmem:[%s324 + $0x24] sm:$0xf]
        %v370 = vld [vmem:[%s324 + $0x28] sm:$0xf]
        %v371 = vld [vmem:[%s324 + $0x2c] sm:$0xf]
        %v372 = vld [vmem:[%s324 + $0x30] sm:$0xf]
        %v373 = vld [vmem:[%s324 + $0x34] sm:$0xf]
        %v374 = vld [vmem:[%s324 + $0x38] sm:$0xf]
        %v375 = vld [vmem:[%s324 + $0x3c] sm:$0xf]
        %v376 = vld [vmem:[%s324 + $0x40] sm:$0xf]
        %v377 = vld [vmem:[%s324 + $0x44] sm:$0xf]
        %v378 = vld [vmem:[%s324 + $0x48] sm:$0xf]
        %v379 = vld [vmem:[%s324 + $0x4c] sm:$0xf]
        %v380 = vld [vmem:[%s324 + $0x50] sm:$0xf]
        %v381 = vld [vmem:[%s324 + $0x54] sm:$0xf]
        %v382 = vld [vmem:[%s324 + $0x58] sm:$0xf]
        %v383 = vld [vmem:[%s324 + $0x5c] sm:$0xf]
        %v384 = vld [vmem:[%s324 + $0x60] sm:$0xf]
        %v385 = vld [vmem:[%s324 + $0x64] sm:$0xf]
        %v386 = vld [vmem:[%s324 + $0x68] sm:$0xf]
        %v387 = vld [vmem:[%s324 + $0x6c] sm:$0xf]
        %v388 = vld [vmem:[%s324 + $0x70] sm:$0xf]
        %v389 = vld [vmem:[%s324 + $0x74] sm:$0xf]
        %v390 = vld [vmem:[%s324 + $0x78] sm:$0xf]
        %v391 = vld [vmem:[%s324 + $0x7c] sm:$0xf]
        %v392 = vld [vmem:[%s324 + $0x80] sm:$0xf]
        %v393 = vld [vmem:[%s324 + $0x84] sm:$0xf]
        %v394 = vld [vmem:[%s324 + $0x88] sm:$0xf]
        %v395 = vld [vmem:[%s324 + $0x8c] sm:$0xf]
        %v396 = vld [vmem:[%s324 + $0x90] sm:$0xf]
        %v397 = vld [vmem:[%s324 + $0x94] sm:$0xf]
        %v398 = vld [vmem:[%s324 + $0x98] sm:$0xf]
        %v399 = vld [vmem:[%s324 + $0x9c] sm:$0xf]
        %v400 = vld [vmem:[%s324 + $0xa0] sm:$0xf]
        %v401 = vld [vmem:[%s324 + $0xa4] sm:$0xf]
        %v402 = vld [vmem:[%s324 + $0xa8] sm:$0xf]
        %v403 = vld [vmem:[%s324 + $0xac] sm:$0xf]
        %v404 = vld [vmem:[%s324 + $0xb0] sm:$0xf]
        %v405 = vld [vmem:[%s324 + $0xb4] sm:$0xf]
        %v406 = vld [vmem:[%s324 + $0xb8] sm:$0xf]
        %v407 = vld [vmem:[%s324 + $0xbc] sm:$0xf]
        %v408 = vld [vmem:[%s324 + $0xc0] sm:$0xf]
        %v409 = vld [vmem:[%s324 + $0xc4] sm:$0xf]
        %v410 = vld [vmem:[%s324 + $0xc8] sm:$0xf]
        %v411 = vld [vmem:[%s324 + $0xcc] sm:$0xf]
        %v412 = vld [vmem:[%s324 + $0xd0] sm:$0xf]
        %v413 = vld [vmem:[%s324 + $0xd4] sm:$0xf]
        %v414 = vld [vmem:[%s324 + $0xd8] sm:$0xf]
        %v415 = vld [vmem:[%s324 + $0xdc] sm:$0xf]
        %v416 = vld [vmem:[%s324 + $0xe0] sm:$0xf]
        %v417 = vld [vmem:[%s324 + $0xe4] sm:$0xf]
        %v418 = vld [vmem:[%s324 + $0xe8] sm:$0xf]
        %v419 = vld [vmem:[%s324 + $0xec] sm:$0xf]
        %v420 = vld [vmem:[%s324 + $0xf0] sm:$0xf]
        %v421 = vld [vmem:[%s324 + $0xf4] sm:$0xf]
        %v422 = vld [vmem:[%s324 + $0xf8] sm:$0xf]
        %v423 = vld [vmem:[%s324 + $0xfc] sm:$0xf]
        %v488 = vunpack.c.l.b16 %v360
        %v489 = vunpack.c.l.b16 %v361
        %v490 = vunpack.c.l.b16 %v362
        %v491 = vunpack.c.l.b16 %v363
        %v492 = vunpack.c.l.b16 %v364
        %v493 = vunpack.c.l.b16 %v365
        %v494 = vunpack.c.l.b16 %v366
        %v495 = vunpack.c.l.b16 %v367
        %v496 = vunpack.c.l.b16 %v368
        %v497 = vunpack.c.l.b16 %v369
        %v498 = vunpack.c.l.b16 %v370
        %v499 = vunpack.c.l.b16 %v371
        %v500 = vunpack.c.l.b16 %v372
        %v501 = vunpack.c.l.b16 %v373
        %v502 = vunpack.c.l.b16 %v374
        %v503 = vunpack.c.l.b16 %v375
        %v504 = vunpack.c.l.b16 %v376
        %v505 = vunpack.c.l.b16 %v377
        %v506 = vunpack.c.l.b16 %v378
        %v507 = vunpack.c.l.b16 %v379
        %v508 = vunpack.c.l.b16 %v380
        %v509 = vunpack.c.l.b16 %v381
        %v510 = vunpack.c.l.b16 %v382
        %v511 = vunpack.c.l.b16 %v383
        %v512 = vunpack.c.l.b16 %v384
        %v513 = vunpack.c.l.b16 %v385
        %v514 = vunpack.c.l.b16 %v386
        %v515 = vunpack.c.l.b16 %v387
        %v516 = vunpack.c.l.b16 %v388
        %v517 = vunpack.c.l.b16 %v389
        %v518 = vunpack.c.l.b16 %v390
        %v519 = vunpack.c.l.b16 %v391
        %v520 = vunpack.c.l.b16 %v392
        %v521 = vunpack.c.l.b16 %v393
        %v522 = vunpack.c.l.b16 %v394
        %v523 = vunpack.c.l.b16 %v395
        %v524 = vunpack.c.l.b16 %v396
        %v525 = vunpack.c.l.b16 %v397
        %v526 = vunpack.c.l.b16 %v398
        %v527 = vunpack.c.l.b16 %v399
        %v528 = vunpack.c.l.b16 %v400
        %v529 = vunpack.c.l.b16 %v401
        %v530 = vunpack.c.l.b16 %v402
        %v531 = vunpack.c.l.b16 %v403
        %v532 = vunpack.c.l.b16 %v404
        %v533 = vunpack.c.l.b16 %v405
        %v534 = vunpack.c.l.b16 %v406
        %v535 = vunpack.c.l.b16 %v407
        %v536 = vunpack.c.l.b16 %v408
        %v537 = vunpack.c.l.b16 %v409
        %v538 = vunpack.c.l.b16 %v410
        %v539 = vunpack.c.l.b16 %v411
        %v540 = vunpack.c.l.b16 %v412
        %v541 = vunpack.c.l.b16 %v413
        %v542 = vunpack.c.l.b16 %v414
        %v543 = vunpack.c.l.b16 %v415
        %v544 = vunpack.c.l.b16 %v416
        %v545 = vunpack.c.l.b16 %v417
        %v546 = vunpack.c.l.b16 %v418
        %v547 = vunpack.c.l.b16 %v419
        %v548 = vunpack.c.l.b16 %v420
        %v549 = vunpack.c.l.b16 %v421
        %v550 = vunpack.c.l.b16 %v422
        %v551 = vunpack.c.l.b16 %v423
        %v552 = vpack.c.b16 %v489, %v488
        %v553 = vpack.c.b16 %v491, %v490
        %v554 = vpack.c.b16 %v493, %v492
        %v555 = vpack.c.b16 %v495, %v494
        %v556 = vpack.c.b16 %v497, %v496
        %v557 = vpack.c.b16 %v499, %v498
        %v558 = vpack.c.b16 %v501, %v500
        %v559 = vpack.c.b16 %v503, %v502
        %v560 = vpack.c.b16 %v505, %v504
        %v561 = vpack.c.b16 %v507, %v506
        %v562 = vpack.c.b16 %v509, %v508
        %v563 = vpack.c.b16 %v511, %v510
        %v564 = vpack.c.b16 %v513, %v512
        %v565 = vpack.c.b16 %v515, %v514
        %v566 = vpack.c.b16 %v517, %v516
        %v567 = vpack.c.b16 %v519, %v518
        %v568 = vpack.c.b16 %v521, %v520
        %v569 = vpack.c.b16 %v523, %v522
        %v570 = vpack.c.b16 %v525, %v524
        %v571 = vpack.c.b16 %v527, %v526
        %v572 = vpack.c.b16 %v529, %v528
        %v573 = vpack.c.b16 %v531, %v530
        %v574 = vpack.c.b16 %v533, %v532
        %v575 = vpack.c.b16 %v535, %v534
        %v576 = vpack.c.b16 %v537, %v536
        %v577 = vpack.c.b16 %v539, %v538
        %v578 = vpack.c.b16 %v541, %v540
        %v579 = vpack.c.b16 %v543, %v542
        %v580 = vpack.c.b16 %v545, %v544
        %v581 = vpack.c.b16 %v547, %v546
        %v582 = vpack.c.b16 %v549, %v548
        %v583 = vpack.c.b16 %v551, %v550
        %616 = vmatprep.subr.bf16.mxu0 0
        %617 = vmatpush1.bf16.msra.mxu0 %v559
        %618 = vmatprep.subr.bf16.mxu0 0
        %619 = vmatpush1.bf16.msra.mxu0 %v558
        %620 = vmatprep.subr.bf16.mxu0 0
        %621 = vmatpush1.bf16.msra.mxu0 %v557
        %622 = vmatprep.subr.bf16.mxu0 0
        %623 = vmatpush1.bf16.msra.mxu0 %v556
        %624 = vmatprep.subr.bf16.mxu0 0
        %625 = vmatpush1.bf16.msra.mxu0 %v555
        %626 = vmatprep.subr.bf16.mxu0 0
        %627 = vmatpush1.bf16.msra.mxu0 %v554
        %628 = vmatprep.subr.bf16.mxu0 0
        %629 = vmatpush1.bf16.msra.mxu0 %v553
        %630 = vmatprep.subr.bf16.mxu0 0
        %631 = vmatpush1.bf16.msra.mxu0 %v552
        %632 = vmatprep.subr.bf16.mxu0 0
        %633 = vmatpush2.bf16.msra.mxu0 %v567
        %634 = vmatprep.subr.bf16.mxu0 0
        %635 = vmatpush2.bf16.msra.mxu0 %v566
        %636 = vmatprep.subr.bf16.mxu0 0
        %637 = vmatpush2.bf16.msra.mxu0 %v565
        %638 = vmatprep.subr.bf16.mxu0 0
        %639 = vmatpush2.bf16.msra.mxu0 %v564
        %640 = vmatprep.subr.bf16.mxu0 0
        %641 = vmatpush2.bf16.msra.mxu0 %v563
        %642 = vmatprep.subr.bf16.mxu0 0
        %643 = vmatpush2.bf16.msra.mxu0 %v562
        %644 = vmatprep.subr.bf16.mxu0 0
        %645 = vmatpush2.bf16.msra.mxu0 %v561
        %646 = vmatprep.subr.bf16.mxu0 0
        %647 = vmatpush2.bf16.msra.mxu0 %v560
        %648 = vmatprep.mubr.bf16.mxu0 %v357
        %649 = vmatmul.mubr.bf16.gmra.mxu0 %v356
        %v650 = vpop.f32.mrf.mxu0
        %v651 = vadd.f32 0.0, %v650
        %v652 = vpop.f32.mrf.mxu0
        %v653 = vpop.f32.mrf.mxu0
        %v654 = vadd.f32 0.0, %v653
        %v655 = vpop.f32.mrf.mxu0
        %656 = vdwg.mxu0
        %657 = vmatprep.subr.bf16.mxu0 0
        %658 = vmatpush1.bf16.msra.mxu0 %v575
        %659 = vmatprep.subr.bf16.mxu0 0
        %660 = vmatpush1.bf16.msra.mxu0 %v574
        %661 = vmatprep.subr.bf16.mxu0 0
        %662 = vmatpush1.bf16.msra.mxu0 %v573
        %663 = vmatprep.subr.bf16.mxu0 0
        %664 = vmatpush1.bf16.msra.mxu0 %v572
        %665 = vmatprep.subr.bf16.mxu0 0
        %666 = vmatpush1.bf16.msra.mxu0 %v571
        %667 = vmatprep.subr.bf16.mxu0 0
        %668 = vmatpush1.bf16.msra.mxu0 %v570
        %669 = vmatprep.subr.bf16.mxu0 0
        %670 = vmatpush1.bf16.msra.mxu0 %v569
        %671 = vmatprep.subr.bf16.mxu0 0
        %672 = vmatpush1.bf16.msra.mxu0 %v568
        %673 = vmatprep.subr.bf16.mxu0 0
        %674 = vmatpush2.bf16.msra.mxu0 %v583
        %675 = vmatprep.subr.bf16.mxu0 0
        %676 = vmatpush2.bf16.msra.mxu0 %v582
        %677 = vmatprep.subr.bf16.mxu0 0
        %678 = vmatpush2.bf16.msra.mxu0 %v581
        %679 = vmatprep.subr.bf16.mxu0 0
        %680 = vmatpush2.bf16.msra.mxu0 %v580
        %681 = vmatprep.subr.bf16.mxu0 0
        %682 = vmatpush2.bf16.msra.mxu0 %v579
        %683 = vmatprep.subr.bf16.mxu0 0
        %684 = vmatpush2.bf16.msra.mxu0 %v578
        %685 = vmatprep.subr.bf16.mxu0 0
        %686 = vmatpush2.bf16.msra.mxu0 %v577
        %687 = vmatprep.subr.bf16.mxu0 0
        %688 = vmatpush2.bf16.msra.mxu0 %v576
        %689 = vmatprep.mubr.bf16.mxu0 %v359
        %690 = vmatmul.mubr.bf16.gmra.mxu0 %v358
        %v691 = vpop.f32.mrf.mxu0
        %v692 = vadd.f32 %v651, %v691
        %v693 = vpop.f32.mrf.mxu0
        %v694 = vpop.f32.mrf.mxu0
        %v695 = vadd.f32 %v654, %v694
        %v696 = vpop.f32.mrf.mxu0
        %697 = vdwg.mxu0
        %p698 = scmp.eq.s32.totalorder %s22, 0
        // Predicated region
        $region60: #{transformer_decoder_layer.17} parent=54 // pred_check
          %p699 = pneg %p698
        $region61: #{transformer_decoder_layer.17} parent=54 // pred_check_branch
          %701 = sbr.rel (%p699) target = $region63
        $region62: #{transformer_decoder_layer.17} parent=54 // pred_region
          %702 = vst [vmem:[#allocation2] sm:$0xff] 0.0
          %703 = vst [vmem:[#allocation2 + $0x8] sm:$0xff] 0.0
        $region63: #{transformer_decoder_layer.17} parent=54 // pred_fallthru
          _
        %v704 = vld [vmem:[#allocation2] sm:$0xff]
        %v705 = vld [vmem:[#allocation2 + $0x8] sm:$0xff]
        %v706 = vadd.f32 %v704, %v692
        %v707 = vadd.f32 %v705, %v695
        %708 = vst [vmem:[#allocation2] sm:$0xff] %v706
        %709 = vst [vmem:[#allocation2 + $0x8] sm:$0xff] %v707
        %p710 = scmp.eq.s32.totalorder %s22, 1
        // Predicated region
        $region64: #{transformer_decoder_layer.17} parent=54 // pred_check
          %p711 = pneg %p710
        $region65: #{transformer_decoder_layer.17} parent=54 // pred_check_branch
          %713 = sbr.rel (%p711) target = $region67
        $region66: #{transformer_decoder_layer.17} parent=54 // pred_region
          %v714 = vld [vmem:[#allocation2] sm:$0xff]
          %v715 = vld [vmem:[#allocation2 + $0x8] sm:$0xff]
          %v716 = vld [vmem:[%s328] sm:$0x1]
          %v718 = vlaneseq
          %v719 = vshrl.u32 %v718, 7
          %v720 = vsub.s32 0, %v719
          %v721 = vrot.slane %v716, %v720
          %v723 = vadd.f32 %v714, %v721
          %v724 = vadd.f32 %v715, %v721
          %v725 = vld [vmem:[%s336] sm:$0xff]
          %v726 = vld [vmem:[%s336 + $0x8] sm:$0xff]
          %v727 = vadd.f32 %v723, %v725
          %v728 = vadd.f32 %v724, %v726
          %729 = vst [vmem:[%s345] sm:$0xff] %v727
          %730 = vst [vmem:[%s345 + $0x8] sm:$0xff] %v728
        $region67: #{transformer_decoder_layer.17} parent=54 // pred_fallthru
          _
        %s731 = smul.u32 2, %s20
        %p732 = scmp.lt.s32.totalorder %s731, 1
        %s733 = scalar_select %p732, %s731, 1
        %p734 = scmp.lt.s32.totalorder %s21, 0
        %s735 = scalar_select %p734, %s21, 0
        %s736 = sadd.s32 %s735, %s733
        %s737 = smul.addr %s736, 8
        %s738 = scalar_lea.vmem %s4, %s737
        // Predicated region
        $region68: #{transformer_decoder_layer.17} parent=54 // pred_check
          %p739 = pneg %p164
        $region69: #{transformer_decoder_layer.17} parent=54 // pred_check_branch
          %741 = sbr.rel (%p739) target = $region71
        $region70: #{transformer_decoder_layer.17} parent=54 // pred_region
          %s742 = smul.u32 2, %s20
        $region71: #{transformer_decoder_layer.17} parent=54 // pred_fallthru
          _
        // Predicated region
        $region72: #{transformer_decoder_layer.17} parent=54 // pred_check
          %p743 = pneg %p164
        $region73: #{transformer_decoder_layer.17} parent=54 // pred_check_branch
          %745 = sbr.rel (%p743) target = $region75
        $region74: #{transformer_decoder_layer.17} parent=54 // pred_region
          %s746 = smul.u32 2, %s20
          %p747 = scmp.lt.s32.totalorder %s746, 1
          %s748 = scalar_select %p747, %s746, 1
          %p749 = scmp.lt.s32.totalorder %s21, 0
          %s750 = scalar_select %p749, %s21, 0
          %s751 = sadd.s32 %s750, %s748
          %s752 = smul.addr %s751, 8
          %s753 = scalar_lea.vmem %s4, %s752
        $region75: #{transformer_decoder_layer.17} parent=54 // pred_fallthru
          _
      $region55: #{transformer_decoder_layer.17} parent=5 // pred_fallthru
        _
      %p754 = scmp.le.s32.totalorder 2, %s10
      // Predicated region
      $region76: #{transformer_decoder_layer.17} parent=5 // pred_check
        %p755 = pneg %p754
      $region77: #{transformer_decoder_layer.17} parent=5 // pred_check_branch
        %757 = sbr.rel (%p755) target = $region79
      $region78: #{transformer_decoder_layer.17} parent=5 // pred_region
        %s758 = ssub.s32 %s10, 2
      $region79: #{transformer_decoder_layer.17} parent=5 // pred_fallthru
        _
    $region6: #{transformer_decoder_layer.17} parent=1 // loop_footer
      %s14 = sadd.s32 1, %s10
    $region7: #{transformer_decoder_layer.17} parent=1 // loop_footer_branch
      %9 = sbr.rel target = $region3
    $region8: #{transformer_decoder_layer.17} parent=1 // loop_exit
      _

</llo_original>
